<compile_context>
chip_gen: v6e
topology: v6e:2x2x1
jax: 0.10.0
libtpu: 0.0.40
codegen_flags: <defaults>
</compile_context>

<pallas_src>
import functools

import jax
import jax.numpy as jnp
from jax.experimental import pallas as pl
from jax.experimental.pallas import tpu as pltpu


# ------------------------- conv3x3 (+ fused maxpool) -------------------------

def _conv3x3_kernel(x_ref, w_ref, b_ref, o_ref, acc_ref, *, wp, wd, th, pool):
    """3x3 conv (stride 1, pad 1) + bias + ReLU (+ optional fused MaxPool2d(2,2))
    for one row-chunk of one image.

    x_ref:   (1, PPAD, Cin)  zero-padded image, spatial flattened to (H+2)*(W+2)
    w_ref:   (9, Cin, Cout)  the 9 taps
    b_ref:   (1, Cout)
    o_ref:   (1, th, wd, Cout)         when pool=False
             (1, th//2, wd//2, Cout)   when pool=True
    acc_ref: (th*wp, Cout) f32 VMEM scratch accumulator
    """
    pc = th * wp
    base = pl.program_id(1) * pc
    if pc % 8 == 0:
        base = pl.multiple_of(base, 8)

    # 9 accumulating MXU dots; each tap is a sublane-offset slice of the
    # resident padded image, the accumulator lives in VMEM scratch.
    for t in range(9):                                 # static unroll over taps
        kh, kw = divmod(t, 3)
        lhs = x_ref[0, pl.ds(base + kh * wp + kw, pc), :]
        d = jnp.dot(lhs, w_ref[t], preferred_element_type=jnp.float32)
        if t == 0:
            acc_ref[...] = d
        else:
            acc_ref[...] += d

    bias = b_ref[...]                                  # (1, Cout)

    if not pool:
        # bias + ReLU epilogue; the 2 junk flat-columns of every image row are
        # dropped here in VMEM instead of by a wrapper slice through HBM.
        for r in range(th):                            # static unroll
            o_ref[0, r] = jnp.maximum(acc_ref[pl.ds(r * wp, wd), :] + bias, 0.0)
    else:
        # fused MaxPool2d(2,2): wp is even, so flat-index parity == column
        # parity; even/odd columns come straight out of the accumulator as
        # stride-2 sublane loads; junk columns are never read.
        wdh = wd // 2
        for r in range(th // 2):                       # static unroll, pooled rows
            r0 = (2 * r) * wp
            r1 = (2 * r + 1) * wp
            te = acc_ref[pl.ds(r0, wdh, stride=2), :]       # even cols, even row
            to = acc_ref[pl.ds(r0 + 1, wdh, stride=2), :]   # odd  cols, even row
            be = acc_ref[pl.ds(r1, wdh, stride=2), :]       # even cols, odd  row
            bo = acc_ref[pl.ds(r1 + 1, wdh, stride=2), :]   # odd  cols, odd  row
            m = jnp.maximum(jnp.maximum(te, to), jnp.maximum(be, bo))
            # bias is constant per channel and ReLU is monotone, so pooling the
            # raw accumulator first == conv -> bias -> ReLU -> maxpool.
            o_ref[0, r] = jnp.maximum(m + bias, 0.0)


def conv3x3_relu(x_nhwc, w, b, *, pool=False):
    """Conv2d(k=3, s=1, p=1) + bias + ReLU, optionally fused with MaxPool2d(2,2).

    x: (N, H, W, Cin), w: (3, 3, Cin, Cout), b: (Cout,).
    """
    n, h, wd, cin = x_nhwc.shape
    cout = w.shape[-1]
    wp = wd + 2                            # padded width
    pp = (h + 2) * wp                      # padded, flattened spatial extent
    ppad = ((pp + 2 + 7) // 8) * 8         # slack so the last tap slice stays in bounds
    th = h // 2 if h >= 16 else h          # output rows per grid step
    pc = th * wp
    nchunks = h // th
    assert nchunks * th == h
    assert nchunks == 1 or pc % 8 == 0     # keeps the multiple_of hint honest
    if pool:
        assert h % 2 == 0 and wd % 2 == 0 and th % 2 == 0
        # TODO(synk): odd H/W (PyTorch floor mode) would need masking of the last row/col.

    xp = jnp.pad(x_nhwc, ((0, 0), (1, 1), (1, 1), (0, 0))).reshape(n, pp, cin)
    xp = jnp.pad(xp, ((0, 0), (0, ppad - pp), (0, 0)))
    wmat = w.reshape(9, cin, cout)
    bmat = b.reshape(1, cout)

    tho = th // 2 if pool else th
    ho = h // 2 if pool else h
    wo = wd // 2 if pool else wd

    # TODO(synk): at 224x224-scale inputs the whole-image-resident in_spec should
    # become row-windowed blocks with a 2-row halo (v7x only has 64 MiB VMEM).
    return pl.pallas_call(
        functools.partial(_conv3x3_kernel, wp=wp, wd=wd, th=th, pool=pool),
        out_shape=jax.ShapeDtypeStruct((n, ho, wo, cout), jnp.float32),
        grid=(n, nchunks),
        in_specs=[
            # whole padded image: block index constant over the chunk axis, so it
            # is DMA'd once per image and stays resident in VMEM.
            pl.BlockSpec((1, ppad, cin), lambda i, c: (i, 0, 0)),
            pl.BlockSpec((9, cin, cout), lambda i, c: (0, 0, 0)),
            pl.BlockSpec((1, cout), lambda i, c: (0, 0)),
        ],
        out_specs=pl.BlockSpec((1, tho, wo, cout), lambda i, c: (i, c, 0, 0)),
        scratch_shapes=[pltpu.VMEM((pc, cout), jnp.float32)],
        compiler_params=pltpu.CompilerParams(
            dimension_semantics=("parallel", "parallel"),
            vmem_limit_bytes=32 * 1024 * 1024),
    )(xp, wmat, bmat)


# ------------------------------- fused MLP head -------------------------------

def _head_kernel(f_ref, w1_ref, b1_ref, w2_ref, b2_ref,
                 we_ref, be_ref, wc_ref, bc_ref, p_ref, y_ref):
    """Fused head: fc1+ReLU -> fc2+ReLU -> encoder Linear -> Softmax over the 4
    bases -> classifier Linear, one launch (Dropouts are identity / eval mode).

    The encoder / classifier weights arrive pre-split per base j (the minor axis
    of the (dna_len, 4) view), so the grouped softmax is plain elementwise math
    over four (N, dna_len) tiles -- exact f32, no in-kernel reshape / shuffles.
    """
    h1 = jnp.maximum(jnp.dot(f_ref[...], w1_ref[...],
                             preferred_element_type=jnp.float32) + b1_ref[...], 0.0)
    h2 = jnp.maximum(jnp.dot(h1, w2_ref[...],
                             preferred_element_type=jnp.float32) + b2_ref[...], 0.0)
    z = [jnp.dot(h2, we_ref[j], preferred_element_type=jnp.float32) + be_ref[j]
         for j in range(4)]                            # per-base logits, (N, L)
    m = jnp.maximum(jnp.maximum(z[0], z[1]), jnp.maximum(z[2], z[3]))
    e = [jnp.exp(zj - m) for zj in z]
    denom = (e[0] + e[1]) + (e[2] + e[3])
    y = bc_ref[...]
    for j in range(4):
        pj = e[j] / denom                              # exact f32 softmax
        p_ref[j] = pj
        y = y + jnp.dot(pj, wc_ref[j], preferred_element_type=jnp.float32)
    y_ref[...] = y


def head_forward(feat, fc1, fc2, enc, cls, dna_len):
    """vgg16.classifier[:-1] + encoder (Linear+Softmax) + classifier Linear."""
    n, _ = feat.shape
    w1, b1 = fc1
    w2, b2 = fc2
    we, be = enc
    wc, bc = cls
    L = dna_len
    cls_num = wc.shape[1]
    # split encoder / classifier params per base (column j of the (L,4) view);
    # free wrapper-side weight slices, done once per trace.
    we4 = jnp.stack([we[:, j::4] for j in range(4)])             # (4, D, L)
    be4 = jnp.stack([be[j::4].reshape(1, L) for j in range(4)])  # (4, 1, L)
    wc4 = jnp.stack([wc[j::4, :] for j in range(4)])             # (4, L, cls)
    p4, y = pl.pallas_call(
        _head_kernel,
        out_shape=(jax.ShapeDtypeStruct((4, n, L), jnp.float32),
                   jax.ShapeDtypeStruct((n, cls_num), jnp.float32)),
    )(feat, w1, b1.reshape(1, -1), w2, b2.reshape(1, -1), we4, be4, wc4,
      bc.reshape(1, -1))
    probs = jnp.transpose(p4, (1, 2, 0))               # (N, dna_len, 4)
    return probs, y


# ----------------------------- Model definition ------------------------------

# VGG16 feature config, channel widths scaled down 8x for a small test
# (full VGG16: [64,64,'M',128,128,'M',256,256,256,'M',512,512,512,'M',512,512,512,'M'])
VGG16_CFG = [8, 8, 'M', 16, 16, 'M', 32, 32, 32, 'M', 64, 64, 64, 'M', 64, 64, 64, 'M']
FC_DIM = 128   # stands in for the 4096-wide VGG classifier layers


def init_params(key, in_ch, cfg, fc_dim, dna_len, cls_num):
    """Deterministic synthetic parameter init (no checkpoint loading)."""
    params = {}
    convs = []
    c = in_ch
    for v in cfg:
        if v == 'M':
            continue
        key, k1, k2 = jax.random.split(key, 3)
        w = jax.random.normal(k1, (3, 3, c, v), jnp.float32) * jnp.sqrt(2.0 / (9.0 * c))
        b = jax.random.normal(k2, (v,), jnp.float32) * 0.01
        convs.append((w, b))
        c = v
    params['convs'] = convs
    feat_dim = c * 7 * 7   # after AdaptiveAvgPool2d((7,7)) + Flatten

    def lin(k, din, dout, scale):
        k1, k2 = jax.random.split(k)
        w = jax.random.normal(k1, (din, dout), jnp.float32) * (scale / jnp.sqrt(float(din)))
        b = jax.random.normal(k2, (dout,), jnp.float32) * 0.01
        return (w, b)

    key, ka, kb, kc, kd = jax.random.split(key, 5)
    params['fc1'] = lin(ka, feat_dim, fc_dim, jnp.sqrt(2.0))   # vgg16.classifier[0]
    params['fc2'] = lin(kb, fc_dim, fc_dim, jnp.sqrt(2.0))     # vgg16.classifier[3]
    params['enc'] = lin(kc, fc_dim, 4 * dna_len, 0.1)          # encoder Linear
    params['cls'] = lin(kd, 4 * dna_len, cls_num, 1.0)         # classifier Linear
    return params


def vgg16_encoder_forward(params, x_nchw, dna_len):
    # x_nchw: (N, 3, H, W) float32, PyTorch layout -> NHWC for the kernels
    x = jnp.transpose(x_nchw, (0, 2, 3, 1)).astype(jnp.float32)

    # --- feature_ex: vgg16.features; every conv that precedes an 'M' entry gets
    # the 2x2 maxpool fused into its epilogue (no standalone pool launches).
    cfg = VGG16_CFG
    ci = 0
    i = 0
    while i < len(cfg):
        v = cfg[i]
        assert v != 'M'
        w, b = params['convs'][ci]
        ci += 1
        pool = (i + 1 < len(cfg)) and (cfg[i + 1] == 'M')
        x = conv3x3_relu(x, w, b, pool=pool)
        i += 2 if pool else 1

    # --- vgg16.avgpool = AdaptiveAvgPool2d((7,7)) + Flatten: with a 1x1 final
    # map every 7x7 bin replicates the single pixel, so fold the 49x replication
    # into the fc1 weight (bit-equivalent math for a 1x1 map).
    # TODO(synk): general AdaptiveAvgPool2d path for final maps larger than 1x1.
    n, h, wd, c = x.shape
    assert h == 1 and wd == 1
    feat = x.reshape(n, c)                                   # == NCHW flatten at 1x1
    w1, b1 = params['fc1']
    w1_eff = w1.reshape(c, 49, -1).sum(axis=1)               # fold 49x replication

    # --- classifier[:-1] + encoder Linear + Softmax + classifier, one kernel ---
    # TODO(synk): Dropout layers treated as identity (eval-mode semantics).
    probs, y = head_forward(feat, (w1_eff, b1), params['fc2'],
                            params['enc'], params['cls'], dna_len)
    return probs, y


# ------------------------------- XLA reference --------------------------------

def _reference_forward(params, x_nchw, dna_len):
    """Pure-JAX/XLA reference of the same module (for correctness checking)."""
    hp = jax.lax.Precision.HIGHEST
    x = jnp.transpose(x_nchw, (0, 2, 3, 1)).astype(jnp.float32)
    ci = 0
    for v in VGG16_CFG:
        if v == 'M':
            x = jax.lax.reduce_window(x, -jnp.inf, jax.lax.max,
                                      (1, 2, 2, 1), (1, 2, 2, 1), 'VALID')
        else:
            w, b = params['convs'][ci]
            ci += 1
            x = jax.lax.conv_general_dilated(
                x, w, (1, 1), 'SAME',
                dimension_numbers=('NHWC', 'HWIO', 'NHWC'), precision=hp)
            x = jnp.maximum(x + b, 0.0)
    n, h, wd, c = x.shape
    feat = jnp.transpose(x, (0, 3, 1, 2)).reshape(n, c * h * wd)
    feat = jnp.broadcast_to(feat[:, :, None], (n, c, 49)).reshape(n, c * 49)

    def lin(z, wb):
        return jnp.dot(z, wb[0], precision=hp) + wb[1]

    f = jnp.maximum(lin(feat, params['fc1']), 0.0)
    f = jnp.maximum(lin(f, params['fc2']), 0.0)
    enc = lin(f, params['enc']).reshape(n, dna_len, 4)
    p = jax.nn.softmax(enc, axis=-1)
    y = lin(p.reshape(n, 4 * dna_len), params['cls'])
    return p, y


# ----------------------------------- main --------------------------------------

if __name__ == "__main__":
    key = jax.random.PRNGKey(0)
    dna_len, cls_num = 16, 5
    kp, kx, k1, k2, k3, k4, k5, k6 = jax.random.split(key, 8)

    params = init_params(kp, 3, VGG16_CFG, FC_DIM, dna_len, cls_num)
    x = jax.random.normal(kx, (2, 3, 32, 32), jnp.float32)   # NCHW, like PyTorch

    # --- unit checks of conv / fused conv+pool against XLA references ---
    hp = jax.lax.Precision.HIGHEST
    xt = jax.random.normal(k1, (2, 16, 16, 8), jnp.float32)
    wt = jax.random.normal(k2, (3, 3, 8, 16), jnp.float32) * 0.2
    bt = jax.random.normal(k3, (16,), jnp.float32) * 0.1
    conv_ref = jnp.maximum(jax.lax.conv_general_dilated(
        xt, wt, (1, 1), 'SAME',
        dimension_numbers=('NHWC', 'HWIO', 'NHWC'), precision=hp) + bt, 0.0)
    assert jnp.allclose(conv3x3_relu(xt, wt, bt), conv_ref, atol=2e-2, rtol=2e-2)
    pool_ref = jax.lax.reduce_window(conv_ref, -jnp.inf, jax.lax.max,
                                     (1, 2, 2, 1), (1, 2, 2, 1), 'VALID')
    assert jnp.allclose(conv3x3_relu(xt, wt, bt, pool=True), pool_ref,
                        atol=2e-2, rtol=2e-2)

    xs = jax.random.normal(k4, (2, 4, 4, 32), jnp.float32)
    ws = jax.random.normal(k5, (3, 3, 32, 64), jnp.float32) * 0.1
    bs = jax.random.normal(k6, (64,), jnp.float32) * 0.1
    conv_ref2 = jnp.maximum(jax.lax.conv_general_dilated(
        xs, ws, (1, 1), 'SAME',
        dimension_numbers=('NHWC', 'HWIO', 'NHWC'), precision=hp) + bs, 0.0)
    assert jnp.allclose(conv3x3_relu(xs, ws, bs), conv_ref2, atol=2e-2, rtol=2e-2)
    pool_ref2 = jax.lax.reduce_window(conv_ref2, -jnp.inf, jax.lax.max,
                                      (1, 2, 2, 1), (1, 2, 2, 1), 'VALID')
    assert jnp.allclose(conv3x3_relu(xs, ws, bs, pool=True), pool_ref2,
                        atol=2e-2, rtol=2e-2)

    # --- full forward pass ---
    fwd = jax.jit(functools.partial(vgg16_encoder_forward, dna_len=dna_len))
    probs, logits = fwd(params, x)
    jax.block_until_ready((probs, logits))

    assert probs.shape == (2, dna_len, 4)
    assert logits.shape == (2, cls_num)
    assert jnp.allclose(jnp.sum(probs, axis=-1), 1.0, atol=1e-5)

    # end-to-end cross-check (also validates the avgpool->fc1 fold, the fused
    # conv+pool epilogue and the per-base split head)
    probs_ref, logits_ref = _reference_forward(params, x, dna_len)
    assert jnp.allclose(probs, probs_ref, atol=2e-2, rtol=2e-2)
    assert jnp.allclose(logits, logits_ref, atol=2e-2, rtol=2e-2)

    print("KERNEL_OK")
</pallas_src>

<mosaic_0001>
module attributes {stable_mosaic.version = 11 : i64} {
  func.func @_conv3x3_kernel(%arg0: i32, %arg1: i32, %arg2: memref<1x328x8xf32, #tpu.memory_space<vmem>>, %arg3: memref<9x8x16xf32, #tpu.memory_space<vmem>>, %arg4: memref<1x16xf32, #tpu.memory_space<vmem>>, %arg5: memref<1x8x16x16xf32, #tpu.memory_space<vmem>>, %arg6: memref<144x16xf32, #tpu.memory_space<vmem>>) attributes {dimension_semantics = [#tpu.dimension_semantics<parallel>, #tpu.dimension_semantics<parallel>], iteration_bounds = array<i64: 2, 2>, scalar_prefetch = 0 : i64, scratch_operands = 1 : i64, tpu.core_type = #tpu.core_type<tc>, window_params = [{transform_indices = @transform_0, window_bounds = array<i64: 1, 328, 8>}, {pipeline_mode = #tpu.pipeline_mode<synchronous>, transform_indices = @transform_1, window_bounds = array<i64: 9, 8, 16>}, {pipeline_mode = #tpu.pipeline_mode<synchronous>, transform_indices = @transform_2, window_bounds = array<i64: 1, 16>}, {transform_indices = @transform_3, window_bounds = array<i64: 1, 8, 16, 16>}]} {
    %c144_i32 = arith.constant 144 : i32
    %0 = arith.muli %arg1, %c144_i32 : i32
    %1 = tpu.assume_multiple %0, 8 : i32
    %c0_i32 = arith.constant 0 : i32
    %2 = arith.addi %1, %c0_i32 : i32
    %c0_i32_0 = arith.constant 0 : i32
    %3 = arith.addi %2, %c0_i32_0 : i32
    %c0 = arith.constant 0 : index
    %4 = arith.index_cast %3 : i32 to index
    %c0_1 = arith.constant 0 : index
    %5 = vector.load %arg2[%c0, %4, %c0_1] : memref<1x328x8xf32, #tpu.memory_space<vmem>>, vector<1x144x8xf32>
    %6 = vector.shape_cast %5 : vector<1x144x8xf32> to vector<144x8xf32>
    %c0_2 = arith.constant 0 : index
    %c0_3 = arith.constant 0 : index
    %c0_4 = arith.constant 0 : index
    %7 = vector.load %arg3[%c0_2, %c0_3, %c0_4] : memref<9x8x16xf32, #tpu.memory_space<vmem>>, vector<1x8x16xf32>
    %8 = vector.shape_cast %7 : vector<1x8x16xf32> to vector<8x16xf32>
    %cst = arith.constant dense<0.000000e+00> : vector<144x16xf32>
    %9 = tpu.matmul %6, %8, %cst {dimension_numbers = #tpu.dot_dimension_numbers<[1], [0], [0], [1], [0, 0, 1, 1], [], []>} : vector<144x8xf32>, vector<8x16xf32>, vector<144x16xf32> -> vector<144x16xf32>
    %c0_5 = arith.constant 0 : index
    %c0_6 = arith.constant 0 : index
    %10 = vector.load %arg6[%c0_5, %c0_6] : memref<144x16xf32, #tpu.memory_space<vmem>>, vector<144x16xf32>
    tpu.vector_store %arg6[%c0_5, %c0_6], %9 {strides = array<i32>} : memref<144x16xf32, #tpu.memory_space<vmem>>, vector<144x16xf32>,
    %c0_i32_7 = arith.constant 0 : i32
    %11 = arith.addi %1, %c0_i32_7 : i32
    %c1_i32 = arith.constant 1 : i32
    %12 = arith.addi %11, %c1_i32 : i32
    %c0_8 = arith.constant 0 : index
    %13 = arith.index_cast %12 : i32 to index
    %c0_9 = arith.constant 0 : index
    %14 = vector.load %arg2[%c0_8, %13, %c0_9] : memref<1x328x8xf32, #tpu.memory_space<vmem>>, vector<1x144x8xf32>
    %15 = vector.shape_cast %14 : vector<1x144x8xf32> to vector<144x8xf32>
    %c1 = arith.constant 1 : index
    %c0_10 = arith.constant 0 : index
    %c0_11 = arith.constant 0 : index
    %16 = vector.load %arg3[%c1, %c0_10, %c0_11] : memref<9x8x16xf32, #tpu.memory_space<vmem>>, vector<1x8x16xf32>
    %17 = vector.shape_cast %16 : vector<1x8x16xf32> to vector<8x16xf32>
    %cst_12 = arith.constant dense<0.000000e+00> : vector<144x16xf32>
    %18 = tpu.matmul %15, %17, %cst_12 {dimension_numbers = #tpu.dot_dimension_numbers<[1], [0], [0], [1], [0, 0, 1, 1], [], []>} : vector<144x8xf32>, vector<8x16xf32>, vector<144x16xf32> -> vector<144x16xf32>
    %c0_13 = arith.constant 0 : index
    %c0_14 = arith.constant 0 : index
    %19 = vector.load %arg6[%c0_13, %c0_14] : memref<144x16xf32, #tpu.memory_space<vmem>>, vector<144x16xf32>
    %20 = arith.addf %19, %18 : vector<144x16xf32>
    %c0_15 = arith.constant 0 : index
    %c0_16 = arith.constant 0 : index
    %21 = vector.load %arg6[%c0_15, %c0_16] : memref<144x16xf32, #tpu.memory_space<vmem>>, vector<144x16xf32>
    tpu.vector_store %arg6[%c0_15, %c0_16], %20 {strides = array<i32>} : memref<144x16xf32, #tpu.memory_space<vmem>>, vector<144x16xf32>,
    %c0_i32_17 = arith.constant 0 : i32
    %22 = arith.addi %1, %c0_i32_17 : i32
    %c2_i32 = arith.constant 2 : i32
    %23 = arith.addi %22, %c2_i32 : i32
    %c0_18 = arith.constant 0 : index
    %24 = arith.index_cast %23 : i32 to index
    %c0_19 = arith.constant 0 : index
    %25 = vector.load %arg2[%c0_18, %24, %c0_19] : memref<1x328x8xf32, #tpu.memory_space<vmem>>, vector<1x144x8xf32>
    %26 = vector.shape_cast %25 : vector<1x144x8xf32> to vector<144x8xf32>
    %c2 = arith.constant 2 : index
    %c0_20 = arith.constant 0 : index
    %c0_21 = arith.constant 0 : index
    %27 = vector.load %arg3[%c2, %c0_20, %c0_21] : memref<9x8x16xf32, #tpu.memory_space<vmem>>, vector<1x8x16xf32>
    %28 = vector.shape_cast %27 : vector<1x8x16xf32> to vector<8x16xf32>
    %cst_22 = arith.constant dense<0.000000e+00> : vector<144x16xf32>
    %29 = tpu.matmul %26, %28, %cst_22 {dimension_numbers = #tpu.dot_dimension_numbers<[1], [0], [0], [1], [0, 0, 1, 1], [], []>} : vector<144x8xf32>, vector<8x16xf32>, vector<144x16xf32> -> vector<144x16xf32>
    %c0_23 = arith.constant 0 : index
    %c0_24 = arith.constant 0 : index
    %30 = vector.load %arg6[%c0_23, %c0_24] : memref<144x16xf32, #tpu.memory_space<vmem>>, vector<144x16xf32>
    %31 = arith.addf %30, %29 : vector<144x16xf32>
    %c0_25 = arith.constant 0 : index
    %c0_26 = arith.constant 0 : index
    %32 = vector.load %arg6[%c0_25, %c0_26] : memref<144x16xf32, #tpu.memory_space<vmem>>, vector<144x16xf32>
    tpu.vector_store %arg6[%c0_25, %c0_26], %31 {strides = array<i32>} : memref<144x16xf32, #tpu.memory_space<vmem>>, vector<144x16xf32>,
    %c18_i32 = arith.constant 18 : i32
    %33 = arith.addi %1, %c18_i32 : i32
    %c0_i32_27 = arith.constant 0 : i32
    %34 = arith.addi %33, %c0_i32_27 : i32
    %c0_28 = arith.constant 0 : index
    %35 = arith.index_cast %34 : i32 to index
    %c0_29 = arith.constant 0 : index
    %36 = vector.load %arg2[%c0_28, %35, %c0_29] : memref<1x328x8xf32, #tpu.memory_space<vmem>>, vector<1x144x8xf32>
    %37 = vector.shape_cast %36 : vector<1x144x8xf32> to vector<144x8xf32>
    %c3 = arith.constant 3 : index
    %c0_30 = arith.constant 0 : index
    %c0_31 = arith.constant 0 : index
    %38 = vector.load %arg3[%c3, %c0_30, %c0_31] : memref<9x8x16xf32, #tpu.memory_space<vmem>>, vector<1x8x16xf32>
    %39 = vector.shape_cast %38 : vector<1x8x16xf32> to vector<8x16xf32>
    %cst_32 = arith.constant dense<0.000000e+00> : vector<144x16xf32>
    %40 = tpu.matmul %37, %39, %cst_32 {dimension_numbers = #tpu.dot_dimension_numbers<[1], [0], [0], [1], [0, 0, 1, 1], [], []>} : vector<144x8xf32>, vector<8x16xf32>, vector<144x16xf32> -> vector<144x16xf32>
    %c0_33 = arith.constant 0 : index
    %c0_34 = arith.constant 0 : index
    %41 = vector.load %arg6[%c0_33, %c0_34] : memref<144x16xf32, #tpu.memory_space<vmem>>, vector<144x16xf32>
    %42 = arith.addf %41, %40 : vector<144x16xf32>
    %c0_35 = arith.constant 0 : index
    %c0_36 = arith.constant 0 : index
    %43 = vector.load %arg6[%c0_35, %c0_36] : memref<144x16xf32, #tpu.memory_space<vmem>>, vector<144x16xf32>
    tpu.vector_store %arg6[%c0_35, %c0_36], %42 {strides = array<i32>} : memref<144x16xf32, #tpu.memory_space<vmem>>, vector<144x16xf32>,
    %c18_i32_37 = arith.constant 18 : i32
    %44 = arith.addi %1, %c18_i32_37 : i32
    %c1_i32_38 = arith.constant 1 : i32
    %45 = arith.addi %44, %c1_i32_38 : i32
    %c0_39 = arith.constant 0 : index
    %46 = arith.index_cast %45 : i32 to index
    %c0_40 = arith.constant 0 : index
    %47 = vector.load %arg2[%c0_39, %46, %c0_40] : memref<1x328x8xf32, #tpu.memory_space<vmem>>, vector<1x144x8xf32>
    %48 = vector.shape_cast %47 : vector<1x144x8xf32> to vector<144x8xf32>
    %c4 = arith.constant 4 : index
    %c0_41 = arith.constant 0 : index
    %c0_42 = arith.constant 0 : index
    %49 = vector.load %arg3[%c4, %c0_41, %c0_42] : memref<9x8x16xf32, #tpu.memory_space<vmem>>, vector<1x8x16xf32>
    %50 = vector.shape_cast %49 : vector<1x8x16xf32> to vector<8x16xf32>
    %cst_43 = arith.constant dense<0.000000e+00> : vector<144x16xf32>
    %51 = tpu.matmul %48, %50, %cst_43 {dimension_numbers = #tpu.dot_dimension_numbers<[1], [0], [0], [1], [0, 0, 1, 1], [], []>} : vector<144x8xf32>, vector<8x16xf32>, vector<144x16xf32> -> vector<144x16xf32>
    %c0_44 = arith.constant 0 : index
    %c0_45 = arith.constant 0 : index
    %52 = vector.load %arg6[%c0_44, %c0_45] : memref<144x16xf32, #tpu.memory_space<vmem>>, vector<144x16xf32>
    %53 = arith.addf %52, %51 : vector<144x16xf32>
    %c0_46 = arith.constant 0 : index
    %c0_47 = arith.constant 0 : index
    %54 = vector.load %arg6[%c0_46, %c0_47] : memref<144x16xf32, #tpu.memory_space<vmem>>, vector<144x16xf32>
    tpu.vector_store %arg6[%c0_46, %c0_47], %53 {strides = array<i32>} : memref<144x16xf32, #tpu.memory_space<vmem>>, vector<144x16xf32>,
    %c18_i32_48 = arith.constant 18 : i32
    %55 = arith.addi %1, %c18_i32_48 : i32
    %c2_i32_49 = arith.constant 2 : i32
    %56 = arith.addi %55, %c2_i32_49 : i32
    %c0_50 = arith.constant 0 : index
    %57 = arith.index_cast %56 : i32 to index
    %c0_51 = arith.constant 0 : index
    %58 = vector.load %arg2[%c0_50, %57, %c0_51] : memref<1x328x8xf32, #tpu.memory_space<vmem>>, vector<1x144x8xf32>
    %59 = vector.shape_cast %58 : vector<1x144x8xf32> to vector<144x8xf32>
    %c5 = arith.constant 5 : index
    %c0_52 = arith.constant 0 : index
    %c0_53 = arith.constant 0 : index
    %60 = vector.load %arg3[%c5, %c0_52, %c0_53] : memref<9x8x16xf32, #tpu.memory_space<vmem>>, vector<1x8x16xf32>
    %61 = vector.shape_cast %60 : vector<1x8x16xf32> to vector<8x16xf32>
    %cst_54 = arith.constant dense<0.000000e+00> : vector<144x16xf32>
    %62 = tpu.matmul %59, %61, %cst_54 {dimension_numbers = #tpu.dot_dimension_numbers<[1], [0], [0], [1], [0, 0, 1, 1], [], []>} : vector<144x8xf32>, vector<8x16xf32>, vector<144x16xf32> -> vector<144x16xf32>
    %c0_55 = arith.constant 0 : index
    %c0_56 = arith.constant 0 : index
    %63 = vector.load %arg6[%c0_55, %c0_56] : memref<144x16xf32, #tpu.memory_space<vmem>>, vector<144x16xf32>
    %64 = arith.addf %63, %62 : vector<144x16xf32>
    %c0_57 = arith.constant 0 : index
    %c0_58 = arith.constant 0 : index
    %65 = vector.load %arg6[%c0_57, %c0_58] : memref<144x16xf32, #tpu.memory_space<vmem>>, vector<144x16xf32>
    tpu.vector_store %arg6[%c0_57, %c0_58], %64 {strides = array<i32>} : memref<144x16xf32, #tpu.memory_space<vmem>>, vector<144x16xf32>,
    %c36_i32 = arith.constant 36 : i32
    %66 = arith.addi %1, %c36_i32 : i32
    %c0_i32_59 = arith.constant 0 : i32
    %67 = arith.addi %66, %c0_i32_59 : i32
    %c0_60 = arith.constant 0 : index
    %68 = arith.index_cast %67 : i32 to index
    %c0_61 = arith.constant 0 : index
    %69 = vector.load %arg2[%c0_60, %68, %c0_61] : memref<1x328x8xf32, #tpu.memory_space<vmem>>, vector<1x144x8xf32>
    %70 = vector.shape_cast %69 : vector<1x144x8xf32> to vector<144x8xf32>
    %c6 = arith.constant 6 : index
    %c0_62 = arith.constant 0 : index
    %c0_63 = arith.constant 0 : index
    %71 = vector.load %arg3[%c6, %c0_62, %c0_63] : memref<9x8x16xf32, #tpu.memory_space<vmem>>, vector<1x8x16xf32>
    %72 = vector.shape_cast %71 : vector<1x8x16xf32> to vector<8x16xf32>
    %cst_64 = arith.constant dense<0.000000e+00> : vector<144x16xf32>
    %73 = tpu.matmul %70, %72, %cst_64 {dimension_numbers = #tpu.dot_dimension_numbers<[1], [0], [0], [1], [0, 0, 1, 1], [], []>} : vector<144x8xf32>, vector<8x16xf32>, vector<144x16xf32> -> vector<144x16xf32>
    %c0_65 = arith.constant 0 : index
    %c0_66 = arith.constant 0 : index
    %74 = vector.load %arg6[%c0_65, %c0_66] : memref<144x16xf32, #tpu.memory_space<vmem>>, vector<144x16xf32>
    %75 = arith.addf %74, %73 : vector<144x16xf32>
    %c0_67 = arith.constant 0 : index
    %c0_68 = arith.constant 0 : index
    %76 = vector.load %arg6[%c0_67, %c0_68] : memref<144x16xf32, #tpu.memory_space<vmem>>, vector<144x16xf32>
    tpu.vector_store %arg6[%c0_67, %c0_68], %75 {strides = array<i32>} : memref<144x16xf32, #tpu.memory_space<vmem>>, vector<144x16xf32>,
    %c36_i32_69 = arith.constant 36 : i32
    %77 = arith.addi %1, %c36_i32_69 : i32
    %c1_i32_70 = arith.constant 1 : i32
    %78 = arith.addi %77, %c1_i32_70 : i32
    %c0_71 = arith.constant 0 : index
    %79 = arith.index_cast %78 : i32 to index
    %c0_72 = arith.constant 0 : index
    %80 = vector.load %arg2[%c0_71, %79, %c0_72] : memref<1x328x8xf32, #tpu.memory_space<vmem>>, vector<1x144x8xf32>
    %81 = vector.shape_cast %80 : vector<1x144x8xf32> to vector<144x8xf32>
    %c7 = arith.constant 7 : index
    %c0_73 = arith.constant 0 : index
    %c0_74 = arith.constant 0 : index
    %82 = vector.load %arg3[%c7, %c0_73, %c0_74] : memref<9x8x16xf32, #tpu.memory_space<vmem>>, vector<1x8x16xf32>
    %83 = vector.shape_cast %82 : vector<1x8x16xf32> to vector<8x16xf32>
    %cst_75 = arith.constant dense<0.000000e+00> : vector<144x16xf32>
    %84 = tpu.matmul %81, %83, %cst_75 {dimension_numbers = #tpu.dot_dimension_numbers<[1], [0], [0], [1], [0, 0, 1, 1], [], []>} : vector<144x8xf32>, vector<8x16xf32>, vector<144x16xf32> -> vector<144x16xf32>
    %c0_76 = arith.constant 0 : index
    %c0_77 = arith.constant 0 : index
    %85 = vector.load %arg6[%c0_76, %c0_77] : memref<144x16xf32, #tpu.memory_space<vmem>>, vector<144x16xf32>
    %86 = arith.addf %85, %84 : vector<144x16xf32>
    %c0_78 = arith.constant 0 : index
    %c0_79 = arith.constant 0 : index
    %87 = vector.load %arg6[%c0_78, %c0_79] : memref<144x16xf32, #tpu.memory_space<vmem>>, vector<144x16xf32>
    tpu.vector_store %arg6[%c0_78, %c0_79], %86 {strides = array<i32>} : memref<144x16xf32, #tpu.memory_space<vmem>>, vector<144x16xf32>,
    %c36_i32_80 = arith.constant 36 : i32
    %88 = arith.addi %1, %c36_i32_80 : i32
    %c2_i32_81 = arith.constant 2 : i32
    %89 = arith.addi %88, %c2_i32_81 : i32
    %c0_82 = arith.constant 0 : index
    %90 = arith.index_cast %89 : i32 to index
    %c0_83 = arith.constant 0 : index
    %91 = vector.load %arg2[%c0_82, %90, %c0_83] : memref<1x328x8xf32, #tpu.memory_space<vmem>>, vector<1x144x8xf32>
    %92 = vector.shape_cast %91 : vector<1x144x8xf32> to vector<144x8xf32>
    %c8 = arith.constant 8 : index
    %c0_84 = arith.constant 0 : index
    %c0_85 = arith.constant 0 : index
    %93 = vector.load %arg3[%c8, %c0_84, %c0_85] : memref<9x8x16xf32, #tpu.memory_space<vmem>>, vector<1x8x16xf32>
    %94 = vector.shape_cast %93 : vector<1x8x16xf32> to vector<8x16xf32>
    %cst_86 = arith.constant dense<0.000000e+00> : vector<144x16xf32>
    %95 = tpu.matmul %92, %94, %cst_86 {dimension_numbers = #tpu.dot_dimension_numbers<[1], [0], [0], [1], [0, 0, 1, 1], [], []>} : vector<144x8xf32>, vector<8x16xf32>, vector<144x16xf32> -> vector<144x16xf32>
    %c0_87 = arith.constant 0 : index
    %c0_88 = arith.constant 0 : index
    %96 = vector.load %arg6[%c0_87, %c0_88] : memref<144x16xf32, #tpu.memory_space<vmem>>, vector<144x16xf32>
    %97 = arith.addf %96, %95 : vector<144x16xf32>
    %c0_89 = arith.constant 0 : index
    %c0_90 = arith.constant 0 : index
    %98 = vector.load %arg6[%c0_89, %c0_90] : memref<144x16xf32, #tpu.memory_space<vmem>>, vector<144x16xf32>
    tpu.vector_store %arg6[%c0_89, %c0_90], %97 {strides = array<i32>} : memref<144x16xf32, #tpu.memory_space<vmem>>, vector<144x16xf32>,
    %c0_91 = arith.constant 0 : index
    %c0_92 = arith.constant 0 : index
    %99 = vector.load %arg4[%c0_91, %c0_92] : memref<1x16xf32, #tpu.memory_space<vmem>>, vector<1x16xf32>
    %c0_93 = arith.constant 0 : index
    %c0_94 = arith.constant 0 : index
    %100 = vector.load %arg6[%c0_93, %c0_94] : memref<144x16xf32, #tpu.memory_space<vmem>>, vector<16x16xf32>
    %101 = vector.broadcast %99 : vector<1x16xf32> to vector<16x16xf32>
    %102 = arith.addf %100, %101 : vector<16x16xf32>
    %cst_95 = arith.constant 0.000000e+00 : f32
    %103 = vector.broadcast %cst_95 : f32 to vector<16x16xf32>
    %104 = arith.maximumf %102, %103 : vector<16x16xf32>
    %c0_96 = arith.constant 0 : index
    %c0_97 = arith.constant 0 : index
    %c0_98 = arith.constant 0 : index
    %c0_99 = arith.constant 0 : index
    %105 = vector.load %arg5[%c0_96, %c0_97, %c0_98, %c0_99] : memref<1x8x16x16xf32, #tpu.memory_space<vmem>>, vector<1x1x16x16xf32>
    %106 = vector.shape_cast %105 : vector<1x1x16x16xf32> to vector<16x16xf32>
    %107 = vector.shape_cast %104 : vector<16x16xf32> to vector<1x1x16x16xf32>
    tpu.vector_store %arg5[%c0_96, %c0_97, %c0_98, %c0_99], %107 {strides = array<i32>} : memref<1x8x16x16xf32, #tpu.memory_space<vmem>>, vector<1x1x16x16xf32>,
    %c18 = arith.constant 18 : index
    %c0_100 = arith.constant 0 : index
    %108 = vector.load %arg6[%c18, %c0_100] : memref<144x16xf32, #tpu.memory_space<vmem>>, vector<16x16xf32>
    %109 = vector.broadcast %99 : vector<1x16xf32> to vector<16x16xf32>
    %110 = arith.addf %108, %109 : vector<16x16xf32>
    %cst_101 = arith.constant 0.000000e+00 : f32
    %111 = vector.broadcast %cst_101 : f32 to vector<16x16xf32>
    %112 = arith.maximumf %110, %111 : vector<16x16xf32>
    %c0_102 = arith.constant 0 : index
    %c1_103 = arith.constant 1 : index
    %c0_104 = arith.constant 0 : index
    %c0_105 = arith.constant 0 : index
    %113 = vector.load %arg5[%c0_102, %c1_103, %c0_104, %c0_105] : memref<1x8x16x16xf32, #tpu.memory_space<vmem>>, vector<1x1x16x16xf32>
    %114 = vector.shape_cast %113 : vector<1x1x16x16xf32> to vector<16x16xf32>
    %115 = vector.shape_cast %112 : vector<16x16xf32> to vector<1x1x16x16xf32>
    tpu.vector_store %arg5[%c0_102, %c1_103, %c0_104, %c0_105], %115 {strides = array<i32>} : memref<1x8x16x16xf32, #tpu.memory_space<vmem>>, vector<1x1x16x16xf32>,
    %c36 = arith.constant 36 : index
    %c0_106 = arith.constant 0 : index
    %116 = vector.load %arg6[%c36, %c0_106] : memref<144x16xf32, #tpu.memory_space<vmem>>, vector<16x16xf32>
    %117 = vector.broadcast %99 : vector<1x16xf32> to vector<16x16xf32>
    %118 = arith.addf %116, %117 : vector<16x16xf32>
    %cst_107 = arith.constant 0.000000e+00 : f32
    %119 = vector.broadcast %cst_107 : f32 to vector<16x16xf32>
    %120 = arith.maximumf %118, %119 : vector<16x16xf32>
    %c0_108 = arith.constant 0 : index
    %c2_109 = arith.constant 2 : index
    %c0_110 = arith.constant 0 : index
    %c0_111 = arith.constant 0 : index
    %121 = vector.load %arg5[%c0_108, %c2_109, %c0_110, %c0_111] : memref<1x8x16x16xf32, #tpu.memory_space<vmem>>, vector<1x1x16x16xf32>
    %122 = vector.shape_cast %121 : vector<1x1x16x16xf32> to vector<16x16xf32>
    %123 = vector.shape_cast %120 : vector<16x16xf32> to vector<1x1x16x16xf32>
    tpu.vector_store %arg5[%c0_108, %c2_109, %c0_110, %c0_111], %123 {strides = array<i32>} : memref<1x8x16x16xf32, #tpu.memory_space<vmem>>, vector<1x1x16x16xf32>,
    %c54 = arith.constant 54 : index
    %c0_112 = arith.constant 0 : index
    %124 = vector.load %arg6[%c54, %c0_112] : memref<144x16xf32, #tpu.memory_space<vmem>>, vector<16x16xf32>
    %125 = vector.broadcast %99 : vector<1x16xf32> to vector<16x16xf32>
    %126 = arith.addf %124, %125 : vector<16x16xf32>
    %cst_113 = arith.constant 0.000000e+00 : f32
    %127 = vector.broadcast %cst_113 : f32 to vector<16x16xf32>
    %128 = arith.maximumf %126, %127 : vector<16x16xf32>
    %c0_114 = arith.constant 0 : index
    %c3_115 = arith.constant 3 : index
    %c0_116 = arith.constant 0 : index
    %c0_117 = arith.constant 0 : index
    %129 = vector.load %arg5[%c0_114, %c3_115, %c0_116, %c0_117] : memref<1x8x16x16xf32, #tpu.memory_space<vmem>>, vector<1x1x16x16xf32>
    %130 = vector.shape_cast %129 : vector<1x1x16x16xf32> to vector<16x16xf32>
    %131 = vector.shape_cast %128 : vector<16x16xf32> to vector<1x1x16x16xf32>
    tpu.vector_store %arg5[%c0_114, %c3_115, %c0_116, %c0_117], %131 {strides = array<i32>} : memref<1x8x16x16xf32, #tpu.memory_space<vmem>>, vector<1x1x16x16xf32>,
    %c72 = arith.constant 72 : index
    %c0_118 = arith.constant 0 : index
    %132 = vector.load %arg6[%c72, %c0_118] : memref<144x16xf32, #tpu.memory_space<vmem>>, vector<16x16xf32>
    %133 = vector.broadcast %99 : vector<1x16xf32> to vector<16x16xf32>
    %134 = arith.addf %132, %133 : vector<16x16xf32>
    %cst_119 = arith.constant 0.000000e+00 : f32
    %135 = vector.broadcast %cst_119 : f32 to vector<16x16xf32>
    %136 = arith.maximumf %134, %135 : vector<16x16xf32>
    %c0_120 = arith.constant 0 : index
    %c4_121 = arith.constant 4 : index
    %c0_122 = arith.constant 0 : index
    %c0_123 = arith.constant 0 : index
    %137 = vector.load %arg5[%c0_120, %c4_121, %c0_122, %c0_123] : memref<1x8x16x16xf32, #tpu.memory_space<vmem>>, vector<1x1x16x16xf32>
    %138 = vector.shape_cast %137 : vector<1x1x16x16xf32> to vector<16x16xf32>
    %139 = vector.shape_cast %136 : vector<16x16xf32> to vector<1x1x16x16xf32>
    tpu.vector_store %arg5[%c0_120, %c4_121, %c0_122, %c0_123], %139 {strides = array<i32>} : memref<1x8x16x16xf32, #tpu.memory_space<vmem>>, vector<1x1x16x16xf32>,
    %c90 = arith.constant 90 : index
    %c0_124 = arith.constant 0 : index
    %140 = vector.load %arg6[%c90, %c0_124] : memref<144x16xf32, #tpu.memory_space<vmem>>, vector<16x16xf32>
    %141 = vector.broadcast %99 : vector<1x16xf32> to vector<16x16xf32>
    %142 = arith.addf %140, %141 : vector<16x16xf32>
    %cst_125 = arith.constant 0.000000e+00 : f32
    %143 = vector.broadcast %cst_125 : f32 to vector<16x16xf32>
    %144 = arith.maximumf %142, %143 : vector<16x16xf32>
    %c0_126 = arith.constant 0 : index
    %c5_127 = arith.constant 5 : index
    %c0_128 = arith.constant 0 : index
    %c0_129 = arith.constant 0 : index
    %145 = vector.load %arg5[%c0_126, %c5_127, %c0_128, %c0_129] : memref<1x8x16x16xf32, #tpu.memory_space<vmem>>, vector<1x1x16x16xf32>
    %146 = vector.shape_cast %145 : vector<1x1x16x16xf32> to vector<16x16xf32>
    %147 = vector.shape_cast %144 : vector<16x16xf32> to vector<1x1x16x16xf32>
    tpu.vector_store %arg5[%c0_126, %c5_127, %c0_128, %c0_129], %147 {strides = array<i32>} : memref<1x8x16x16xf32, #tpu.memory_space<vmem>>, vector<1x1x16x16xf32>,
    %c108 = arith.constant 108 : index
    %c0_130 = arith.constant 0 : index
    %148 = vector.load %arg6[%c108, %c0_130] : memref<144x16xf32, #tpu.memory_space<vmem>>, vector<16x16xf32>
    %149 = vector.broadcast %99 : vector<1x16xf32> to vector<16x16xf32>
    %150 = arith.addf %148, %149 : vector<16x16xf32>
    %cst_131 = arith.constant 0.000000e+00 : f32
    %151 = vector.broadcast %cst_131 : f32 to vector<16x16xf32>
    %152 = arith.maximumf %150, %151 : vector<16x16xf32>
    %c0_132 = arith.constant 0 : index
    %c6_133 = arith.constant 6 : index
    %c0_134 = arith.constant 0 : index
    %c0_135 = arith.constant 0 : index
    %153 = vector.load %arg5[%c0_132, %c6_133, %c0_134, %c0_135] : memref<1x8x16x16xf32, #tpu.memory_space<vmem>>, vector<1x1x16x16xf32>
    %154 = vector.shape_cast %153 : vector<1x1x16x16xf32> to vector<16x16xf32>
    %155 = vector.shape_cast %152 : vector<16x16xf32> to vector<1x1x16x16xf32>
    tpu.vector_store %arg5[%c0_132, %c6_133, %c0_134, %c0_135], %155 {strides = array<i32>} : memref<1x8x16x16xf32, #tpu.memory_space<vmem>>, vector<1x1x16x16xf32>,
    %c126 = arith.constant 126 : index
    %c0_136 = arith.constant 0 : index
    %156 = vector.load %arg6[%c126, %c0_136] : memref<144x16xf32, #tpu.memory_space<vmem>>, vector<16x16xf32>
    %157 = vector.broadcast %99 : vector<1x16xf32> to vector<16x16xf32>
    %158 = arith.addf %156, %157 : vector<16x16xf32>
    %cst_137 = arith.constant 0.000000e+00 : f32
    %159 = vector.broadcast %cst_137 : f32 to vector<16x16xf32>
    %160 = arith.maximumf %158, %159 : vector<16x16xf32>
    %c0_138 = arith.constant 0 : index
    %c7_139 = arith.constant 7 : index
    %c0_140 = arith.constant 0 : index
    %c0_141 = arith.constant 0 : index
    %161 = vector.load %arg5[%c0_138, %c7_139, %c0_140, %c0_141] : memref<1x8x16x16xf32, #tpu.memory_space<vmem>>, vector<1x1x16x16xf32>
    %162 = vector.shape_cast %161 : vector<1x1x16x16xf32> to vector<16x16xf32>
    %163 = vector.shape_cast %160 : vector<16x16xf32> to vector<1x1x16x16xf32>
    tpu.vector_store %arg5[%c0_138, %c7_139, %c0_140, %c0_141], %163 {strides = array<i32>} : memref<1x8x16x16xf32, #tpu.memory_space<vmem>>, vector<1x1x16x16xf32>,
    return
  }
  func.func @transform_0(%arg0: i32, %arg1: i32) -> (i32, i32, i32) {
    %c0_i32 = arith.constant 0 : i32
    %c0_i32_0 = arith.constant 0 : i32
    %c0_i32_1 = arith.constant 0 : i32
    return %arg0, %c0_i32, %c0_i32_0 : i32, i32, i32
  }
  func.func @transform_1(%arg0: i32, %arg1: i32) -> (i32, i32, i32) {
    %c0_i32 = arith.constant 0 : i32
    %c0_i32_0 = arith.constant 0 : i32
    %c0_i32_1 = arith.constant 0 : i32
    %c0_i32_2 = arith.constant 0 : i32
    return %c0_i32, %c0_i32_0, %c0_i32_1 : i32, i32, i32
  }
  func.func @transform_2(%arg0: i32, %arg1: i32) -> (i32, i32) {
    %c0_i32 = arith.constant 0 : i32
    %c0_i32_0 = arith.constant 0 : i32
    %c0_i32_1 = arith.constant 0 : i32
    return %c0_i32, %c0_i32_0 : i32, i32
  }
  func.func @transform_3(%arg0: i32, %arg1: i32) -> (i32, i32, i32, i32) {
    %c0_i32 = arith.constant 0 : i32
    %c0_i32_0 = arith.constant 0 : i32
    %c0_i32_1 = arith.constant 0 : i32
    return %arg0, %arg1, %c0_i32, %c0_i32_0 : i32, i32, i32, i32
  }
}

</mosaic_0001>

<llo_original>
// kernel: tpu_custom_call.1
$region0: #{tpu_custom_call.1}
  #allocation0 [shape = 'u32[]', space=smem, size = 0x4, offset = 0x4, fixed_abs, tag = 'smem constant byte address 0x4 - core index']
  #allocation1 [shape = 'u32[144,128]{1,0:T(1,128)}', space=vmem, size = 0x12000, scoped, tag = 'internal scratch']
  #allocation2 [shape = 'f32[144,16]{1,0:T(8,128)}', space=vmem, size = 0x12000, scoped, tag = 'scratch operand']
  %s0 = inlined_call_operand.vmem [shape: f32[2,328,8], index: 0, kind: input, shape index: {}]
  %s1 = inlined_call_operand.vmem [shape: f32[9,8,16], index: 1, kind: input, shape index: {}]
  %s2 = inlined_call_operand.vmem [shape: f32[1,16], index: 2, kind: input, shape index: {}]
  %s3 = inlined_call_operand.hbm [shape: f32[2,16,16,16], index: 3, kind: output, shape index: {}]
  %s4 = sld [smem:[#allocation0]]
  $region45: #{tpu_custom_call.1} parent=0
    _
  %s6 = ssub.s32 1, %s4
  %s7 = scalar_select 0, %s6, %s4
  $region1: #{tpu_custom_call.1} parent=0
    #allocation3 [shape = 'u8[131072]{0}', space=vmem, size = 0x20000, scoped, tag = 'output window, operand 0']
    #allocation4 [shape = 's32[2]{0}', space=sflag, size = 0x8, scoped, tag = 'scoped memory for tpu_custom_call.1']
    %8 = vsyncpa [#allocation4], 0
    %s9 = scalar_lea.sflag [#allocation4], 1
    %10 = vsyncpa %s9, 0
    loop: start=0, step=1, limit=6
    $region2: #{tpu_custom_call.1} parent=1 // loop_pre_header
      _
    $region3: #{tpu_custom_call.1} parent=1 // loop_header
      %s12 = sphi 0, %s16
      %p13 = scmp.ge.s32.totalorder %s12, 6
      %s19 = sphi 0, %s31
      %s20 = sphi 0, %s27
      %s21 = sphi 0, %s19
      %s22 = sphi 0, %s20
      %s23 = sphi 0, %s21
      %s24 = sphi 0, %s22
      %s34 = sphi 0, %s36
      %s37 = sphi 0, %s34
      %s38 = sphi 0, %s37
      %s54 = sphi 0, %s38
      %s58 = sphi 0, %s58
      %s60 = sphi 0, %s58
      %s61 = sphi 0, %s60
      %s75 = sphi 0, %s61
      %s79 = sphi 0, %s79
      %s81 = sphi 0, %s79
      %s82 = sphi 0, %s81
      %s96 = sphi 0, %s82
      %s104 = sphi 0, %s106
      %s107 = sphi 0, %s104
      %s108 = sphi 0, %s107
      %s124 = sphi 0, %s108
    $region4: #{tpu_custom_call.1} parent=1 // loop_header_branch
      %15 = sbr.rel (%p13) target = $region8
    $region5: #{tpu_custom_call.1} parent=1 // loop_body
      %s17 = ssub.s32 %s12, 1
      %s18 = ssub.s32 %s12, 2
      %s25 = sadd.s32 1, %s20
      %p26 = scmp.ge.s32.totalorder %s25, 2
      %s27 = scalar_select %p26, 0, %s25
      %s28 = sadd.s32 1, %s19
      %s29 = scalar_select %p26, %s28, %s19
      %p30 = scmp.ge.s32.totalorder %s29, 2
      %s31 = scalar_select %p30, 0, %s29
      %s32 = ssub.s32 %s19, %s31
      %p33 = scmp.eq.s32.totalorder %s32, 0
      %s35 = sadd.s32 %s34, 1
      %s36 = scalar_select %p33, %s34, %s35
      %p39 = pneg %p33
      %p40 = scmp.eq.s32.totalorder %s12, 3
      %p41 = por %p39, %p40
      %p42 = scmp.ne.s32.totalorder %s34, %s37
      %p43 = scmp.eq.s32.totalorder %s12, 0
      %p44 = por %p42, %p43
      %p45 = scmp.ne.s32.totalorder %s34, %s37
      %p46 = scmp.eq.s32.totalorder %s17, 3
      %p47 = por %p45, %p46
      %p48 = scmp.ne.s32.totalorder %s37, %s38
      %p49 = scmp.eq.s32.totalorder %s17, 0
      %p50 = por %p48, %p49
      %p51 = scmp.ne.s32.totalorder %s37, %s38
      %p52 = scmp.eq.s32.totalorder %s18, 3
      %p53 = por %p51, %p52
      %p55 = scmp.ne.s32.totalorder %s38, %s54
      %p56 = scmp.eq.s32.totalorder %s18, 0
      %p57 = por %p55, %p56
      %s59 = sadd.s32 %s58, 1
      %p62 = scmp.eq.s32.totalorder %s12, 3
      %p63 = scmp.ne.s32.totalorder %s58, %s60
      %p64 = scmp.eq.s32.totalorder %s12, 0
      %p65 = por %p63, %p64
      %p66 = scmp.ne.s32.totalorder %s58, %s60
      %p67 = scmp.eq.s32.totalorder %s17, 3
      %p68 = por %p66, %p67
      %p69 = scmp.ne.s32.totalorder %s60, %s61
      %p70 = scmp.eq.s32.totalorder %s17, 0
      %p71 = por %p69, %p70
      %p72 = scmp.ne.s32.totalorder %s60, %s61
      %p73 = scmp.eq.s32.totalorder %s18, 3
      %p74 = por %p72, %p73
      %p76 = scmp.ne.s32.totalorder %s61, %s75
      %p77 = scmp.eq.s32.totalorder %s18, 0
      %p78 = por %p76, %p77
      %s80 = sadd.s32 %s79, 1
      %p83 = scmp.eq.s32.totalorder %s12, 3
      %p84 = scmp.ne.s32.totalorder %s79, %s81
      %p85 = scmp.eq.s32.totalorder %s12, 0
      %p86 = por %p84, %p85
      %p87 = scmp.ne.s32.totalorder %s79, %s81
      %p88 = scmp.eq.s32.totalorder %s17, 3
      %p89 = por %p87, %p88
      %p90 = scmp.ne.s32.totalorder %s81, %s82
      %p91 = scmp.eq.s32.totalorder %s17, 0
      %p92 = por %p90, %p91
      %p93 = scmp.ne.s32.totalorder %s81, %s82
      %p94 = scmp.eq.s32.totalorder %s18, 3
      %p95 = por %p93, %p94
      %p97 = scmp.ne.s32.totalorder %s82, %s96
      %p98 = scmp.eq.s32.totalorder %s18, 0
      %p99 = por %p97, %p98
      %s100 = ssub.s32 %s19, %s31
      %s101 = ssub.s32 %s20, %s27
      %s102 = sor.u32 %s100, %s101
      %p103 = scmp.eq.s32.totalorder %s102, 0
      %s105 = sadd.s32 %s104, 1
      %s106 = scalar_select %p103, %s104, %s105
      %p109 = pneg %p103
      %p110 = scmp.eq.s32.totalorder %s12, 3
      %p111 = por %p109, %p110
      %p112 = scmp.ne.s32.totalorder %s104, %s107
      %p113 = scmp.eq.s32.totalorder %s12, 0
      %p114 = por %p112, %p113
      %p115 = scmp.ne.s32.totalorder %s104, %s107
      %p116 = scmp.eq.s32.totalorder %s17, 3
      %p117 = por %p115, %p116
      %p118 = scmp.ne.s32.totalorder %s107, %s108
      %p119 = scmp.eq.s32.totalorder %s17, 0
      %p120 = por %p118, %p119
      %p121 = scmp.ne.s32.totalorder %s107, %s108
      %p122 = scmp.eq.s32.totalorder %s18, 3
      %p123 = por %p121, %p122
      %p125 = scmp.ne.s32.totalorder %s108, %s124
      %p126 = scmp.eq.s32.totalorder %s18, 0
      %p127 = por %p125, %p126
      %p128 = scmp.le.s32.totalorder 1, %s12
      %p129 = scmp.lt.s32.totalorder %s12, 5
      %p130 = pnand %p128, %p129
      %p131 = pneg %p130
      // Predicated region
      $region9: #{tpu_custom_call.1} parent=5 // pred_check
        _
      $region10: #{tpu_custom_call.1} parent=5 // pred_check_branch
        %133 = sbr.rel (%p130) target = $region12
      $region11: #{tpu_custom_call.1} parent=5 // pred_region
        %s134 = ssub.s32 %s12, 1
        // Predicated region
        $region13: #{tpu_custom_call.1} parent=11 // pred_check
          %p135 = pneg %p71
        $region14: #{tpu_custom_call.1} parent=11 // pred_check_branch
          %137 = sbr.rel (%p135) target = $region16
        $region15: #{tpu_custom_call.1} parent=11 // pred_region
          _
        $region16: #{tpu_custom_call.1} parent=11 // pred_fallthru
          _
        // Predicated region
        $region17: #{tpu_custom_call.1} parent=11 // pred_check
          %p138 = pneg %p92
        $region18: #{tpu_custom_call.1} parent=11 // pred_check_branch
          %140 = sbr.rel (%p138) target = $region20
        $region19: #{tpu_custom_call.1} parent=11 // pred_region
          _
        $region20: #{tpu_custom_call.1} parent=11 // pred_fallthru
          _
      $region12: #{tpu_custom_call.1} parent=5 // pred_fallthru
        _
      %p141 = scmp.lt.s32.totalorder %s12, 4
      // Predicated region
      $region21: #{tpu_custom_call.1} parent=5 // pred_check
        %p142 = pneg %p141
      $region22: #{tpu_custom_call.1} parent=5 // pred_check_branch
        %144 = sbr.rel (%p142) target = $region24
      $region23: #{tpu_custom_call.1} parent=5 // pred_region
        // Predicated region
        $region25: #{tpu_custom_call.1} parent=23 // pred_check
          %p145 = pneg %p44
        $region26: #{tpu_custom_call.1} parent=23 // pred_check_branch
          %147 = sbr.rel (%p145) target = $region28
        $region27: #{tpu_custom_call.1} parent=23 // pred_region
          %p148 = scmp.lt.s32.totalorder %s19, 1
          %s149 = scalar_select %p148, %s19, 1
          %s150 = smul.addr %s149, 41
          %s151 = smul.addr %s150, 8
          %s152 = scalar_lea.vmem %s0, %s151
        $region28: #{tpu_custom_call.1} parent=23 // pred_fallthru
          _
      $region24: #{tpu_custom_call.1} parent=5 // pred_fallthru
        _
      %p153 = scmp.le.s32.totalorder 1, %s12
      %p154 = scmp.lt.s32.totalorder %s12, 5
      %p155 = pnand %p153, %p154
      %p156 = pneg %p155
      // Predicated region
      $region29: #{tpu_custom_call.1} parent=5 // pred_check
        _
      $region30: #{tpu_custom_call.1} parent=5 // pred_check_branch
        %158 = sbr.rel (%p155) target = $region32
      $region31: #{tpu_custom_call.1} parent=5 // pred_region
        %s159 = ssub.s32 %s12, 1
        %p160 = scmp.lt.s32.totalorder %s21, 1
        %s161 = scalar_select %p160, %s21, 1
        %s162 = smul.addr %s161, 41
        %s163 = smul.addr %s162, 8
        %s164 = scalar_lea.vmem %s0, %s163
        %p165 = pneg %p50
        %p166 = pneg %p47
        %p167 = pneg %p71
        %p168 = pneg %p68
        %p169 = pneg %p92
        %p170 = pneg %p89
        %p171 = pneg %p120
        %p172 = pneg %p117
        %s173 = sand.u32 %s107, 1
        %s174 = scalar_lea.sflag [#allocation4], %s173
        %s175 = sand.u32 %s107, 1
        %s176 = smul.addr %s175, 128
        %s177 = scalar_lea.vmem [#allocation3], %s176
        %p178 = scmp.lt.s32.totalorder %s21, 1
        %s179 = scalar_select %p178, %s21, 1
        %s180 = smul.addr %s179, 41
        %s181 = smul.addr %s180, 8
        %s182 = scalar_lea.vmem %s0, %s181
        %s183 = smul.u32 8, %s22
        %s184 = smul.u32 %s22, 144
        %s185 = scalar_lea.vmem %s182, %s184
        %v186 = vld [vmem:[%s185] sm:$0xff]
        %v187 = vld [vmem:[%s185 + $0x8] sm:$0xff]
        %v188 = vld [vmem:[%s185 + $0x10] sm:$0xff]
        %v189 = vld [vmem:[%s185 + $0x18] sm:$0xff]
        %v190 = vld [vmem:[%s185 + $0x20] sm:$0xff]
        %v191 = vld [vmem:[%s185 + $0x28] sm:$0xff]
        %v192 = vld [vmem:[%s185 + $0x30] sm:$0xff]
        %v193 = vld [vmem:[%s185 + $0x38] sm:$0xff]
        %v194 = vld [vmem:[%s185 + $0x40] sm:$0xff]
        %v195 = vld [vmem:[%s185 + $0x48] sm:$0xff]
        %v196 = vld [vmem:[%s185 + $0x50] sm:$0xff]
        %v197 = vld [vmem:[%s185 + $0x58] sm:$0xff]
        %v198 = vld [vmem:[%s185 + $0x60] sm:$0xff]
        %v199 = vld [vmem:[%s185 + $0x68] sm:$0xff]
        %v200 = vld [vmem:[%s185 + $0x70] sm:$0xff]
        %v201 = vld [vmem:[%s185 + $0x78] sm:$0xff]
        %v202 = vld [vmem:[%s185 + $0x80] sm:$0xff]
        %v203 = vld [vmem:[%s185 + $0x88] sm:$0xff]
        %v204 = vld [vmem:[%s1] sm:$0xff]
        %vm205 = vcmask 64512
        %v207 = vsel %vm205, %v186, 0
        %v210 = vsel %vm205, %v187, 0
        %v213 = vsel %vm205, %v188, 0
        %v216 = vsel %vm205, %v189, 0
        %v219 = vsel %vm205, %v190, 0
        %v222 = vsel %vm205, %v191, 0
        %v225 = vsel %vm205, %v192, 0
        %v228 = vsel %vm205, %v193, 0
        %v231 = vsel %vm205, %v194, 0
        %v234 = vsel %vm205, %v195, 0
        %v237 = vsel %vm205, %v196, 0
        %v240 = vsel %vm205, %v197, 0
        %v243 = vsel %vm205, %v198, 0
        %v246 = vsel %vm205, %v199, 0
        %v249 = vsel %vm205, %v200, 0
        %v252 = vsel %vm205, %v201, 0
        %v255 = vsel %vm205, %v202, 0
        %v258 = vsel %vm205, %v203, 0
        %260 = vmatprep.subr.mxu0 0.0
        %261 = vmatpush1.msra.mxu0 0.0
        %262 = vmatprep.subr.mxu0 0.0
        %263 = vmatpush1.msra.mxu0 0.0
        %264 = vmatprep.subr.mxu0 0.0
        %265 = vmatpush1.msra.mxu0 0.0
        %266 = vmatprep.subr.mxu0 0.0
        %267 = vmatpush1.msra.mxu0 0.0
        %268 = vmatprep.subr.mxu0 0.0
        %269 = vmatpush1.msra.mxu0 0.0
        %270 = vmatprep.subr.mxu0 0.0
        %271 = vmatpush1.msra.mxu0 0.0
        %272 = vmatprep.subr.mxu0 0.0
        %273 = vmatpush1.msra.mxu0 0.0
        %274 = vmatprep.subr.mxu0 0.0
        %275 = vmatpush1.msra.mxu0 0.0
        %276 = vmatprep.subr.mxu0 0.0
        %277 = vmatpush1.msra.mxu0 0.0
        %278 = vmatprep.subr.mxu0 0.0
        %279 = vmatpush1.msra.mxu0 0.0
        %280 = vmatprep.subr.mxu0 0.0
        %281 = vmatpush1.msra.mxu0 0.0
        %282 = vmatprep.subr.mxu0 0.0
        %283 = vmatpush1.msra.mxu0 0.0
        %284 = vmatprep.subr.mxu0 0.0
        %285 = vmatpush1.msra.mxu0 0.0
        %286 = vmatprep.subr.mxu0 0.0
        %287 = vmatpush1.msra.mxu0 0.0
        %288 = vmatprep.subr.mxu0 0.0
        %289 = vmatpush1.msra.mxu0 0.0
        %290 = vmatprep.subr.mxu0 0.0
        %291 = vmatpush1.msra.mxu0 %v204
        %292 = vmatprep.subr.mxu0 0.0
        %293 = vmatpush2.msra.mxu0 0.0
        %294 = vmatprep.subr.mxu0 0.0
        %295 = vmatpush2.msra.mxu0 0.0
        %296 = vmatprep.subr.mxu0 0.0
        %297 = vmatpush2.msra.mxu0 0.0
        %298 = vmatprep.subr.mxu0 0.0
        %299 = vmatpush2.msra.mxu0 0.0
        %300 = vmatprep.subr.mxu0 0.0
        %301 = vmatpush2.msra.mxu0 0.0
        %302 = vmatprep.subr.mxu0 0.0
        %303 = vmatpush2.msra.mxu0 0.0
        %304 = vmatprep.subr.mxu0 0.0
        %305 = vmatpush2.msra.mxu0 0.0
        %306 = vmatprep.subr.mxu0 0.0
        %307 = vmatpush2.msra.mxu0 0.0
        %308 = vmatprep.subr.mxu0 0.0
        %309 = vmatpush2.msra.mxu0 0.0
        %310 = vmatprep.subr.mxu0 0.0
        %311 = vmatpush2.msra.mxu0 0.0
        %312 = vmatprep.subr.mxu0 0.0
        %313 = vmatpush2.msra.mxu0 0.0
        %314 = vmatprep.subr.mxu0 0.0
        %315 = vmatpush2.msra.mxu0 0.0
        %316 = vmatprep.subr.mxu0 0.0
        %317 = vmatpush2.msra.mxu0 0.0
        %318 = vmatprep.subr.mxu0 0.0
        %319 = vmatpush2.msra.mxu0 0.0
        %320 = vmatprep.subr.mxu0 0.0
        %321 = vmatpush2.msra.mxu0 0.0
        %322 = vmatprep.subr.mxu0 0.0
        %323 = vmatpush2.msra.mxu0 0.0
        %324 = vmatprep.mubr.f32.mxu0 0.0
        %325 = vmatmul.mubr.f32.gmra.mxu0 %v207
        %v326 = vpop.f32.mrf.mxu0
        %v327 = vadd.f32 0.0, %v326
        %v328 = vpop.f32.mrf.mxu0
        %329 = vmatprep.mubr.f32.mxu0 0.0
        %330 = vmatmul.mubr.f32.gmra.mxu0 %v210
        %v331 = vpop.f32.mrf.mxu0
        %v332 = vadd.f32 0.0, %v331
        %v333 = vpop.f32.mrf.mxu0
        %334 = vmatprep.mubr.f32.mxu0 0.0
        %335 = vmatmul.mubr.f32.gmra.mxu0 %v213
        %v336 = vpop.f32.mrf.mxu0
        %v337 = vadd.f32 0.0, %v336
        %v338 = vpop.f32.mrf.mxu0
        %339 = vmatprep.mubr.f32.mxu0 0.0
        %340 = vmatmul.mubr.f32.gmra.mxu0 %v216
        %v341 = vpop.f32.mrf.mxu0
        %v342 = vadd.f32 0.0, %v341
        %v343 = vpop.f32.mrf.mxu0
        %344 = vmatprep.mubr.f32.mxu0 0.0
        %345 = vmatmul.mubr.f32.gmra.mxu0 %v219
        %v346 = vpop.f32.mrf.mxu0
        %v347 = vadd.f32 0.0, %v346
        %v348 = vpop.f32.mrf.mxu0
        %349 = vmatprep.mubr.f32.mxu0 0.0
        %350 = vmatmul.mubr.f32.gmra.mxu0 %v222
        %v351 = vpop.f32.mrf.mxu0
        %v352 = vadd.f32 0.0, %v351
        %v353 = vpop.f32.mrf.mxu0
        %354 = vmatprep.mubr.f32.mxu0 0.0
        %355 = vmatmul.mubr.f32.gmra.mxu0 %v225
        %v356 = vpop.f32.mrf.mxu0
        %v357 = vadd.f32 0.0, %v356
        %v358 = vpop.f32.mrf.mxu0
        %359 = vmatprep.mubr.f32.mxu0 0.0
        %360 = vmatmul.mubr.f32.gmra.mxu0 %v228
        %v361 = vpop.f32.mrf.mxu0
        %v362 = vadd.f32 0.0, %v361
        %v363 = vpop.f32.mrf.mxu0
        %364 = vmatprep.mubr.f32.mxu0 0.0
        %365 = vmatmul.mubr.f32.gmra.mxu0 %v231
        %v366 = vpop.f32.mrf.mxu0
        %v367 = vadd.f32 0.0, %v366
        %v368 = vpop.f32.mrf.mxu0
        %369 = vmatprep.mubr.f32.mxu0 0.0
        %370 = vmatmul.mubr.f32.gmra.mxu0 %v234
        %v371 = vpop.f32.mrf.mxu0
        %v372 = vadd.f32 0.0, %v371
        %v373 = vpop.f32.mrf.mxu0
        %374 = vmatprep.mubr.f32.mxu0 0.0
        %375 = vmatmul.mubr.f32.gmra.mxu0 %v237
        %v376 = vpop.f32.mrf.mxu0
        %v377 = vadd.f32 0.0, %v376
        %v378 = vpop.f32.mrf.mxu0
        %379 = vmatprep.mubr.f32.mxu0 0.0
        %380 = vmatmul.mubr.f32.gmra.mxu0 %v240
        %v381 = vpop.f32.mrf.mxu0
        %v382 = vadd.f32 0.0, %v381
        %v383 = vpop.f32.mrf.mxu0
        %384 = vmatprep.mubr.f32.mxu0 0.0
        %385 = vmatmul.mubr.f32.gmra.mxu0 %v243
        %v386 = vpop.f32.mrf.mxu0
        %v387 = vadd.f32 0.0, %v386
        %v388 = vpop.f32.mrf.mxu0
        %389 = vmatprep.mubr.f32.mxu0 0.0
        %390 = vmatmul.mubr.f32.gmra.mxu0 %v246
        %v391 = vpop.f32.mrf.mxu0
        %v392 = vadd.f32 0.0, %v391
        %v393 = vpop.f32.mrf.mxu0
        %394 = vmatprep.mubr.f32.mxu0 0.0
        %395 = vmatmul.mubr.f32.gmra.mxu0 %v249
        %v396 = vpop.f32.mrf.mxu0
        %v397 = vadd.f32 0.0, %v396
        %v398 = vpop.f32.mrf.mxu0
        %399 = vmatprep.mubr.f32.mxu0 0.0
        %400 = vmatmul.mubr.f32.gmra.mxu0 %v252
        %v401 = vpop.f32.mrf.mxu0
        %v402 = vadd.f32 0.0, %v401
        %v403 = vpop.f32.mrf.mxu0
        %404 = vmatprep.mubr.f32.mxu0 0.0
        %405 = vmatmul.mubr.f32.gmra.mxu0 %v255
        %v406 = vpop.f32.mrf.mxu0
        %v407 = vadd.f32 0.0, %v406
        %v408 = vpop.f32.mrf.mxu0
        %409 = vmatprep.mubr.f32.mxu0 0.0
        %410 = vmatmul.mubr.f32.gmra.mxu0 %v258
        %v411 = vpop.f32.mrf.mxu0
        %v412 = vadd.f32 0.0, %v411
        %v413 = vpop.f32.mrf.mxu0
        %414 = vdwg.mxu0
        %vm415 = vcmask 130048
        %416 = vst.msk [vmem:[#allocation2] sm:$0xff] %vm415, %v327
        %417 = vst.msk [vmem:[#allocation2 + $0x8] sm:$0xff] %vm415, %v332
        %418 = vst.msk [vmem:[#allocation2 + $0x10] sm:$0xff] %vm415, %v337
        %419 = vst.msk [vmem:[#allocation2 + $0x18] sm:$0xff] %vm415, %v342
        %420 = vst.msk [vmem:[#allocation2 + $0x20] sm:$0xff] %vm415, %v347
        %421 = vst.msk [vmem:[#allocation2 + $0x28] sm:$0xff] %vm415, %v352
        %422 = vst.msk [vmem:[#allocation2 + $0x30] sm:$0xff] %vm415, %v357
        %423 = vst.msk [vmem:[#allocation2 + $0x38] sm:$0xff] %vm415, %v362
        %424 = vst.msk [vmem:[#allocation2 + $0x40] sm:$0xff] %vm415, %v367
        %425 = vst.msk [vmem:[#allocation2 + $0x48] sm:$0xff] %vm415, %v372
        %426 = vst.msk [vmem:[#allocation2 + $0x50] sm:$0xff] %vm415, %v377
        %427 = vst.msk [vmem:[#allocation2 + $0x58] sm:$0xff] %vm415, %v382
        %428 = vst.msk [vmem:[#allocation2 + $0x60] sm:$0xff] %vm415, %v387
        %429 = vst.msk [vmem:[#allocation2 + $0x68] sm:$0xff] %vm415, %v392
        %430 = vst.msk [vmem:[#allocation2 + $0x70] sm:$0xff] %vm415, %v397
        %431 = vst.msk [vmem:[#allocation2 + $0x78] sm:$0xff] %vm415, %v402
        %432 = vst.msk [vmem:[#allocation2 + $0x80] sm:$0xff] %vm415, %v407
        %433 = vst.msk [vmem:[#allocation2 + $0x88] sm:$0xff] %vm415, %v412
        %s434 = sadd.s32 %s184, 1
        %s435 = scalar_lea.vmem %s182, %s434
        %v436 = vld [vmem:[%s435] sm:$0xff]
        %v437 = vld [vmem:[%s435 + $0x8] sm:$0xff]
        %v438 = vld [vmem:[%s435 + $0x10] sm:$0xff]
        %v439 = vld [vmem:[%s435 + $0x18] sm:$0xff]
        %v440 = vld [vmem:[%s435 + $0x20] sm:$0xff]
        %v441 = vld [vmem:[%s435 + $0x28] sm:$0xff]
        %v442 = vld [vmem:[%s435 + $0x30] sm:$0xff]
        %v443 = vld [vmem:[%s435 + $0x38] sm:$0xff]
        %v444 = vld [vmem:[%s435 + $0x40] sm:$0xff]
        %v445 = vld [vmem:[%s435 + $0x48] sm:$0xff]
        %v446 = vld [vmem:[%s435 + $0x50] sm:$0xff]
        %v447 = vld [vmem:[%s435 + $0x58] sm:$0xff]
        %v448 = vld [vmem:[%s435 + $0x60] sm:$0xff]
        %v449 = vld [vmem:[%s435 + $0x68] sm:$0xff]
        %v450 = vld [vmem:[%s435 + $0x70] sm:$0xff]
        %v451 = vld [vmem:[%s435 + $0x78] sm:$0xff]
        %v452 = vld [vmem:[%s435 + $0x80] sm:$0xff]
        %v453 = vld [vmem:[%s435 + $0x88] sm:$0xff]
        %s454 = scalar_lea.vmem %s1, 8
        %v455 = vld [vmem:[%s454] sm:$0xff]
        %v457 = vsel %vm205, %v436, 0
        %v460 = vsel %vm205, %v437, 0
        %v463 = vsel %vm205, %v438, 0
        %v466 = vsel %vm205, %v439, 0
        %v469 = vsel %vm205, %v440, 0
        %v472 = vsel %vm205, %v441, 0
        %v475 = vsel %vm205, %v442, 0
        %v478 = vsel %vm205, %v443, 0
        %v481 = vsel %vm205, %v444, 0
        %v484 = vsel %vm205, %v445, 0
        %v487 = vsel %vm205, %v446, 0
        %v490 = vsel %vm205, %v447, 0
        %v493 = vsel %vm205, %v448, 0
        %v496 = vsel %vm205, %v449, 0
        %v499 = vsel %vm205, %v450, 0
        %v502 = vsel %vm205, %v451, 0
        %v505 = vsel %vm205, %v452, 0
        %v508 = vsel %vm205, %v453, 0
        %510 = vmatprep.subr.mxu0 0.0
        %511 = vmatpush1.msra.mxu0 0.0
        %512 = vmatprep.subr.mxu0 0.0
        %513 = vmatpush1.msra.mxu0 0.0
        %514 = vmatprep.subr.mxu0 0.0
        %515 = vmatpush1.msra.mxu0 0.0
        %516 = vmatprep.subr.mxu0 0.0
        %517 = vmatpush1.msra.mxu0 0.0
        %518 = vmatprep.subr.mxu0 0.0
        %519 = vmatpush1.msra.mxu0 0.0
        %520 = vmatprep.subr.mxu0 0.0
        %521 = vmatpush1.msra.mxu0 0.0
        %522 = vmatprep.subr.mxu0 0.0
        %523 = vmatpush1.msra.mxu0 0.0
        %524 = vmatprep.subr.mxu0 0.0
        %525 = vmatpush1.msra.mxu0 0.0
        %526 = vmatprep.subr.mxu0 0.0
        %527 = vmatpush1.msra.mxu0 0.0
        %528 = vmatprep.subr.mxu0 0.0
        %529 = vmatpush1.msra.mxu0 0.0
        %530 = vmatprep.subr.mxu0 0.0
        %531 = vmatpush1.msra.mxu0 0.0
        %532 = vmatprep.subr.mxu0 0.0
        %533 = vmatpush1.msra.mxu0 0.0
        %534 = vmatprep.subr.mxu0 0.0
        %535 = vmatpush1.msra.mxu0 0.0
        %536 = vmatprep.subr.mxu0 0.0
        %537 = vmatpush1.msra.mxu0 0.0
        %538 = vmatprep.subr.mxu0 0.0
        %539 = vmatpush1.msra.mxu0 0.0
        %540 = vmatprep.subr.mxu0 0.0
        %541 = vmatpush1.msra.mxu0 %v455
        %542 = vmatprep.subr.mxu0 0.0
        %543 = vmatpush2.msra.mxu0 0.0
        %544 = vmatprep.subr.mxu0 0.0
        %545 = vmatpush2.msra.mxu0 0.0
        %546 = vmatprep.subr.mxu0 0.0
        %547 = vmatpush2.msra.mxu0 0.0
        %548 = vmatprep.subr.mxu0 0.0
        %549 = vmatpush2.msra.mxu0 0.0
        %550 = vmatprep.subr.mxu0 0.0
        %551 = vmatpush2.msra.mxu0 0.0
        %552 = vmatprep.subr.mxu0 0.0
        %553 = vmatpush2.msra.mxu0 0.0
        %554 = vmatprep.subr.mxu0 0.0
        %555 = vmatpush2.msra.mxu0 0.0
        %556 = vmatprep.subr.mxu0 0.0
        %557 = vmatpush2.msra.mxu0 0.0
        %558 = vmatprep.subr.mxu0 0.0
        %559 = vmatpush2.msra.mxu0 0.0
        %560 = vmatprep.subr.mxu0 0.0
        %561 = vmatpush2.msra.mxu0 0.0
        %562 = vmatprep.subr.mxu0 0.0
        %563 = vmatpush2.msra.mxu0 0.0
        %564 = vmatprep.subr.mxu0 0.0
        %565 = vmatpush2.msra.mxu0 0.0
        %566 = vmatprep.subr.mxu0 0.0
        %567 = vmatpush2.msra.mxu0 0.0
        %568 = vmatprep.subr.mxu0 0.0
        %569 = vmatpush2.msra.mxu0 0.0
        %570 = vmatprep.subr.mxu0 0.0
        %571 = vmatpush2.msra.mxu0 0.0
        %572 = vmatprep.subr.mxu0 0.0
        %573 = vmatpush2.msra.mxu0 0.0
        %574 = vmatprep.mubr.f32.mxu0 0.0
        %575 = vmatmul.mubr.f32.gmra.mxu0 %v457
        %v576 = vpop.f32.mrf.mxu0
        %v577 = vadd.f32 0.0, %v576
        %v578 = vpop.f32.mrf.mxu0
        %579 = vmatprep.mubr.f32.mxu0 0.0
        %580 = vmatmul.mubr.f32.gmra.mxu0 %v460
        %v581 = vpop.f32.mrf.mxu0
        %v582 = vadd.f32 0.0, %v581
        %v583 = vpop.f32.mrf.mxu0
        %584 = vmatprep.mubr.f32.mxu0 0.0
        %585 = vmatmul.mubr.f32.gmra.mxu0 %v463
        %v586 = vpop.f32.mrf.mxu0
        %v587 = vadd.f32 0.0, %v586
        %v588 = vpop.f32.mrf.mxu0
        %589 = vmatprep.mubr.f32.mxu0 0.0
        %590 = vmatmul.mubr.f32.gmra.mxu0 %v466
        %v591 = vpop.f32.mrf.mxu0
        %v592 = vadd.f32 0.0, %v591
        %v593 = vpop.f32.mrf.mxu0
        %594 = vmatprep.mubr.f32.mxu0 0.0
        %595 = vmatmul.mubr.f32.gmra.mxu0 %v469
        %v596 = vpop.f32.mrf.mxu0
        %v597 = vadd.f32 0.0, %v596
        %v598 = vpop.f32.mrf.mxu0
        %599 = vmatprep.mubr.f32.mxu0 0.0
        %600 = vmatmul.mubr.f32.gmra.mxu0 %v472
        %v601 = vpop.f32.mrf.mxu0
        %v602 = vadd.f32 0.0, %v601
        %v603 = vpop.f32.mrf.mxu0
        %604 = vmatprep.mubr.f32.mxu0 0.0
        %605 = vmatmul.mubr.f32.gmra.mxu0 %v475
        %v606 = vpop.f32.mrf.mxu0
        %v607 = vadd.f32 0.0, %v606
        %v608 = vpop.f32.mrf.mxu0
        %609 = vmatprep.mubr.f32.mxu0 0.0
        %610 = vmatmul.mubr.f32.gmra.mxu0 %v478
        %v611 = vpop.f32.mrf.mxu0
        %v612 = vadd.f32 0.0, %v611
        %v613 = vpop.f32.mrf.mxu0
        %614 = vmatprep.mubr.f32.mxu0 0.0
        %615 = vmatmul.mubr.f32.gmra.mxu0 %v481
        %v616 = vpop.f32.mrf.mxu0
        %v617 = vadd.f32 0.0, %v616
        %v618 = vpop.f32.mrf.mxu0
        %619 = vmatprep.mubr.f32.mxu0 0.0
        %620 = vmatmul.mubr.f32.gmra.mxu0 %v484
        %v621 = vpop.f32.mrf.mxu0
        %v622 = vadd.f32 0.0, %v621
        %v623 = vpop.f32.mrf.mxu0
        %624 = vmatprep.mubr.f32.mxu0 0.0
        %625 = vmatmul.mubr.f32.gmra.mxu0 %v487
        %v626 = vpop.f32.mrf.mxu0
        %v627 = vadd.f32 0.0, %v626
        %v628 = vpop.f32.mrf.mxu0
        %629 = vmatprep.mubr.f32.mxu0 0.0
        %630 = vmatmul.mubr.f32.gmra.mxu0 %v490
        %v631 = vpop.f32.mrf.mxu0
        %v632 = vadd.f32 0.0, %v631
        %v633 = vpop.f32.mrf.mxu0
        %634 = vmatprep.mubr.f32.mxu0 0.0
        %635 = vmatmul.mubr.f32.gmra.mxu0 %v493
        %v636 = vpop.f32.mrf.mxu0
        %v637 = vadd.f32 0.0, %v636
        %v638 = vpop.f32.mrf.mxu0
        %639 = vmatprep.mubr.f32.mxu0 0.0
        %640 = vmatmul.mubr.f32.gmra.mxu0 %v496
        %v641 = vpop.f32.mrf.mxu0
        %v642 = vadd.f32 0.0, %v641
        %v643 = vpop.f32.mrf.mxu0
        %644 = vmatprep.mubr.f32.mxu0 0.0
        %645 = vmatmul.mubr.f32.gmra.mxu0 %v499
        %v646 = vpop.f32.mrf.mxu0
        %v647 = vadd.f32 0.0, %v646
        %v648 = vpop.f32.mrf.mxu0
        %649 = vmatprep.mubr.f32.mxu0 0.0
        %650 = vmatmul.mubr.f32.gmra.mxu0 %v502
        %v651 = vpop.f32.mrf.mxu0
        %v652 = vadd.f32 0.0, %v651
        %v653 = vpop.f32.mrf.mxu0
        %654 = vmatprep.mubr.f32.mxu0 0.0
        %655 = vmatmul.mubr.f32.gmra.mxu0 %v505
        %v656 = vpop.f32.mrf.mxu0
        %v657 = vadd.f32 0.0, %v656
        %v658 = vpop.f32.mrf.mxu0
        %659 = vmatprep.mubr.f32.mxu0 0.0
        %660 = vmatmul.mubr.f32.gmra.mxu0 %v508
        %v661 = vpop.f32.mrf.mxu0
        %v662 = vadd.f32 0.0, %v661
        %v663 = vpop.f32.mrf.mxu0
        %664 = vdwg.mxu0
        %v665 = vld [vmem:[#allocation2] sm:$0xff]
        %v666 = vld [vmem:[#allocation2 + $0x8] sm:$0xff]
        %v667 = vld [vmem:[#allocation2 + $0x10] sm:$0xff]
        %v668 = vld [vmem:[#allocation2 + $0x18] sm:$0xff]
        %v669 = vld [vmem:[#allocation2 + $0x20] sm:$0xff]
        %v670 = vld [vmem:[#allocation2 + $0x28] sm:$0xff]
        %v671 = vld [vmem:[#allocation2 + $0x30] sm:$0xff]
        %v672 = vld [vmem:[#allocation2 + $0x38] sm:$0xff]
        %v673 = vld [vmem:[#allocation2 + $0x40] sm:$0xff]
        %v674 = vld [vmem:[#allocation2 + $0x48] sm:$0xff]
        %v675 = vld [vmem:[#allocation2 + $0x50] sm:$0xff]
        %v676 = vld [vmem:[#allocation2 + $0x58] sm:$0xff]
        %v677 = vld [vmem:[#allocation2 + $0x60] sm:$0xff]
        %v678 = vld [vmem:[#allocation2 + $0x68] sm:$0xff]
        %v679 = vld [vmem:[#allocation2 + $0x70] sm:$0xff]
        %v680 = vld [vmem:[#allocation2 + $0x78] sm:$0xff]
        %v681 = vld [vmem:[#allocation2 + $0x80] sm:$0xff]
        %v682 = vld [vmem:[#allocation2 + $0x88] sm:$0xff]
        %v683 = vadd.f32 %v665, %v577
        %v684 = vadd.f32 %v666, %v582
        %v685 = vadd.f32 %v667, %v587
        %v686 = vadd.f32 %v668, %v592
        %v687 = vadd.f32 %v669, %v597
        %v688 = vadd.f32 %v670, %v602
        %v689 = vadd.f32 %v671, %v607
        %v690 = vadd.f32 %v672, %v612
        %v691 = vadd.f32 %v673, %v617
        %v692 = vadd.f32 %v674, %v622
        %v693 = vadd.f32 %v675, %v627
        %v694 = vadd.f32 %v676, %v632
        %v695 = vadd.f32 %v677, %v637
        %v696 = vadd.f32 %v678, %v642
        %v697 = vadd.f32 %v679, %v647
        %v698 = vadd.f32 %v680, %v652
        %v699 = vadd.f32 %v681, %v657
        %v700 = vadd.f32 %v682, %v662
        %701 = vst.msk [vmem:[#allocation2] sm:$0xff] %vm415, %v683
        %702 = vst.msk [vmem:[#allocation2 + $0x8] sm:$0xff] %vm415, %v684
        %703 = vst.msk [vmem:[#allocation2 + $0x10] sm:$0xff] %vm415, %v685
        %704 = vst.msk [vmem:[#allocation2 + $0x18] sm:$0xff] %vm415, %v686
        %705 = vst.msk [vmem:[#allocation2 + $0x20] sm:$0xff] %vm415, %v687
        %706 = vst.msk [vmem:[#allocation2 + $0x28] sm:$0xff] %vm415, %v688
        %707 = vst.msk [vmem:[#allocation2 + $0x30] sm:$0xff] %vm415, %v689
        %708 = vst.msk [vmem:[#allocation2 + $0x38] sm:$0xff] %vm415, %v690
        %709 = vst.msk [vmem:[#allocation2 + $0x40] sm:$0xff] %vm415, %v691
        %710 = vst.msk [vmem:[#allocation2 + $0x48] sm:$0xff] %vm415, %v692
        %711 = vst.msk [vmem:[#allocation2 + $0x50] sm:$0xff] %vm415, %v693
        %712 = vst.msk [vmem:[#allocation2 + $0x58] sm:$0xff] %vm415, %v694
        %713 = vst.msk [vmem:[#allocation2 + $0x60] sm:$0xff] %vm415, %v695
        %714 = vst.msk [vmem:[#allocation2 + $0x68] sm:$0xff] %vm415, %v696
        %715 = vst.msk [vmem:[#allocation2 + $0x70] sm:$0xff] %vm415, %v697
        %716 = vst.msk [vmem:[#allocation2 + $0x78] sm:$0xff] %vm415, %v698
        %717 = vst.msk [vmem:[#allocation2 + $0x80] sm:$0xff] %vm415, %v699
        %718 = vst.msk [vmem:[#allocation2 + $0x88] sm:$0xff] %vm415, %v700
        %s719 = sadd.s32 %s184, 2
        %s720 = scalar_lea.vmem %s182, %s719
        %v721 = vld [vmem:[%s720] sm:$0xff]
        %v722 = vld [vmem:[%s720 + $0x8] sm:$0xff]
        %v723 = vld [vmem:[%s720 + $0x10] sm:$0xff]
        %v724 = vld [vmem:[%s720 + $0x18] sm:$0xff]
        %v725 = vld [vmem:[%s720 + $0x20] sm:$0xff]
        %v726 = vld [vmem:[%s720 + $0x28] sm:$0xff]
        %v727 = vld [vmem:[%s720 + $0x30] sm:$0xff]
        %v728 = vld [vmem:[%s720 + $0x38] sm:$0xff]
        %v729 = vld [vmem:[%s720 + $0x40] sm:$0xff]
        %v730 = vld [vmem:[%s720 + $0x48] sm:$0xff]
        %v731 = vld [vmem:[%s720 + $0x50] sm:$0xff]
        %v732 = vld [vmem:[%s720 + $0x58] sm:$0xff]
        %v733 = vld [vmem:[%s720 + $0x60] sm:$0xff]
        %v734 = vld [vmem:[%s720 + $0x68] sm:$0xff]
        %v735 = vld [vmem:[%s720 + $0x70] sm:$0xff]
        %v736 = vld [vmem:[%s720 + $0x78] sm:$0xff]
        %v737 = vld [vmem:[%s720 + $0x80] sm:$0xff]
        %v738 = vld [vmem:[%s720 + $0x88] sm:$0xff]
        %s739 = scalar_lea.vmem %s1, 16
        %v740 = vld [vmem:[%s739] sm:$0xff]
        %v742 = vsel %vm205, %v721, 0
        %v745 = vsel %vm205, %v722, 0
        %v748 = vsel %vm205, %v723, 0
        %v751 = vsel %vm205, %v724, 0
        %v754 = vsel %vm205, %v725, 0
        %v757 = vsel %vm205, %v726, 0
        %v760 = vsel %vm205, %v727, 0
        %v763 = vsel %vm205, %v728, 0
        %v766 = vsel %vm205, %v729, 0
        %v769 = vsel %vm205, %v730, 0
        %v772 = vsel %vm205, %v731, 0
        %v775 = vsel %vm205, %v732, 0
        %v778 = vsel %vm205, %v733, 0
        %v781 = vsel %vm205, %v734, 0
        %v784 = vsel %vm205, %v735, 0
        %v787 = vsel %vm205, %v736, 0
        %v790 = vsel %vm205, %v737, 0
        %v793 = vsel %vm205, %v738, 0
        %795 = vmatprep.subr.mxu0 0.0
        %796 = vmatpush1.msra.mxu0 0.0
        %797 = vmatprep.subr.mxu0 0.0
        %798 = vmatpush1.msra.mxu0 0.0
        %799 = vmatprep.subr.mxu0 0.0
        %800 = vmatpush1.msra.mxu0 0.0
        %801 = vmatprep.subr.mxu0 0.0
        %802 = vmatpush1.msra.mxu0 0.0
        %803 = vmatprep.subr.mxu0 0.0
        %804 = vmatpush1.msra.mxu0 0.0
        %805 = vmatprep.subr.mxu0 0.0
        %806 = vmatpush1.msra.mxu0 0.0
        %807 = vmatprep.subr.mxu0 0.0
        %808 = vmatpush1.msra.mxu0 0.0
        %809 = vmatprep.subr.mxu0 0.0
        %810 = vmatpush1.msra.mxu0 0.0
        %811 = vmatprep.subr.mxu0 0.0
        %812 = vmatpush1.msra.mxu0 0.0
        %813 = vmatprep.subr.mxu0 0.0
        %814 = vmatpush1.msra.mxu0 0.0
        %815 = vmatprep.subr.mxu0 0.0
        %816 = vmatpush1.msra.mxu0 0.0
        %817 = vmatprep.subr.mxu0 0.0
        %818 = vmatpush1.msra.mxu0 0.0
        %819 = vmatprep.subr.mxu0 0.0
        %820 = vmatpush1.msra.mxu0 0.0
        %821 = vmatprep.subr.mxu0 0.0
        %822 = vmatpush1.msra.mxu0 0.0
        %823 = vmatprep.subr.mxu0 0.0
        %824 = vmatpush1.msra.mxu0 0.0
        %825 = vmatprep.subr.mxu0 0.0
        %826 = vmatpush1.msra.mxu0 %v740
        %827 = vmatprep.subr.mxu0 0.0
        %828 = vmatpush2.msra.mxu0 0.0
        %829 = vmatprep.subr.mxu0 0.0
        %830 = vmatpush2.msra.mxu0 0.0
        %831 = vmatprep.subr.mxu0 0.0
        %832 = vmatpush2.msra.mxu0 0.0
        %833 = vmatprep.subr.mxu0 0.0
        %834 = vmatpush2.msra.mxu0 0.0
        %835 = vmatprep.subr.mxu0 0.0
        %836 = vmatpush2.msra.mxu0 0.0
        %837 = vmatprep.subr.mxu0 0.0
        %838 = vmatpush2.msra.mxu0 0.0
        %839 = vmatprep.subr.mxu0 0.0
        %840 = vmatpush2.msra.mxu0 0.0
        %841 = vmatprep.subr.mxu0 0.0
        %842 = vmatpush2.msra.mxu0 0.0
        %843 = vmatprep.subr.mxu0 0.0
        %844 = vmatpush2.msra.mxu0 0.0
        %845 = vmatprep.subr.mxu0 0.0
        %846 = vmatpush2.msra.mxu0 0.0
        %847 = vmatprep.subr.mxu0 0.0
        %848 = vmatpush2.msra.mxu0 0.0
        %849 = vmatprep.subr.mxu0 0.0
        %850 = vmatpush2.msra.mxu0 0.0
        %851 = vmatprep.subr.mxu0 0.0
        %852 = vmatpush2.msra.mxu0 0.0
        %853 = vmatprep.subr.mxu0 0.0
        %854 = vmatpush2.msra.mxu0 0.0
        %855 = vmatprep.subr.mxu0 0.0
        %856 = vmatpush2.msra.mxu0 0.0
        %857 = vmatprep.subr.mxu0 0.0
        %858 = vmatpush2.msra.mxu0 0.0
        %859 = vmatprep.mubr.f32.mxu0 0.0
        %860 = vmatmul.mubr.f32.gmra.mxu0 %v742
        %v861 = vpop.f32.mrf.mxu0
        %v862 = vadd.f32 0.0, %v861
        %v863 = vpop.f32.mrf.mxu0
        %864 = vmatprep.mubr.f32.mxu0 0.0
        %865 = vmatmul.mubr.f32.gmra.mxu0 %v745
        %v866 = vpop.f32.mrf.mxu0
        %v867 = vadd.f32 0.0, %v866
        %v868 = vpop.f32.mrf.mxu0
        %869 = vmatprep.mubr.f32.mxu0 0.0
        %870 = vmatmul.mubr.f32.gmra.mxu0 %v748
        %v871 = vpop.f32.mrf.mxu0
        %v872 = vadd.f32 0.0, %v871
        %v873 = vpop.f32.mrf.mxu0
        %874 = vmatprep.mubr.f32.mxu0 0.0
        %875 = vmatmul.mubr.f32.gmra.mxu0 %v751
        %v876 = vpop.f32.mrf.mxu0
        %v877 = vadd.f32 0.0, %v876
        %v878 = vpop.f32.mrf.mxu0
        %879 = vmatprep.mubr.f32.mxu0 0.0
        %880 = vmatmul.mubr.f32.gmra.mxu0 %v754
        %v881 = vpop.f32.mrf.mxu0
        %v882 = vadd.f32 0.0, %v881
        %v883 = vpop.f32.mrf.mxu0
        %884 = vmatprep.mubr.f32.mxu0 0.0
        %885 = vmatmul.mubr.f32.gmra.mxu0 %v757
        %v886 = vpop.f32.mrf.mxu0
        %v887 = vadd.f32 0.0, %v886
        %v888 = vpop.f32.mrf.mxu0
        %889 = vmatprep.mubr.f32.mxu0 0.0
        %890 = vmatmul.mubr.f32.gmra.mxu0 %v760
        %v891 = vpop.f32.mrf.mxu0
        %v892 = vadd.f32 0.0, %v891
        %v893 = vpop.f32.mrf.mxu0
        %894 = vmatprep.mubr.f32.mxu0 0.0
        %895 = vmatmul.mubr.f32.gmra.mxu0 %v763
        %v896 = vpop.f32.mrf.mxu0
        %v897 = vadd.f32 0.0, %v896
        %v898 = vpop.f32.mrf.mxu0
        %899 = vmatprep.mubr.f32.mxu0 0.0
        %900 = vmatmul.mubr.f32.gmra.mxu0 %v766
        %v901 = vpop.f32.mrf.mxu0
        %v902 = vadd.f32 0.0, %v901
        %v903 = vpop.f32.mrf.mxu0
        %904 = vmatprep.mubr.f32.mxu0 0.0
        %905 = vmatmul.mubr.f32.gmra.mxu0 %v769
        %v906 = vpop.f32.mrf.mxu0
        %v907 = vadd.f32 0.0, %v906
        %v908 = vpop.f32.mrf.mxu0
        %909 = vmatprep.mubr.f32.mxu0 0.0
        %910 = vmatmul.mubr.f32.gmra.mxu0 %v772
        %v911 = vpop.f32.mrf.mxu0
        %v912 = vadd.f32 0.0, %v911
        %v913 = vpop.f32.mrf.mxu0
        %914 = vmatprep.mubr.f32.mxu0 0.0
        %915 = vmatmul.mubr.f32.gmra.mxu0 %v775
        %v916 = vpop.f32.mrf.mxu0
        %v917 = vadd.f32 0.0, %v916
        %v918 = vpop.f32.mrf.mxu0
        %919 = vmatprep.mubr.f32.mxu0 0.0
        %920 = vmatmul.mubr.f32.gmra.mxu0 %v778
        %v921 = vpop.f32.mrf.mxu0
        %v922 = vadd.f32 0.0, %v921
        %v923 = vpop.f32.mrf.mxu0
        %924 = vmatprep.mubr.f32.mxu0 0.0
        %925 = vmatmul.mubr.f32.gmra.mxu0 %v781
        %v926 = vpop.f32.mrf.mxu0
        %v927 = vadd.f32 0.0, %v926
        %v928 = vpop.f32.mrf.mxu0
        %929 = vmatprep.mubr.f32.mxu0 0.0
        %930 = vmatmul.mubr.f32.gmra.mxu0 %v784
        %v931 = vpop.f32.mrf.mxu0
        %v932 = vadd.f32 0.0, %v931
        %v933 = vpop.f32.mrf.mxu0
        %934 = vmatprep.mubr.f32.mxu0 0.0
        %935 = vmatmul.mubr.f32.gmra.mxu0 %v787
        %v936 = vpop.f32.mrf.mxu0
        %v937 = vadd.f32 0.0, %v936
        %v938 = vpop.f32.mrf.mxu0
        %939 = vmatprep.mubr.f32.mxu0 0.0
        %940 = vmatmul.mubr.f32.gmra.mxu0 %v790
        %v941 = vpop.f32.mrf.mxu0
        %v942 = vadd.f32 0.0, %v941
        %v943 = vpop.f32.mrf.mxu0
        %944 = vmatprep.mubr.f32.mxu0 0.0
        %945 = vmatmul.mubr.f32.gmra.mxu0 %v793
        %v946 = vpop.f32.mrf.mxu0
        %v947 = vadd.f32 0.0, %v946
        %v948 = vpop.f32.mrf.mxu0
        %949 = vdwg.mxu0
        %v950 = vld [vmem:[#allocation2] sm:$0xff]
        %v951 = vld [vmem:[#allocation2 + $0x8] sm:$0xff]
        %v952 = vld [vmem:[#allocation2 + $0x10] sm:$0xff]
        %v953 = vld [vmem:[#allocation2 + $0x18] sm:$0xff]
        %v954 = vld [vmem:[#allocation2 + $0x20] sm:$0xff]
        %v955 = vld [vmem:[#allocation2 + $0x28] sm:$0xff]
        %v956 = vld [vmem:[#allocation2 + $0x30] sm:$0xff]
        %v957 = vld [vmem:[#allocation2 + $0x38] sm:$0xff]
        %v958 = vld [vmem:[#allocation2 + $0x40] sm:$0xff]
        %v959 = vld [vmem:[#allocation2 + $0x48] sm:$0xff]
        %v960 = vld [vmem:[#allocation2 + $0x50] sm:$0xff]
        %v961 = vld [vmem:[#allocation2 + $0x58] sm:$0xff]
        %v962 = vld [vmem:[#allocation2 + $0x60] sm:$0xff]
        %v963 = vld [vmem:[#allocation2 + $0x68] sm:$0xff]
        %v964 = vld [vmem:[#allocation2 + $0x70] sm:$0xff]
        %v965 = vld [vmem:[#allocation2 + $0x78] sm:$0xff]
        %v966 = vld [vmem:[#allocation2 + $0x80] sm:$0xff]
        %v967 = vld [vmem:[#allocation2 + $0x88] sm:$0xff]
        %v968 = vadd.f32 %v950, %v862
        %v969 = vadd.f32 %v951, %v867
        %v970 = vadd.f32 %v952, %v872
        %v971 = vadd.f32 %v953, %v877
        %v972 = vadd.f32 %v954, %v882
        %v973 = vadd.f32 %v955, %v887
        %v974 = vadd.f32 %v956, %v892
        %v975 = vadd.f32 %v957, %v897
        %v976 = vadd.f32 %v958, %v902
        %v977 = vadd.f32 %v959, %v907
        %v978 = vadd.f32 %v960, %v912
        %v979 = vadd.f32 %v961, %v917
        %v980 = vadd.f32 %v962, %v922
        %v981 = vadd.f32 %v963, %v927
        %v982 = vadd.f32 %v964, %v932
        %v983 = vadd.f32 %v965, %v937
        %v984 = vadd.f32 %v966, %v942
        %v985 = vadd.f32 %v967, %v947
        %986 = vst.msk [vmem:[#allocation2] sm:$0xff] %vm415, %v968
        %987 = vst.msk [vmem:[#allocation2 + $0x8] sm:$0xff] %vm415, %v969
        %988 = vst.msk [vmem:[#allocation2 + $0x10] sm:$0xff] %vm415, %v970
        %989 = vst.msk [vmem:[#allocation2 + $0x18] sm:$0xff] %vm415, %v971
        %990 = vst.msk [vmem:[#allocation2 + $0x20] sm:$0xff] %vm415, %v972
        %991 = vst.msk [vmem:[#allocation2 + $0x28] sm:$0xff] %vm415, %v973
        %992 = vst.msk [vmem:[#allocation2 + $0x30] sm:$0xff] %vm415, %v974
        %993 = vst.msk [vmem:[#allocation2 + $0x38] sm:$0xff] %vm415, %v975
        %994 = vst.msk [vmem:[#allocation2 + $0x40] sm:$0xff] %vm415, %v976
        %995 = vst.msk [vmem:[#allocation2 + $0x48] sm:$0xff] %vm415, %v977
        %996 = vst.msk [vmem:[#allocation2 + $0x50] sm:$0xff] %vm415, %v978
        %997 = vst.msk [vmem:[#allocation2 + $0x58] sm:$0xff] %vm415, %v979
        %998 = vst.msk [vmem:[#allocation2 + $0x60] sm:$0xff] %vm415, %v980
        %999 = vst.msk [vmem:[#allocation2 + $0x68] sm:$0xff] %vm415, %v981
        %1000 = vst.msk [vmem:[#allocation2 + $0x70] sm:$0xff] %vm415, %v982
        %1001 = vst.msk [vmem:[#allocation2 + $0x78] sm:$0xff] %vm415, %v983
        %1002 = vst.msk [vmem:[#allocation2 + $0x80] sm:$0xff] %vm415, %v984
        %1003 = vst.msk [vmem:[#allocation2 + $0x88] sm:$0xff] %vm415, %v985
        %s1004 = sadd.s32 %s184, 18
        %s1005 = scalar_lea.vmem %s182, %s1004
        %v1006 = vld [vmem:[%s1005] sm:$0xff]
        %v1007 = vld [vmem:[%s1005 + $0x8] sm:$0xff]
        %v1008 = vld [vmem:[%s1005 + $0x10] sm:$0xff]
        %v1009 = vld [vmem:[%s1005 + $0x18] sm:$0xff]
        %v1010 = vld [vmem:[%s1005 + $0x20] sm:$0xff]
        %v1011 = vld [vmem:[%s1005 + $0x28] sm:$0xff]
        %v1012 = vld [vmem:[%s1005 + $0x30] sm:$0xff]
        %v1013 = vld [vmem:[%s1005 + $0x38] sm:$0xff]
        %v1014 = vld [vmem:[%s1005 + $0x40] sm:$0xff]
        %v1015 = vld [vmem:[%s1005 + $0x48] sm:$0xff]
        %v1016 = vld [vmem:[%s1005 + $0x50] sm:$0xff]
        %v1017 = vld [vmem:[%s1005 + $0x58] sm:$0xff]
        %v1018 = vld [vmem:[%s1005 + $0x60] sm:$0xff]
        %v1019 = vld [vmem:[%s1005 + $0x68] sm:$0xff]
        %v1020 = vld [vmem:[%s1005 + $0x70] sm:$0xff]
        %v1021 = vld [vmem:[%s1005 + $0x78] sm:$0xff]
        %v1022 = vld [vmem:[%s1005 + $0x80] sm:$0xff]
        %v1023 = vld [vmem:[%s1005 + $0x88] sm:$0xff]
        %s1024 = scalar_lea.vmem %s1, 24
        %v1025 = vld [vmem:[%s1024] sm:$0xff]
        %v1027 = vsel %vm205, %v1006, 0
        %v1030 = vsel %vm205, %v1007, 0
        %v1033 = vsel %vm205, %v1008, 0
        %v1036 = vsel %vm205, %v1009, 0
        %v1039 = vsel %vm205, %v1010, 0
        %v1042 = vsel %vm205, %v1011, 0
        %v1045 = vsel %vm205, %v1012, 0
        %v1048 = vsel %vm205, %v1013, 0
        %v1051 = vsel %vm205, %v1014, 0
        %v1054 = vsel %vm205, %v1015, 0
        %v1057 = vsel %vm205, %v1016, 0
        %v1060 = vsel %vm205, %v1017, 0
        %v1063 = vsel %vm205, %v1018, 0
        %v1066 = vsel %vm205, %v1019, 0
        %v1069 = vsel %vm205, %v1020, 0
        %v1072 = vsel %vm205, %v1021, 0
        %v1075 = vsel %vm205, %v1022, 0
        %v1078 = vsel %vm205, %v1023, 0
        %1080 = vmatprep.subr.mxu0 0.0
        %1081 = vmatpush1.msra.mxu0 0.0
        %1082 = vmatprep.subr.mxu0 0.0
        %1083 = vmatpush1.msra.mxu0 0.0
        %1084 = vmatprep.subr.mxu0 0.0
        %1085 = vmatpush1.msra.mxu0 0.0
        %1086 = vmatprep.subr.mxu0 0.0
        %1087 = vmatpush1.msra.mxu0 0.0
        %1088 = vmatprep.subr.mxu0 0.0
        %1089 = vmatpush1.msra.mxu0 0.0
        %1090 = vmatprep.subr.mxu0 0.0
        %1091 = vmatpush1.msra.mxu0 0.0
        %1092 = vmatprep.subr.mxu0 0.0
        %1093 = vmatpush1.msra.mxu0 0.0
        %1094 = vmatprep.subr.mxu0 0.0
        %1095 = vmatpush1.msra.mxu0 0.0
        %1096 = vmatprep.subr.mxu0 0.0
        %1097 = vmatpush1.msra.mxu0 0.0
        %1098 = vmatprep.subr.mxu0 0.0
        %1099 = vmatpush1.msra.mxu0 0.0
        %1100 = vmatprep.subr.mxu0 0.0
        %1101 = vmatpush1.msra.mxu0 0.0
        %1102 = vmatprep.subr.mxu0 0.0
        %1103 = vmatpush1.msra.mxu0 0.0
        %1104 = vmatprep.subr.mxu0 0.0
        %1105 = vmatpush1.msra.mxu0 0.0
        %1106 = vmatprep.subr.mxu0 0.0
        %1107 = vmatpush1.msra.mxu0 0.0
        %1108 = vmatprep.subr.mxu0 0.0
        %1109 = vmatpush1.msra.mxu0 0.0
        %1110 = vmatprep.subr.mxu0 0.0
        %1111 = vmatpush1.msra.mxu0 %v1025
        %1112 = vmatprep.subr.mxu0 0.0
        %1113 = vmatpush2.msra.mxu0 0.0
        %1114 = vmatprep.subr.mxu0 0.0
        %1115 = vmatpush2.msra.mxu0 0.0
        %1116 = vmatprep.subr.mxu0 0.0
        %1117 = vmatpush2.msra.mxu0 0.0
        %1118 = vmatprep.subr.mxu0 0.0
        %1119 = vmatpush2.msra.mxu0 0.0
        %1120 = vmatprep.subr.mxu0 0.0
        %1121 = vmatpush2.msra.mxu0 0.0
        %1122 = vmatprep.subr.mxu0 0.0
        %1123 = vmatpush2.msra.mxu0 0.0
        %1124 = vmatprep.subr.mxu0 0.0
        %1125 = vmatpush2.msra.mxu0 0.0
        %1126 = vmatprep.subr.mxu0 0.0
        %1127 = vmatpush2.msra.mxu0 0.0
        %1128 = vmatprep.subr.mxu0 0.0
        %1129 = vmatpush2.msra.mxu0 0.0
        %1130 = vmatprep.subr.mxu0 0.0
        %1131 = vmatpush2.msra.mxu0 0.0
        %1132 = vmatprep.subr.mxu0 0.0
        %1133 = vmatpush2.msra.mxu0 0.0
        %1134 = vmatprep.subr.mxu0 0.0
        %1135 = vmatpush2.msra.mxu0 0.0
        %1136 = vmatprep.subr.mxu0 0.0
        %1137 = vmatpush2.msra.mxu0 0.0
        %1138 = vmatprep.subr.mxu0 0.0
        %1139 = vmatpush2.msra.mxu0 0.0
        %1140 = vmatprep.subr.mxu0 0.0
        %1141 = vmatpush2.msra.mxu0 0.0
        %1142 = vmatprep.subr.mxu0 0.0
        %1143 = vmatpush2.msra.mxu0 0.0
        %1144 = vmatprep.mubr.f32.mxu0 0.0
        %1145 = vmatmul.mubr.f32.gmra.mxu0 %v1027
        %v1146 = vpop.f32.mrf.mxu0
        %v1147 = vadd.f32 0.0, %v1146
        %v1148 = vpop.f32.mrf.mxu0
        %1149 = vmatprep.mubr.f32.mxu0 0.0
        %1150 = vmatmul.mubr.f32.gmra.mxu0 %v1030
        %v1151 = vpop.f32.mrf.mxu0
        %v1152 = vadd.f32 0.0, %v1151
        %v1153 = vpop.f32.mrf.mxu0
        %1154 = vmatprep.mubr.f32.mxu0 0.0
        %1155 = vmatmul.mubr.f32.gmra.mxu0 %v1033
        %v1156 = vpop.f32.mrf.mxu0
        %v1157 = vadd.f32 0.0, %v1156
        %v1158 = vpop.f32.mrf.mxu0
        %1159 = vmatprep.mubr.f32.mxu0 0.0
        %1160 = vmatmul.mubr.f32.gmra.mxu0 %v1036
        %v1161 = vpop.f32.mrf.mxu0
        %v1162 = vadd.f32 0.0, %v1161
        %v1163 = vpop.f32.mrf.mxu0
        %1164 = vmatprep.mubr.f32.mxu0 0.0
        %1165 = vmatmul.mubr.f32.gmra.mxu0 %v1039
        %v1166 = vpop.f32.mrf.mxu0
        %v1167 = vadd.f32 0.0, %v1166
        %v1168 = vpop.f32.mrf.mxu0
        %1169 = vmatprep.mubr.f32.mxu0 0.0
        %1170 = vmatmul.mubr.f32.gmra.mxu0 %v1042
        %v1171 = vpop.f32.mrf.mxu0
        %v1172 = vadd.f32 0.0, %v1171
        %v1173 = vpop.f32.mrf.mxu0
        %1174 = vmatprep.mubr.f32.mxu0 0.0
        %1175 = vmatmul.mubr.f32.gmra.mxu0 %v1045
        %v1176 = vpop.f32.mrf.mxu0
        %v1177 = vadd.f32 0.0, %v1176
        %v1178 = vpop.f32.mrf.mxu0
        %1179 = vmatprep.mubr.f32.mxu0 0.0
        %1180 = vmatmul.mubr.f32.gmra.mxu0 %v1048
        %v1181 = vpop.f32.mrf.mxu0
        %v1182 = vadd.f32 0.0, %v1181
        %v1183 = vpop.f32.mrf.mxu0
        %1184 = vmatprep.mubr.f32.mxu0 0.0
        %1185 = vmatmul.mubr.f32.gmra.mxu0 %v1051
        %v1186 = vpop.f32.mrf.mxu0
        %v1187 = vadd.f32 0.0, %v1186
        %v1188 = vpop.f32.mrf.mxu0
        %1189 = vmatprep.mubr.f32.mxu0 0.0
        %1190 = vmatmul.mubr.f32.gmra.mxu0 %v1054
        %v1191 = vpop.f32.mrf.mxu0
        %v1192 = vadd.f32 0.0, %v1191
        %v1193 = vpop.f32.mrf.mxu0
        %1194 = vmatprep.mubr.f32.mxu0 0.0
        %1195 = vmatmul.mubr.f32.gmra.mxu0 %v1057
        %v1196 = vpop.f32.mrf.mxu0
        %v1197 = vadd.f32 0.0, %v1196
        %v1198 = vpop.f32.mrf.mxu0
        %1199 = vmatprep.mubr.f32.mxu0 0.0
        %1200 = vmatmul.mubr.f32.gmra.mxu0 %v1060
        %v1201 = vpop.f32.mrf.mxu0
        %v1202 = vadd.f32 0.0, %v1201
        %v1203 = vpop.f32.mrf.mxu0
        %1204 = vmatprep.mubr.f32.mxu0 0.0
        %1205 = vmatmul.mubr.f32.gmra.mxu0 %v1063
        %v1206 = vpop.f32.mrf.mxu0
        %v1207 = vadd.f32 0.0, %v1206
        %v1208 = vpop.f32.mrf.mxu0
        %1209 = vmatprep.mubr.f32.mxu0 0.0
        %1210 = vmatmul.mubr.f32.gmra.mxu0 %v1066
        %v1211 = vpop.f32.mrf.mxu0
        %v1212 = vadd.f32 0.0, %v1211
        %v1213 = vpop.f32.mrf.mxu0
        %1214 = vmatprep.mubr.f32.mxu0 0.0
        %1215 = vmatmul.mubr.f32.gmra.mxu0 %v1069
        %v1216 = vpop.f32.mrf.mxu0
        %v1217 = vadd.f32 0.0, %v1216
        %v1218 = vpop.f32.mrf.mxu0
        %1219 = vmatprep.mubr.f32.mxu0 0.0
        %1220 = vmatmul.mubr.f32.gmra.mxu0 %v1072
        %v1221 = vpop.f32.mrf.mxu0
        %v1222 = vadd.f32 0.0, %v1221
        %v1223 = vpop.f32.mrf.mxu0
        %1224 = vmatprep.mubr.f32.mxu0 0.0
        %1225 = vmatmul.mubr.f32.gmra.mxu0 %v1075
        %v1226 = vpop.f32.mrf.mxu0
        %v1227 = vadd.f32 0.0, %v1226
        %v1228 = vpop.f32.mrf.mxu0
        %1229 = vmatprep.mubr.f32.mxu0 0.0
        %1230 = vmatmul.mubr.f32.gmra.mxu0 %v1078
        %v1231 = vpop.f32.mrf.mxu0
        %v1232 = vadd.f32 0.0, %v1231
        %v1233 = vpop.f32.mrf.mxu0
        %1234 = vdwg.mxu0
        %v1235 = vld [vmem:[#allocation2] sm:$0xff]
        %v1236 = vld [vmem:[#allocation2 + $0x8] sm:$0xff]
        %v1237 = vld [vmem:[#allocation2 + $0x10] sm:$0xff]
        %v1238 = vld [vmem:[#allocation2 + $0x18] sm:$0xff]
        %v1239 = vld [vmem:[#allocation2 + $0x20] sm:$0xff]
        %v1240 = vld [vmem:[#allocation2 + $0x28] sm:$0xff]
        %v1241 = vld [vmem:[#allocation2 + $0x30] sm:$0xff]
        %v1242 = vld [vmem:[#allocation2 + $0x38] sm:$0xff]
        %v1243 = vld [vmem:[#allocation2 + $0x40] sm:$0xff]
        %v1244 = vld [vmem:[#allocation2 + $0x48] sm:$0xff]
        %v1245 = vld [vmem:[#allocation2 + $0x50] sm:$0xff]
        %v1246 = vld [vmem:[#allocation2 + $0x58] sm:$0xff]
        %v1247 = vld [vmem:[#allocation2 + $0x60] sm:$0xff]
        %v1248 = vld [vmem:[#allocation2 + $0x68] sm:$0xff]
        %v1249 = vld [vmem:[#allocation2 + $0x70] sm:$0xff]
        %v1250 = vld [vmem:[#allocation2 + $0x78] sm:$0xff]
        %v1251 = vld [vmem:[#allocation2 + $0x80] sm:$0xff]
        %v1252 = vld [vmem:[#allocation2 + $0x88] sm:$0xff]
        %v1253 = vadd.f32 %v1235, %v1147
        %v1254 = vadd.f32 %v1236, %v1152
        %v1255 = vadd.f32 %v1237, %v1157
        %v1256 = vadd.f32 %v1238, %v1162
        %v1257 = vadd.f32 %v1239, %v1167
        %v1258 = vadd.f32 %v1240, %v1172
        %v1259 = vadd.f32 %v1241, %v1177
        %v1260 = vadd.f32 %v1242, %v1182
        %v1261 = vadd.f32 %v1243, %v1187
        %v1262 = vadd.f32 %v1244, %v1192
        %v1263 = vadd.f32 %v1245, %v1197
        %v1264 = vadd.f32 %v1246, %v1202
        %v1265 = vadd.f32 %v1247, %v1207
        %v1266 = vadd.f32 %v1248, %v1212
        %v1267 = vadd.f32 %v1249, %v1217
        %v1268 = vadd.f32 %v1250, %v1222
        %v1269 = vadd.f32 %v1251, %v1227
        %v1270 = vadd.f32 %v1252, %v1232
        %1271 = vst.msk [vmem:[#allocation2] sm:$0xff] %vm415, %v1253
        %1272 = vst.msk [vmem:[#allocation2 + $0x8] sm:$0xff] %vm415, %v1254
        %1273 = vst.msk [vmem:[#allocation2 + $0x10] sm:$0xff] %vm415, %v1255
        %1274 = vst.msk [vmem:[#allocation2 + $0x18] sm:$0xff] %vm415, %v1256
        %1275 = vst.msk [vmem:[#allocation2 + $0x20] sm:$0xff] %vm415, %v1257
        %1276 = vst.msk [vmem:[#allocation2 + $0x28] sm:$0xff] %vm415, %v1258
        %1277 = vst.msk [vmem:[#allocation2 + $0x30] sm:$0xff] %vm415, %v1259
        %1278 = vst.msk [vmem:[#allocation2 + $0x38] sm:$0xff] %vm415, %v1260
        %1279 = vst.msk [vmem:[#allocation2 + $0x40] sm:$0xff] %vm415, %v1261
        %1280 = vst.msk [vmem:[#allocation2 + $0x48] sm:$0xff] %vm415, %v1262
        %1281 = vst.msk [vmem:[#allocation2 + $0x50] sm:$0xff] %vm415, %v1263
        %1282 = vst.msk [vmem:[#allocation2 + $0x58] sm:$0xff] %vm415, %v1264
        %1283 = vst.msk [vmem:[#allocation2 + $0x60] sm:$0xff] %vm415, %v1265
        %1284 = vst.msk [vmem:[#allocation2 + $0x68] sm:$0xff] %vm415, %v1266
        %1285 = vst.msk [vmem:[#allocation2 + $0x70] sm:$0xff] %vm415, %v1267
        %1286 = vst.msk [vmem:[#allocation2 + $0x78] sm:$0xff] %vm415, %v1268
        %1287 = vst.msk [vmem:[#allocation2 + $0x80] sm:$0xff] %vm415, %v1269
        %1288 = vst.msk [vmem:[#allocation2 + $0x88] sm:$0xff] %vm415, %v1270
        %s1289 = sadd.s32 %s184, 19
        %s1290 = scalar_lea.vmem %s182, %s1289
        %v1291 = vld [vmem:[%s1290] sm:$0xff]
        %v1292 = vld [vmem:[%s1290 + $0x8] sm:$0xff]
        %v1293 = vld [vmem:[%s1290 + $0x10] sm:$0xff]
        %v1294 = vld [vmem:[%s1290 + $0x18] sm:$0xff]
        %v1295 = vld [vmem:[%s1290 + $0x20] sm:$0xff]
        %v1296 = vld [vmem:[%s1290 + $0x28] sm:$0xff]
        %v1297 = vld [vmem:[%s1290 + $0x30] sm:$0xff]
        %v1298 = vld [vmem:[%s1290 + $0x38] sm:$0xff]
        %v1299 = vld [vmem:[%s1290 + $0x40] sm:$0xff]
        %v1300 = vld [vmem:[%s1290 + $0x48] sm:$0xff]
        %v1301 = vld [vmem:[%s1290 + $0x50] sm:$0xff]
        %v1302 = vld [vmem:[%s1290 + $0x58] sm:$0xff]
        %v1303 = vld [vmem:[%s1290 + $0x60] sm:$0xff]
        %v1304 = vld [vmem:[%s1290 + $0x68] sm:$0xff]
        %v1305 = vld [vmem:[%s1290 + $0x70] sm:$0xff]
        %v1306 = vld [vmem:[%s1290 + $0x78] sm:$0xff]
        %v1307 = vld [vmem:[%s1290 + $0x80] sm:$0xff]
        %v1308 = vld [vmem:[%s1290 + $0x88] sm:$0xff]
        %s1309 = scalar_lea.vmem %s1, 32
        %v1310 = vld [vmem:[%s1309] sm:$0xff]
        %v1312 = vsel %vm205, %v1291, 0
        %v1315 = vsel %vm205, %v1292, 0
        %v1318 = vsel %vm205, %v1293, 0
        %v1321 = vsel %vm205, %v1294, 0
        %v1324 = vsel %vm205, %v1295, 0
        %v1327 = vsel %vm205, %v1296, 0
        %v1330 = vsel %vm205, %v1297, 0
        %v1333 = vsel %vm205, %v1298, 0
        %v1336 = vsel %vm205, %v1299, 0
        %v1339 = vsel %vm205, %v1300, 0
        %v1342 = vsel %vm205, %v1301, 0
        %v1345 = vsel %vm205, %v1302, 0
        %v1348 = vsel %vm205, %v1303, 0
        %v1351 = vsel %vm205, %v1304, 0
        %v1354 = vsel %vm205, %v1305, 0
        %v1357 = vsel %vm205, %v1306, 0
        %v1360 = vsel %vm205, %v1307, 0
        %v1363 = vsel %vm205, %v1308, 0
        %1365 = vmatprep.subr.mxu0 0.0
        %1366 = vmatpush1.msra.mxu0 0.0
        %1367 = vmatprep.subr.mxu0 0.0
        %1368 = vmatpush1.msra.mxu0 0.0
        %1369 = vmatprep.subr.mxu0 0.0
        %1370 = vmatpush1.msra.mxu0 0.0
        %1371 = vmatprep.subr.mxu0 0.0
        %1372 = vmatpush1.msra.mxu0 0.0
        %1373 = vmatprep.subr.mxu0 0.0
        %1374 = vmatpush1.msra.mxu0 0.0
        %1375 = vmatprep.subr.mxu0 0.0
        %1376 = vmatpush1.msra.mxu0 0.0
        %1377 = vmatprep.subr.mxu0 0.0
        %1378 = vmatpush1.msra.mxu0 0.0
        %1379 = vmatprep.subr.mxu0 0.0
        %1380 = vmatpush1.msra.mxu0 0.0
        %1381 = vmatprep.subr.mxu0 0.0
        %1382 = vmatpush1.msra.mxu0 0.0
        %1383 = vmatprep.subr.mxu0 0.0
        %1384 = vmatpush1.msra.mxu0 0.0
        %1385 = vmatprep.subr.mxu0 0.0
        %1386 = vmatpush1.msra.mxu0 0.0
        %1387 = vmatprep.subr.mxu0 0.0
        %1388 = vmatpush1.msra.mxu0 0.0
        %1389 = vmatprep.subr.mxu0 0.0
        %1390 = vmatpush1.msra.mxu0 0.0
        %1391 = vmatprep.subr.mxu0 0.0
        %1392 = vmatpush1.msra.mxu0 0.0
        %1393 = vmatprep.subr.mxu0 0.0
        %1394 = vmatpush1.msra.mxu0 0.0
        %1395 = vmatprep.subr.mxu0 0.0
        %1396 = vmatpush1.msra.mxu0 %v1310
        %1397 = vmatprep.subr.mxu0 0.0
        %1398 = vmatpush2.msra.mxu0 0.0
        %1399 = vmatprep.subr.mxu0 0.0
        %1400 = vmatpush2.msra.mxu0 0.0
        %1401 = vmatprep.subr.mxu0 0.0
        %1402 = vmatpush2.msra.mxu0 0.0
        %1403 = vmatprep.subr.mxu0 0.0
        %1404 = vmatpush2.msra.mxu0 0.0
        %1405 = vmatprep.subr.mxu0 0.0
        %1406 = vmatpush2.msra.mxu0 0.0
        %1407 = vmatprep.subr.mxu0 0.0
        %1408 = vmatpush2.msra.mxu0 0.0
        %1409 = vmatprep.subr.mxu0 0.0
        %1410 = vmatpush2.msra.mxu0 0.0
        %1411 = vmatprep.subr.mxu0 0.0
        %1412 = vmatpush2.msra.mxu0 0.0
        %1413 = vmatprep.subr.mxu0 0.0
        %1414 = vmatpush2.msra.mxu0 0.0
        %1415 = vmatprep.subr.mxu0 0.0
        %1416 = vmatpush2.msra.mxu0 0.0
        %1417 = vmatprep.subr.mxu0 0.0
        %1418 = vmatpush2.msra.mxu0 0.0
        %1419 = vmatprep.subr.mxu0 0.0
        %1420 = vmatpush2.msra.mxu0 0.0
        %1421 = vmatprep.subr.mxu0 0.0
        %1422 = vmatpush2.msra.mxu0 0.0
        %1423 = vmatprep.subr.mxu0 0.0
        %1424 = vmatpush2.msra.mxu0 0.0
        %1425 = vmatprep.subr.mxu0 0.0
        %1426 = vmatpush2.msra.mxu0 0.0
        %1427 = vmatprep.subr.mxu0 0.0
        %1428 = vmatpush2.msra.mxu0 0.0
        %1429 = vmatprep.mubr.f32.mxu0 0.0
        %1430 = vmatmul.mubr.f32.gmra.mxu0 %v1312
        %v1431 = vpop.f32.mrf.mxu0
        %v1432 = vadd.f32 0.0, %v1431
        %v1433 = vpop.f32.mrf.mxu0
        %1434 = vmatprep.mubr.f32.mxu0 0.0
        %1435 = vmatmul.mubr.f32.gmra.mxu0 %v1315
        %v1436 = vpop.f32.mrf.mxu0
        %v1437 = vadd.f32 0.0, %v1436
        %v1438 = vpop.f32.mrf.mxu0
        %1439 = vmatprep.mubr.f32.mxu0 0.0
        %1440 = vmatmul.mubr.f32.gmra.mxu0 %v1318
        %v1441 = vpop.f32.mrf.mxu0
        %v1442 = vadd.f32 0.0, %v1441
        %v1443 = vpop.f32.mrf.mxu0
        %1444 = vmatprep.mubr.f32.mxu0 0.0
        %1445 = vmatmul.mubr.f32.gmra.mxu0 %v1321
        %v1446 = vpop.f32.mrf.mxu0
        %v1447 = vadd.f32 0.0, %v1446
        %v1448 = vpop.f32.mrf.mxu0
        %1449 = vmatprep.mubr.f32.mxu0 0.0
        %1450 = vmatmul.mubr.f32.gmra.mxu0 %v1324
        %v1451 = vpop.f32.mrf.mxu0
        %v1452 = vadd.f32 0.0, %v1451
        %v1453 = vpop.f32.mrf.mxu0
        %1454 = vmatprep.mubr.f32.mxu0 0.0
        %1455 = vmatmul.mubr.f32.gmra.mxu0 %v1327
        %v1456 = vpop.f32.mrf.mxu0
        %v1457 = vadd.f32 0.0, %v1456
        %v1458 = vpop.f32.mrf.mxu0
        %1459 = vmatprep.mubr.f32.mxu0 0.0
        %1460 = vmatmul.mubr.f32.gmra.mxu0 %v1330
        %v1461 = vpop.f32.mrf.mxu0
        %v1462 = vadd.f32 0.0, %v1461
        %v1463 = vpop.f32.mrf.mxu0
        %1464 = vmatprep.mubr.f32.mxu0 0.0
        %1465 = vmatmul.mubr.f32.gmra.mxu0 %v1333
        %v1466 = vpop.f32.mrf.mxu0
        %v1467 = vadd.f32 0.0, %v1466
        %v1468 = vpop.f32.mrf.mxu0
        %1469 = vmatprep.mubr.f32.mxu0 0.0
        %1470 = vmatmul.mubr.f32.gmra.mxu0 %v1336
        %v1471 = vpop.f32.mrf.mxu0
        %v1472 = vadd.f32 0.0, %v1471
        %v1473 = vpop.f32.mrf.mxu0
        %1474 = vmatprep.mubr.f32.mxu0 0.0
        %1475 = vmatmul.mubr.f32.gmra.mxu0 %v1339
        %v1476 = vpop.f32.mrf.mxu0
        %v1477 = vadd.f32 0.0, %v1476
        %v1478 = vpop.f32.mrf.mxu0
        %1479 = vmatprep.mubr.f32.mxu0 0.0
        %1480 = vmatmul.mubr.f32.gmra.mxu0 %v1342
        %v1481 = vpop.f32.mrf.mxu0
        %v1482 = vadd.f32 0.0, %v1481
        %v1483 = vpop.f32.mrf.mxu0
        %1484 = vmatprep.mubr.f32.mxu0 0.0
        %1485 = vmatmul.mubr.f32.gmra.mxu0 %v1345
        %v1486 = vpop.f32.mrf.mxu0
        %v1487 = vadd.f32 0.0, %v1486
        %v1488 = vpop.f32.mrf.mxu0
        %1489 = vmatprep.mubr.f32.mxu0 0.0
        %1490 = vmatmul.mubr.f32.gmra.mxu0 %v1348
        %v1491 = vpop.f32.mrf.mxu0
        %v1492 = vadd.f32 0.0, %v1491
        %v1493 = vpop.f32.mrf.mxu0
        %1494 = vmatprep.mubr.f32.mxu0 0.0
        %1495 = vmatmul.mubr.f32.gmra.mxu0 %v1351
        %v1496 = vpop.f32.mrf.mxu0
        %v1497 = vadd.f32 0.0, %v1496
        %v1498 = vpop.f32.mrf.mxu0
        %1499 = vmatprep.mubr.f32.mxu0 0.0
        %1500 = vmatmul.mubr.f32.gmra.mxu0 %v1354
        %v1501 = vpop.f32.mrf.mxu0
        %v1502 = vadd.f32 0.0, %v1501
        %v1503 = vpop.f32.mrf.mxu0
        %1504 = vmatprep.mubr.f32.mxu0 0.0
        %1505 = vmatmul.mubr.f32.gmra.mxu0 %v1357
        %v1506 = vpop.f32.mrf.mxu0
        %v1507 = vadd.f32 0.0, %v1506
        %v1508 = vpop.f32.mrf.mxu0
        %1509 = vmatprep.mubr.f32.mxu0 0.0
        %1510 = vmatmul.mubr.f32.gmra.mxu0 %v1360
        %v1511 = vpop.f32.mrf.mxu0
        %v1512 = vadd.f32 0.0, %v1511
        %v1513 = vpop.f32.mrf.mxu0
        %1514 = vmatprep.mubr.f32.mxu0 0.0
        %1515 = vmatmul.mubr.f32.gmra.mxu0 %v1363
        %v1516 = vpop.f32.mrf.mxu0
        %v1517 = vadd.f32 0.0, %v1516
        %v1518 = vpop.f32.mrf.mxu0
        %1519 = vdwg.mxu0
        %v1520 = vld [vmem:[#allocation2] sm:$0xff]
        %v1521 = vld [vmem:[#allocation2 + $0x8] sm:$0xff]
        %v1522 = vld [vmem:[#allocation2 + $0x10] sm:$0xff]
        %v1523 = vld [vmem:[#allocation2 + $0x18] sm:$0xff]
        %v1524 = vld [vmem:[#allocation2 + $0x20] sm:$0xff]
        %v1525 = vld [vmem:[#allocation2 + $0x28] sm:$0xff]
        %v1526 = vld [vmem:[#allocation2 + $0x30] sm:$0xff]
        %v1527 = vld [vmem:[#allocation2 + $0x38] sm:$0xff]
        %v1528 = vld [vmem:[#allocation2 + $0x40] sm:$0xff]
        %v1529 = vld [vmem:[#allocation2 + $0x48] sm:$0xff]
        %v1530 = vld [vmem:[#allocation2 + $0x50] sm:$0xff]
        %v1531 = vld [vmem:[#allocation2 + $0x58] sm:$0xff]
        %v1532 = vld [vmem:[#allocation2 + $0x60] sm:$0xff]
        %v1533 = vld [vmem:[#allocation2 + $0x68] sm:$0xff]
        %v1534 = vld [vmem:[#allocation2 + $0x70] sm:$0xff]
        %v1535 = vld [vmem:[#allocation2 + $0x78] sm:$0xff]
        %v1536 = vld [vmem:[#allocation2 + $0x80] sm:$0xff]
        %v1537 = vld [vmem:[#allocation2 + $0x88] sm:$0xff]
        %v1538 = vadd.f32 %v1520, %v1432
        %v1539 = vadd.f32 %v1521, %v1437
        %v1540 = vadd.f32 %v1522, %v1442
        %v1541 = vadd.f32 %v1523, %v1447
        %v1542 = vadd.f32 %v1524, %v1452
        %v1543 = vadd.f32 %v1525, %v1457
        %v1544 = vadd.f32 %v1526, %v1462
        %v1545 = vadd.f32 %v1527, %v1467
        %v1546 = vadd.f32 %v1528, %v1472
        %v1547 = vadd.f32 %v1529, %v1477
        %v1548 = vadd.f32 %v1530, %v1482
        %v1549 = vadd.f32 %v1531, %v1487
        %v1550 = vadd.f32 %v1532, %v1492
        %v1551 = vadd.f32 %v1533, %v1497
        %v1552 = vadd.f32 %v1534, %v1502
        %v1553 = vadd.f32 %v1535, %v1507
        %v1554 = vadd.f32 %v1536, %v1512
        %v1555 = vadd.f32 %v1537, %v1517
        %1556 = vst.msk [vmem:[#allocation2] sm:$0xff] %vm415, %v1538
        %1557 = vst.msk [vmem:[#allocation2 + $0x8] sm:$0xff] %vm415, %v1539
        %1558 = vst.msk [vmem:[#allocation2 + $0x10] sm:$0xff] %vm415, %v1540
        %1559 = vst.msk [vmem:[#allocation2 + $0x18] sm:$0xff] %vm415, %v1541
        %1560 = vst.msk [vmem:[#allocation2 + $0x20] sm:$0xff] %vm415, %v1542
        %1561 = vst.msk [vmem:[#allocation2 + $0x28] sm:$0xff] %vm415, %v1543
        %1562 = vst.msk [vmem:[#allocation2 + $0x30] sm:$0xff] %vm415, %v1544
        %1563 = vst.msk [vmem:[#allocation2 + $0x38] sm:$0xff] %vm415, %v1545
        %1564 = vst.msk [vmem:[#allocation2 + $0x40] sm:$0xff] %vm415, %v1546
        %1565 = vst.msk [vmem:[#allocation2 + $0x48] sm:$0xff] %vm415, %v1547
        %1566 = vst.msk [vmem:[#allocation2 + $0x50] sm:$0xff] %vm415, %v1548
        %1567 = vst.msk [vmem:[#allocation2 + $0x58] sm:$0xff] %vm415, %v1549
        %1568 = vst.msk [vmem:[#allocation2 + $0x60] sm:$0xff] %vm415, %v1550
        %1569 = vst.msk [vmem:[#allocation2 + $0x68] sm:$0xff] %vm415, %v1551
        %1570 = vst.msk [vmem:[#allocation2 + $0x70] sm:$0xff] %vm415, %v1552
        %1571 = vst.msk [vmem:[#allocation2 + $0x78] sm:$0xff] %vm415, %v1553
        %1572 = vst.msk [vmem:[#allocation2 + $0x80] sm:$0xff] %vm415, %v1554
        %1573 = vst.msk [vmem:[#allocation2 + $0x88] sm:$0xff] %vm415, %v1555
        %s1574 = sadd.s32 %s184, 20
        %s1575 = scalar_lea.vmem %s182, %s1574
        %v1576 = vld [vmem:[%s1575] sm:$0xff]
        %v1577 = vld [vmem:[%s1575 + $0x8] sm:$0xff]
        %v1578 = vld [vmem:[%s1575 + $0x10] sm:$0xff]
        %v1579 = vld [vmem:[%s1575 + $0x18] sm:$0xff]
        %v1580 = vld [vmem:[%s1575 + $0x20] sm:$0xff]
        %v1581 = vld [vmem:[%s1575 + $0x28] sm:$0xff]
        %v1582 = vld [vmem:[%s1575 + $0x30] sm:$0xff]
        %v1583 = vld [vmem:[%s1575 + $0x38] sm:$0xff]
        %v1584 = vld [vmem:[%s1575 + $0x40] sm:$0xff]
        %v1585 = vld [vmem:[%s1575 + $0x48] sm:$0xff]
        %v1586 = vld [vmem:[%s1575 + $0x50] sm:$0xff]
        %v1587 = vld [vmem:[%s1575 + $0x58] sm:$0xff]
        %v1588 = vld [vmem:[%s1575 + $0x60] sm:$0xff]
        %v1589 = vld [vmem:[%s1575 + $0x68] sm:$0xff]
        %v1590 = vld [vmem:[%s1575 + $0x70] sm:$0xff]
        %v1591 = vld [vmem:[%s1575 + $0x78] sm:$0xff]
        %v1592 = vld [vmem:[%s1575 + $0x80] sm:$0xff]
        %v1593 = vld [vmem:[%s1575 + $0x88] sm:$0xff]
        %s1594 = scalar_lea.vmem %s1, 40
        %v1595 = vld [vmem:[%s1594] sm:$0xff]
        %v1597 = vsel %vm205, %v1576, 0
        %v1600 = vsel %vm205, %v1577, 0
        %v1603 = vsel %vm205, %v1578, 0
        %v1606 = vsel %vm205, %v1579, 0
        %v1609 = vsel %vm205, %v1580, 0
        %v1612 = vsel %vm205, %v1581, 0
        %v1615 = vsel %vm205, %v1582, 0
        %v1618 = vsel %vm205, %v1583, 0
        %v1621 = vsel %vm205, %v1584, 0
        %v1624 = vsel %vm205, %v1585, 0
        %v1627 = vsel %vm205, %v1586, 0
        %v1630 = vsel %vm205, %v1587, 0
        %v1633 = vsel %vm205, %v1588, 0
        %v1636 = vsel %vm205, %v1589, 0
        %v1639 = vsel %vm205, %v1590, 0
        %v1642 = vsel %vm205, %v1591, 0
        %v1645 = vsel %vm205, %v1592, 0
        %v1648 = vsel %vm205, %v1593, 0
        %1650 = vmatprep.subr.mxu0 0.0
        %1651 = vmatpush1.msra.mxu0 0.0
        %1652 = vmatprep.subr.mxu0 0.0
        %1653 = vmatpush1.msra.mxu0 0.0
        %1654 = vmatprep.subr.mxu0 0.0
        %1655 = vmatpush1.msra.mxu0 0.0
        %1656 = vmatprep.subr.mxu0 0.0
        %1657 = vmatpush1.msra.mxu0 0.0
        %1658 = vmatprep.subr.mxu0 0.0
        %1659 = vmatpush1.msra.mxu0 0.0
        %1660 = vmatprep.subr.mxu0 0.0
        %1661 = vmatpush1.msra.mxu0 0.0
        %1662 = vmatprep.subr.mxu0 0.0
        %1663 = vmatpush1.msra.mxu0 0.0
        %1664 = vmatprep.subr.mxu0 0.0
        %1665 = vmatpush1.msra.mxu0 0.0
        %1666 = vmatprep.subr.mxu0 0.0
        %1667 = vmatpush1.msra.mxu0 0.0
        %1668 = vmatprep.subr.mxu0 0.0
        %1669 = vmatpush1.msra.mxu0 0.0
        %1670 = vmatprep.subr.mxu0 0.0
        %1671 = vmatpush1.msra.mxu0 0.0
        %1672 = vmatprep.subr.mxu0 0.0
        %1673 = vmatpush1.msra.mxu0 0.0
        %1674 = vmatprep.subr.mxu0 0.0
        %1675 = vmatpush1.msra.mxu0 0.0
        %1676 = vmatprep.subr.mxu0 0.0
        %1677 = vmatpush1.msra.mxu0 0.0
        %1678 = vmatprep.subr.mxu0 0.0
        %1679 = vmatpush1.msra.mxu0 0.0
        %1680 = vmatprep.subr.mxu0 0.0
        %1681 = vmatpush1.msra.mxu0 %v1595
        %1682 = vmatprep.subr.mxu0 0.0
        %1683 = vmatpush2.msra.mxu0 0.0
        %1684 = vmatprep.subr.mxu0 0.0
        %1685 = vmatpush2.msra.mxu0 0.0
        %1686 = vmatprep.subr.mxu0 0.0
        %1687 = vmatpush2.msra.mxu0 0.0
        %1688 = vmatprep.subr.mxu0 0.0
        %1689 = vmatpush2.msra.mxu0 0.0
        %1690 = vmatprep.subr.mxu0 0.0
        %1691 = vmatpush2.msra.mxu0 0.0
        %1692 = vmatprep.subr.mxu0 0.0
        %1693 = vmatpush2.msra.mxu0 0.0
        %1694 = vmatprep.subr.mxu0 0.0
        %1695 = vmatpush2.msra.mxu0 0.0
        %1696 = vmatprep.subr.mxu0 0.0
        %1697 = vmatpush2.msra.mxu0 0.0
        %1698 = vmatprep.subr.mxu0 0.0
        %1699 = vmatpush2.msra.mxu0 0.0
        %1700 = vmatprep.subr.mxu0 0.0
        %1701 = vmatpush2.msra.mxu0 0.0
        %1702 = vmatprep.subr.mxu0 0.0
        %1703 = vmatpush2.msra.mxu0 0.0
        %1704 = vmatprep.subr.mxu0 0.0
        %1705 = vmatpush2.msra.mxu0 0.0
        %1706 = vmatprep.subr.mxu0 0.0
        %1707 = vmatpush2.msra.mxu0 0.0
        %1708 = vmatprep.subr.mxu0 0.0
        %1709 = vmatpush2.msra.mxu0 0.0
        %1710 = vmatprep.subr.mxu0 0.0
        %1711 = vmatpush2.msra.mxu0 0.0
        %1712 = vmatprep.subr.mxu0 0.0
        %1713 = vmatpush2.msra.mxu0 0.0
        %1714 = vmatprep.mubr.f32.mxu0 0.0
        %1715 = vmatmul.mubr.f32.gmra.mxu0 %v1597
        %v1716 = vpop.f32.mrf.mxu0
        %v1717 = vadd.f32 0.0, %v1716
        %v1718 = vpop.f32.mrf.mxu0
        %1719 = vmatprep.mubr.f32.mxu0 0.0
        %1720 = vmatmul.mubr.f32.gmra.mxu0 %v1600
        %v1721 = vpop.f32.mrf.mxu0
        %v1722 = vadd.f32 0.0, %v1721
        %v1723 = vpop.f32.mrf.mxu0
        %1724 = vmatprep.mubr.f32.mxu0 0.0
        %1725 = vmatmul.mubr.f32.gmra.mxu0 %v1603
        %v1726 = vpop.f32.mrf.mxu0
        %v1727 = vadd.f32 0.0, %v1726
        %v1728 = vpop.f32.mrf.mxu0
        %1729 = vmatprep.mubr.f32.mxu0 0.0
        %1730 = vmatmul.mubr.f32.gmra.mxu0 %v1606
        %v1731 = vpop.f32.mrf.mxu0
        %v1732 = vadd.f32 0.0, %v1731
        %v1733 = vpop.f32.mrf.mxu0
        %1734 = vmatprep.mubr.f32.mxu0 0.0
        %1735 = vmatmul.mubr.f32.gmra.mxu0 %v1609
        %v1736 = vpop.f32.mrf.mxu0
        %v1737 = vadd.f32 0.0, %v1736
        %v1738 = vpop.f32.mrf.mxu0
        %1739 = vmatprep.mubr.f32.mxu0 0.0
        %1740 = vmatmul.mubr.f32.gmra.mxu0 %v1612
        %v1741 = vpop.f32.mrf.mxu0
        %v1742 = vadd.f32 0.0, %v1741
        %v1743 = vpop.f32.mrf.mxu0
        %1744 = vmatprep.mubr.f32.mxu0 0.0
        %1745 = vmatmul.mubr.f32.gmra.mxu0 %v1615
        %v1746 = vpop.f32.mrf.mxu0
        %v1747 = vadd.f32 0.0, %v1746
        %v1748 = vpop.f32.mrf.mxu0
        %1749 = vmatprep.mubr.f32.mxu0 0.0
        %1750 = vmatmul.mubr.f32.gmra.mxu0 %v1618
        %v1751 = vpop.f32.mrf.mxu0
        %v1752 = vadd.f32 0.0, %v1751
        %v1753 = vpop.f32.mrf.mxu0
        %1754 = vmatprep.mubr.f32.mxu0 0.0
        %1755 = vmatmul.mubr.f32.gmra.mxu0 %v1621
        %v1756 = vpop.f32.mrf.mxu0
        %v1757 = vadd.f32 0.0, %v1756
        %v1758 = vpop.f32.mrf.mxu0
        %1759 = vmatprep.mubr.f32.mxu0 0.0
        %1760 = vmatmul.mubr.f32.gmra.mxu0 %v1624
        %v1761 = vpop.f32.mrf.mxu0
        %v1762 = vadd.f32 0.0, %v1761
        %v1763 = vpop.f32.mrf.mxu0
        %1764 = vmatprep.mubr.f32.mxu0 0.0
        %1765 = vmatmul.mubr.f32.gmra.mxu0 %v1627
        %v1766 = vpop.f32.mrf.mxu0
        %v1767 = vadd.f32 0.0, %v1766
        %v1768 = vpop.f32.mrf.mxu0
        %1769 = vmatprep.mubr.f32.mxu0 0.0
        %1770 = vmatmul.mubr.f32.gmra.mxu0 %v1630
        %v1771 = vpop.f32.mrf.mxu0
        %v1772 = vadd.f32 0.0, %v1771
        %v1773 = vpop.f32.mrf.mxu0
        %1774 = vmatprep.mubr.f32.mxu0 0.0
        %1775 = vmatmul.mubr.f32.gmra.mxu0 %v1633
        %v1776 = vpop.f32.mrf.mxu0
        %v1777 = vadd.f32 0.0, %v1776
        %v1778 = vpop.f32.mrf.mxu0
        %1779 = vmatprep.mubr.f32.mxu0 0.0
        %1780 = vmatmul.mubr.f32.gmra.mxu0 %v1636
        %v1781 = vpop.f32.mrf.mxu0
        %v1782 = vadd.f32 0.0, %v1781
        %v1783 = vpop.f32.mrf.mxu0
        %1784 = vmatprep.mubr.f32.mxu0 0.0
        %1785 = vmatmul.mubr.f32.gmra.mxu0 %v1639
        %v1786 = vpop.f32.mrf.mxu0
        %v1787 = vadd.f32 0.0, %v1786
        %v1788 = vpop.f32.mrf.mxu0
        %1789 = vmatprep.mubr.f32.mxu0 0.0
        %1790 = vmatmul.mubr.f32.gmra.mxu0 %v1642
        %v1791 = vpop.f32.mrf.mxu0
        %v1792 = vadd.f32 0.0, %v1791
        %v1793 = vpop.f32.mrf.mxu0
        %1794 = vmatprep.mubr.f32.mxu0 0.0
        %1795 = vmatmul.mubr.f32.gmra.mxu0 %v1645
        %v1796 = vpop.f32.mrf.mxu0
        %v1797 = vadd.f32 0.0, %v1796
        %v1798 = vpop.f32.mrf.mxu0
        %1799 = vmatprep.mubr.f32.mxu0 0.0
        %1800 = vmatmul.mubr.f32.gmra.mxu0 %v1648
        %v1801 = vpop.f32.mrf.mxu0
        %v1802 = vadd.f32 0.0, %v1801
        %v1803 = vpop.f32.mrf.mxu0
        %1804 = vdwg.mxu0
        %v1805 = vld [vmem:[#allocation2] sm:$0xff]
        %v1806 = vld [vmem:[#allocation2 + $0x8] sm:$0xff]
        %v1807 = vld [vmem:[#allocation2 + $0x10] sm:$0xff]
        %v1808 = vld [vmem:[#allocation2 + $0x18] sm:$0xff]
        %v1809 = vld [vmem:[#allocation2 + $0x20] sm:$0xff]
        %v1810 = vld [vmem:[#allocation2 + $0x28] sm:$0xff]
        %v1811 = vld [vmem:[#allocation2 + $0x30] sm:$0xff]
        %v1812 = vld [vmem:[#allocation2 + $0x38] sm:$0xff]
        %v1813 = vld [vmem:[#allocation2 + $0x40] sm:$0xff]
        %v1814 = vld [vmem:[#allocation2 + $0x48] sm:$0xff]
        %v1815 = vld [vmem:[#allocation2 + $0x50] sm:$0xff]
        %v1816 = vld [vmem:[#allocation2 + $0x58] sm:$0xff]
        %v1817 = vld [vmem:[#allocation2 + $0x60] sm:$0xff]
        %v1818 = vld [vmem:[#allocation2 + $0x68] sm:$0xff]
        %v1819 = vld [vmem:[#allocation2 + $0x70] sm:$0xff]
        %v1820 = vld [vmem:[#allocation2 + $0x78] sm:$0xff]
        %v1821 = vld [vmem:[#allocation2 + $0x80] sm:$0xff]
        %v1822 = vld [vmem:[#allocation2 + $0x88] sm:$0xff]
        %v1823 = vadd.f32 %v1805, %v1717
        %v1824 = vadd.f32 %v1806, %v1722
        %v1825 = vadd.f32 %v1807, %v1727
        %v1826 = vadd.f32 %v1808, %v1732
        %v1827 = vadd.f32 %v1809, %v1737
        %v1828 = vadd.f32 %v1810, %v1742
        %v1829 = vadd.f32 %v1811, %v1747
        %v1830 = vadd.f32 %v1812, %v1752
        %v1831 = vadd.f32 %v1813, %v1757
        %v1832 = vadd.f32 %v1814, %v1762
        %v1833 = vadd.f32 %v1815, %v1767
        %v1834 = vadd.f32 %v1816, %v1772
        %v1835 = vadd.f32 %v1817, %v1777
        %v1836 = vadd.f32 %v1818, %v1782
        %v1837 = vadd.f32 %v1819, %v1787
        %v1838 = vadd.f32 %v1820, %v1792
        %v1839 = vadd.f32 %v1821, %v1797
        %v1840 = vadd.f32 %v1822, %v1802
        %1841 = vst.msk [vmem:[#allocation2] sm:$0xff] %vm415, %v1823
        %1842 = vst.msk [vmem:[#allocation2 + $0x8] sm:$0xff] %vm415, %v1824
        %1843 = vst.msk [vmem:[#allocation2 + $0x10] sm:$0xff] %vm415, %v1825
        %1844 = vst.msk [vmem:[#allocation2 + $0x18] sm:$0xff] %vm415, %v1826
        %1845 = vst.msk [vmem:[#allocation2 + $0x20] sm:$0xff] %vm415, %v1827
        %1846 = vst.msk [vmem:[#allocation2 + $0x28] sm:$0xff] %vm415, %v1828
        %1847 = vst.msk [vmem:[#allocation2 + $0x30] sm:$0xff] %vm415, %v1829
        %1848 = vst.msk [vmem:[#allocation2 + $0x38] sm:$0xff] %vm415, %v1830
        %1849 = vst.msk [vmem:[#allocation2 + $0x40] sm:$0xff] %vm415, %v1831
        %1850 = vst.msk [vmem:[#allocation2 + $0x48] sm:$0xff] %vm415, %v1832
        %1851 = vst.msk [vmem:[#allocation2 + $0x50] sm:$0xff] %vm415, %v1833
        %1852 = vst.msk [vmem:[#allocation2 + $0x58] sm:$0xff] %vm415, %v1834
        %1853 = vst.msk [vmem:[#allocation2 + $0x60] sm:$0xff] %vm415, %v1835
        %1854 = vst.msk [vmem:[#allocation2 + $0x68] sm:$0xff] %vm415, %v1836
        %1855 = vst.msk [vmem:[#allocation2 + $0x70] sm:$0xff] %vm415, %v1837
        %1856 = vst.msk [vmem:[#allocation2 + $0x78] sm:$0xff] %vm415, %v1838
        %1857 = vst.msk [vmem:[#allocation2 + $0x80] sm:$0xff] %vm415, %v1839
        %1858 = vst.msk [vmem:[#allocation2 + $0x88] sm:$0xff] %vm415, %v1840
        %s1859 = sadd.s32 %s184, 36
        %s1860 = scalar_lea.vmem %s182, %s1859
        %v1861 = vld [vmem:[%s1860] sm:$0xff]
        %v1862 = vld [vmem:[%s1860 + $0x8] sm:$0xff]
        %v1863 = vld [vmem:[%s1860 + $0x10] sm:$0xff]
        %v1864 = vld [vmem:[%s1860 + $0x18] sm:$0xff]
        %v1865 = vld [vmem:[%s1860 + $0x20] sm:$0xff]
        %v1866 = vld [vmem:[%s1860 + $0x28] sm:$0xff]
        %v1867 = vld [vmem:[%s1860 + $0x30] sm:$0xff]
        %v1868 = vld [vmem:[%s1860 + $0x38] sm:$0xff]
        %v1869 = vld [vmem:[%s1860 + $0x40] sm:$0xff]
        %v1870 = vld [vmem:[%s1860 + $0x48] sm:$0xff]
        %v1871 = vld [vmem:[%s1860 + $0x50] sm:$0xff]
        %v1872 = vld [vmem:[%s1860 + $0x58] sm:$0xff]
        %v1873 = vld [vmem:[%s1860 + $0x60] sm:$0xff]
        %v1874 = vld [vmem:[%s1860 + $0x68] sm:$0xff]
        %v1875 = vld [vmem:[%s1860 + $0x70] sm:$0xff]
        %v1876 = vld [vmem:[%s1860 + $0x78] sm:$0xff]
        %v1877 = vld [vmem:[%s1860 + $0x80] sm:$0xff]
        %v1878 = vld [vmem:[%s1860 + $0x88] sm:$0xff]
        %s1879 = scalar_lea.vmem %s1, 48
        %v1880 = vld [vmem:[%s1879] sm:$0xff]
        %v1882 = vsel %vm205, %v1861, 0
        %v1885 = vsel %vm205, %v1862, 0
        %v1888 = vsel %vm205, %v1863, 0
        %v1891 = vsel %vm205, %v1864, 0
        %v1894 = vsel %vm205, %v1865, 0
        %v1897 = vsel %vm205, %v1866, 0
        %v1900 = vsel %vm205, %v1867, 0
        %v1903 = vsel %vm205, %v1868, 0
        %v1906 = vsel %vm205, %v1869, 0
        %v1909 = vsel %vm205, %v1870, 0
        %v1912 = vsel %vm205, %v1871, 0
        %v1915 = vsel %vm205, %v1872, 0
        %v1918 = vsel %vm205, %v1873, 0
        %v1921 = vsel %vm205, %v1874, 0
        %v1924 = vsel %vm205, %v1875, 0
        %v1927 = vsel %vm205, %v1876, 0
        %v1930 = vsel %vm205, %v1877, 0
        %v1933 = vsel %vm205, %v1878, 0
        %1935 = vmatprep.subr.mxu0 0.0
        %1936 = vmatpush1.msra.mxu0 0.0
        %1937 = vmatprep.subr.mxu0 0.0
        %1938 = vmatpush1.msra.mxu0 0.0
        %1939 = vmatprep.subr.mxu0 0.0
        %1940 = vmatpush1.msra.mxu0 0.0
        %1941 = vmatprep.subr.mxu0 0.0
        %1942 = vmatpush1.msra.mxu0 0.0
        %1943 = vmatprep.subr.mxu0 0.0
        %1944 = vmatpush1.msra.mxu0 0.0
        %1945 = vmatprep.subr.mxu0 0.0
        %1946 = vmatpush1.msra.mxu0 0.0
        %1947 = vmatprep.subr.mxu0 0.0
        %1948 = vmatpush1.msra.mxu0 0.0
        %1949 = vmatprep.subr.mxu0 0.0
        %1950 = vmatpush1.msra.mxu0 0.0
        %1951 = vmatprep.subr.mxu0 0.0
        %1952 = vmatpush1.msra.mxu0 0.0
        %1953 = vmatprep.subr.mxu0 0.0
        %1954 = vmatpush1.msra.mxu0 0.0
        %1955 = vmatprep.subr.mxu0 0.0
        %1956 = vmatpush1.msra.mxu0 0.0
        %1957 = vmatprep.subr.mxu0 0.0
        %1958 = vmatpush1.msra.mxu0 0.0
        %1959 = vmatprep.subr.mxu0 0.0
        %1960 = vmatpush1.msra.mxu0 0.0
        %1961 = vmatprep.subr.mxu0 0.0
        %1962 = vmatpush1.msra.mxu0 0.0
        %1963 = vmatprep.subr.mxu0 0.0
        %1964 = vmatpush1.msra.mxu0 0.0
        %1965 = vmatprep.subr.mxu0 0.0
        %1966 = vmatpush1.msra.mxu0 %v1880
        %1967 = vmatprep.subr.mxu0 0.0
        %1968 = vmatpush2.msra.mxu0 0.0
        %1969 = vmatprep.subr.mxu0 0.0
        %1970 = vmatpush2.msra.mxu0 0.0
        %1971 = vmatprep.subr.mxu0 0.0
        %1972 = vmatpush2.msra.mxu0 0.0
        %1973 = vmatprep.subr.mxu0 0.0
        %1974 = vmatpush2.msra.mxu0 0.0
        %1975 = vmatprep.subr.mxu0 0.0
        %1976 = vmatpush2.msra.mxu0 0.0
        %1977 = vmatprep.subr.mxu0 0.0
        %1978 = vmatpush2.msra.mxu0 0.0
        %1979 = vmatprep.subr.mxu0 0.0
        %1980 = vmatpush2.msra.mxu0 0.0
        %1981 = vmatprep.subr.mxu0 0.0
        %1982 = vmatpush2.msra.mxu0 0.0
        %1983 = vmatprep.subr.mxu0 0.0
        %1984 = vmatpush2.msra.mxu0 0.0
        %1985 = vmatprep.subr.mxu0 0.0
        %1986 = vmatpush2.msra.mxu0 0.0
        %1987 = vmatprep.subr.mxu0 0.0
        %1988 = vmatpush2.msra.mxu0 0.0
        %1989 = vmatprep.subr.mxu0 0.0
        %1990 = vmatpush2.msra.mxu0 0.0
        %1991 = vmatprep.subr.mxu0 0.0
        %1992 = vmatpush2.msra.mxu0 0.0
        %1993 = vmatprep.subr.mxu0 0.0
        %1994 = vmatpush2.msra.mxu0 0.0
        %1995 = vmatprep.subr.mxu0 0.0
        %1996 = vmatpush2.msra.mxu0 0.0
        %1997 = vmatprep.subr.mxu0 0.0
        %1998 = vmatpush2.msra.mxu0 0.0
        %1999 = vmatprep.mubr.f32.mxu0 0.0
        %2000 = vmatmul.mubr.f32.gmra.mxu0 %v1882
        %v2001 = vpop.f32.mrf.mxu0
        %v2002 = vadd.f32 0.0, %v2001
        %v2003 = vpop.f32.mrf.mxu0
        %2004 = vmatprep.mubr.f32.mxu0 0.0
        %2005 = vmatmul.mubr.f32.gmra.mxu0 %v1885
        %v2006 = vpop.f32.mrf.mxu0
        %v2007 = vadd.f32 0.0, %v2006
        %v2008 = vpop.f32.mrf.mxu0
        %2009 = vmatprep.mubr.f32.mxu0 0.0
        %2010 = vmatmul.mubr.f32.gmra.mxu0 %v1888
        %v2011 = vpop.f32.mrf.mxu0
        %v2012 = vadd.f32 0.0, %v2011
        %v2013 = vpop.f32.mrf.mxu0
        %2014 = vmatprep.mubr.f32.mxu0 0.0
        %2015 = vmatmul.mubr.f32.gmra.mxu0 %v1891
        %v2016 = vpop.f32.mrf.mxu0
        %v2017 = vadd.f32 0.0, %v2016
        %v2018 = vpop.f32.mrf.mxu0
        %2019 = vmatprep.mubr.f32.mxu0 0.0
        %2020 = vmatmul.mubr.f32.gmra.mxu0 %v1894
        %v2021 = vpop.f32.mrf.mxu0
        %v2022 = vadd.f32 0.0, %v2021
        %v2023 = vpop.f32.mrf.mxu0
        %2024 = vmatprep.mubr.f32.mxu0 0.0
        %2025 = vmatmul.mubr.f32.gmra.mxu0 %v1897
        %v2026 = vpop.f32.mrf.mxu0
        %v2027 = vadd.f32 0.0, %v2026
        %v2028 = vpop.f32.mrf.mxu0
        %2029 = vmatprep.mubr.f32.mxu0 0.0
        %2030 = vmatmul.mubr.f32.gmra.mxu0 %v1900
        %v2031 = vpop.f32.mrf.mxu0
        %v2032 = vadd.f32 0.0, %v2031
        %v2033 = vpop.f32.mrf.mxu0
        %2034 = vmatprep.mubr.f32.mxu0 0.0
        %2035 = vmatmul.mubr.f32.gmra.mxu0 %v1903
        %v2036 = vpop.f32.mrf.mxu0
        %v2037 = vadd.f32 0.0, %v2036
        %v2038 = vpop.f32.mrf.mxu0
        %2039 = vmatprep.mubr.f32.mxu0 0.0
        %2040 = vmatmul.mubr.f32.gmra.mxu0 %v1906
        %v2041 = vpop.f32.mrf.mxu0
        %v2042 = vadd.f32 0.0, %v2041
        %v2043 = vpop.f32.mrf.mxu0
        %2044 = vmatprep.mubr.f32.mxu0 0.0
        %2045 = vmatmul.mubr.f32.gmra.mxu0 %v1909
        %v2046 = vpop.f32.mrf.mxu0
        %v2047 = vadd.f32 0.0, %v2046
        %v2048 = vpop.f32.mrf.mxu0
        %2049 = vmatprep.mubr.f32.mxu0 0.0
        %2050 = vmatmul.mubr.f32.gmra.mxu0 %v1912
        %v2051 = vpop.f32.mrf.mxu0
        %v2052 = vadd.f32 0.0, %v2051
        %v2053 = vpop.f32.mrf.mxu0
        %2054 = vmatprep.mubr.f32.mxu0 0.0
        %2055 = vmatmul.mubr.f32.gmra.mxu0 %v1915
        %v2056 = vpop.f32.mrf.mxu0
        %v2057 = vadd.f32 0.0, %v2056
        %v2058 = vpop.f32.mrf.mxu0
        %2059 = vmatprep.mubr.f32.mxu0 0.0
        %2060 = vmatmul.mubr.f32.gmra.mxu0 %v1918
        %v2061 = vpop.f32.mrf.mxu0
        %v2062 = vadd.f32 0.0, %v2061
        %v2063 = vpop.f32.mrf.mxu0
        %2064 = vmatprep.mubr.f32.mxu0 0.0
        %2065 = vmatmul.mubr.f32.gmra.mxu0 %v1921
        %v2066 = vpop.f32.mrf.mxu0
        %v2067 = vadd.f32 0.0, %v2066
        %v2068 = vpop.f32.mrf.mxu0
        %2069 = vmatprep.mubr.f32.mxu0 0.0
        %2070 = vmatmul.mubr.f32.gmra.mxu0 %v1924
        %v2071 = vpop.f32.mrf.mxu0
        %v2072 = vadd.f32 0.0, %v2071
        %v2073 = vpop.f32.mrf.mxu0
        %2074 = vmatprep.mubr.f32.mxu0 0.0
        %2075 = vmatmul.mubr.f32.gmra.mxu0 %v1927
        %v2076 = vpop.f32.mrf.mxu0
        %v2077 = vadd.f32 0.0, %v2076
        %v2078 = vpop.f32.mrf.mxu0
        %2079 = vmatprep.mubr.f32.mxu0 0.0
        %2080 = vmatmul.mubr.f32.gmra.mxu0 %v1930
        %v2081 = vpop.f32.mrf.mxu0
        %v2082 = vadd.f32 0.0, %v2081
        %v2083 = vpop.f32.mrf.mxu0
        %2084 = vmatprep.mubr.f32.mxu0 0.0
        %2085 = vmatmul.mubr.f32.gmra.mxu0 %v1933
        %v2086 = vpop.f32.mrf.mxu0
        %v2087 = vadd.f32 0.0, %v2086
        %v2088 = vpop.f32.mrf.mxu0
        %2089 = vdwg.mxu0
        %v2090 = vld [vmem:[#allocation2] sm:$0xff]
        %v2091 = vld [vmem:[#allocation2 + $0x8] sm:$0xff]
        %v2092 = vld [vmem:[#allocation2 + $0x10] sm:$0xff]
        %v2093 = vld [vmem:[#allocation2 + $0x18] sm:$0xff]
        %v2094 = vld [vmem:[#allocation2 + $0x20] sm:$0xff]
        %v2095 = vld [vmem:[#allocation2 + $0x28] sm:$0xff]
        %v2096 = vld [vmem:[#allocation2 + $0x30] sm:$0xff]
        %v2097 = vld [vmem:[#allocation2 + $0x38] sm:$0xff]
        %v2098 = vld [vmem:[#allocation2 + $0x40] sm:$0xff]
        %v2099 = vld [vmem:[#allocation2 + $0x48] sm:$0xff]
        %v2100 = vld [vmem:[#allocation2 + $0x50] sm:$0xff]
        %v2101 = vld [vmem:[#allocation2 + $0x58] sm:$0xff]
        %v2102 = vld [vmem:[#allocation2 + $0x60] sm:$0xff]
        %v2103 = vld [vmem:[#allocation2 + $0x68] sm:$0xff]
        %v2104 = vld [vmem:[#allocation2 + $0x70] sm:$0xff]
        %v2105 = vld [vmem:[#allocation2 + $0x78] sm:$0xff]
        %v2106 = vld [vmem:[#allocation2 + $0x80] sm:$0xff]
        %v2107 = vld [vmem:[#allocation2 + $0x88] sm:$0xff]
        %v2108 = vadd.f32 %v2090, %v2002
        %v2109 = vadd.f32 %v2091, %v2007
        %v2110 = vadd.f32 %v2092, %v2012
        %v2111 = vadd.f32 %v2093, %v2017
        %v2112 = vadd.f32 %v2094, %v2022
        %v2113 = vadd.f32 %v2095, %v2027
        %v2114 = vadd.f32 %v2096, %v2032
        %v2115 = vadd.f32 %v2097, %v2037
        %v2116 = vadd.f32 %v2098, %v2042
        %v2117 = vadd.f32 %v2099, %v2047
        %v2118 = vadd.f32 %v2100, %v2052
        %v2119 = vadd.f32 %v2101, %v2057
        %v2120 = vadd.f32 %v2102, %v2062
        %v2121 = vadd.f32 %v2103, %v2067
        %v2122 = vadd.f32 %v2104, %v2072
        %v2123 = vadd.f32 %v2105, %v2077
        %v2124 = vadd.f32 %v2106, %v2082
        %v2125 = vadd.f32 %v2107, %v2087
        %2126 = vst.msk [vmem:[#allocation2] sm:$0xff] %vm415, %v2108
        %2127 = vst.msk [vmem:[#allocation2 + $0x8] sm:$0xff] %vm415, %v2109
        %2128 = vst.msk [vmem:[#allocation2 + $0x10] sm:$0xff] %vm415, %v2110
        %2129 = vst.msk [vmem:[#allocation2 + $0x18] sm:$0xff] %vm415, %v2111
        %2130 = vst.msk [vmem:[#allocation2 + $0x20] sm:$0xff] %vm415, %v2112
        %2131 = vst.msk [vmem:[#allocation2 + $0x28] sm:$0xff] %vm415, %v2113
        %2132 = vst.msk [vmem:[#allocation2 + $0x30] sm:$0xff] %vm415, %v2114
        %2133 = vst.msk [vmem:[#allocation2 + $0x38] sm:$0xff] %vm415, %v2115
        %2134 = vst.msk [vmem:[#allocation2 + $0x40] sm:$0xff] %vm415, %v2116
        %2135 = vst.msk [vmem:[#allocation2 + $0x48] sm:$0xff] %vm415, %v2117
        %2136 = vst.msk [vmem:[#allocation2 + $0x50] sm:$0xff] %vm415, %v2118
        %2137 = vst.msk [vmem:[#allocation2 + $0x58] sm:$0xff] %vm415, %v2119
        %2138 = vst.msk [vmem:[#allocation2 + $0x60] sm:$0xff] %vm415, %v2120
        %2139 = vst.msk [vmem:[#allocation2 + $0x68] sm:$0xff] %vm415, %v2121
        %2140 = vst.msk [vmem:[#allocation2 + $0x70] sm:$0xff] %vm415, %v2122
        %2141 = vst.msk [vmem:[#allocation2 + $0x78] sm:$0xff] %vm415, %v2123
        %2142 = vst.msk [vmem:[#allocation2 + $0x80] sm:$0xff] %vm415, %v2124
        %2143 = vst.msk [vmem:[#allocation2 + $0x88] sm:$0xff] %vm415, %v2125
        %s2144 = sadd.s32 %s184, 37
        %s2145 = scalar_lea.vmem %s182, %s2144
        %v2146 = vld [vmem:[%s2145] sm:$0xff]
        %v2147 = vld [vmem:[%s2145 + $0x8] sm:$0xff]
        %v2148 = vld [vmem:[%s2145 + $0x10] sm:$0xff]
        %v2149 = vld [vmem:[%s2145 + $0x18] sm:$0xff]
        %v2150 = vld [vmem:[%s2145 + $0x20] sm:$0xff]
        %v2151 = vld [vmem:[%s2145 + $0x28] sm:$0xff]
        %v2152 = vld [vmem:[%s2145 + $0x30] sm:$0xff]
        %v2153 = vld [vmem:[%s2145 + $0x38] sm:$0xff]
        %v2154 = vld [vmem:[%s2145 + $0x40] sm:$0xff]
        %v2155 = vld [vmem:[%s2145 + $0x48] sm:$0xff]
        %v2156 = vld [vmem:[%s2145 + $0x50] sm:$0xff]
        %v2157 = vld [vmem:[%s2145 + $0x58] sm:$0xff]
        %v2158 = vld [vmem:[%s2145 + $0x60] sm:$0xff]
        %v2159 = vld [vmem:[%s2145 + $0x68] sm:$0xff]
        %v2160 = vld [vmem:[%s2145 + $0x70] sm:$0xff]
        %v2161 = vld [vmem:[%s2145 + $0x78] sm:$0xff]
        %v2162 = vld [vmem:[%s2145 + $0x80] sm:$0xff]
        %v2163 = vld [vmem:[%s2145 + $0x88] sm:$0xff]
        %s2164 = scalar_lea.vmem %s1, 56
        %v2165 = vld [vmem:[%s2164] sm:$0xff]
        %v2167 = vsel %vm205, %v2146, 0
        %v2170 = vsel %vm205, %v2147, 0
        %v2173 = vsel %vm205, %v2148, 0
        %v2176 = vsel %vm205, %v2149, 0
        %v2179 = vsel %vm205, %v2150, 0
        %v2182 = vsel %vm205, %v2151, 0
        %v2185 = vsel %vm205, %v2152, 0
        %v2188 = vsel %vm205, %v2153, 0
        %v2191 = vsel %vm205, %v2154, 0
        %v2194 = vsel %vm205, %v2155, 0
        %v2197 = vsel %vm205, %v2156, 0
        %v2200 = vsel %vm205, %v2157, 0
        %v2203 = vsel %vm205, %v2158, 0
        %v2206 = vsel %vm205, %v2159, 0
        %v2209 = vsel %vm205, %v2160, 0
        %v2212 = vsel %vm205, %v2161, 0
        %v2215 = vsel %vm205, %v2162, 0
        %v2218 = vsel %vm205, %v2163, 0
        %2220 = vmatprep.subr.mxu0 0.0
        %2221 = vmatpush1.msra.mxu0 0.0
        %2222 = vmatprep.subr.mxu0 0.0
        %2223 = vmatpush1.msra.mxu0 0.0
        %2224 = vmatprep.subr.mxu0 0.0
        %2225 = vmatpush1.msra.mxu0 0.0
        %2226 = vmatprep.subr.mxu0 0.0
        %2227 = vmatpush1.msra.mxu0 0.0
        %2228 = vmatprep.subr.mxu0 0.0
        %2229 = vmatpush1.msra.mxu0 0.0
        %2230 = vmatprep.subr.mxu0 0.0
        %2231 = vmatpush1.msra.mxu0 0.0
        %2232 = vmatprep.subr.mxu0 0.0
        %2233 = vmatpush1.msra.mxu0 0.0
        %2234 = vmatprep.subr.mxu0 0.0
        %2235 = vmatpush1.msra.mxu0 0.0
        %2236 = vmatprep.subr.mxu0 0.0
        %2237 = vmatpush1.msra.mxu0 0.0
        %2238 = vmatprep.subr.mxu0 0.0
        %2239 = vmatpush1.msra.mxu0 0.0
        %2240 = vmatprep.subr.mxu0 0.0
        %2241 = vmatpush1.msra.mxu0 0.0
        %2242 = vmatprep.subr.mxu0 0.0
        %2243 = vmatpush1.msra.mxu0 0.0
        %2244 = vmatprep.subr.mxu0 0.0
        %2245 = vmatpush1.msra.mxu0 0.0
        %2246 = vmatprep.subr.mxu0 0.0
        %2247 = vmatpush1.msra.mxu0 0.0
        %2248 = vmatprep.subr.mxu0 0.0
        %2249 = vmatpush1.msra.mxu0 0.0
        %2250 = vmatprep.subr.mxu0 0.0
        %2251 = vmatpush1.msra.mxu0 %v2165
        %2252 = vmatprep.subr.mxu0 0.0
        %2253 = vmatpush2.msra.mxu0 0.0
        %2254 = vmatprep.subr.mxu0 0.0
        %2255 = vmatpush2.msra.mxu0 0.0
        %2256 = vmatprep.subr.mxu0 0.0
        %2257 = vmatpush2.msra.mxu0 0.0
        %2258 = vmatprep.subr.mxu0 0.0
        %2259 = vmatpush2.msra.mxu0 0.0
        %2260 = vmatprep.subr.mxu0 0.0
        %2261 = vmatpush2.msra.mxu0 0.0
        %2262 = vmatprep.subr.mxu0 0.0
        %2263 = vmatpush2.msra.mxu0 0.0
        %2264 = vmatprep.subr.mxu0 0.0
        %2265 = vmatpush2.msra.mxu0 0.0
        %2266 = vmatprep.subr.mxu0 0.0
        %2267 = vmatpush2.msra.mxu0 0.0
        %2268 = vmatprep.subr.mxu0 0.0
        %2269 = vmatpush2.msra.mxu0 0.0
        %2270 = vmatprep.subr.mxu0 0.0
        %2271 = vmatpush2.msra.mxu0 0.0
        %2272 = vmatprep.subr.mxu0 0.0
        %2273 = vmatpush2.msra.mxu0 0.0
        %2274 = vmatprep.subr.mxu0 0.0
        %2275 = vmatpush2.msra.mxu0 0.0
        %2276 = vmatprep.subr.mxu0 0.0
        %2277 = vmatpush2.msra.mxu0 0.0
        %2278 = vmatprep.subr.mxu0 0.0
        %2279 = vmatpush2.msra.mxu0 0.0
        %2280 = vmatprep.subr.mxu0 0.0
        %2281 = vmatpush2.msra.mxu0 0.0
        %2282 = vmatprep.subr.mxu0 0.0
        %2283 = vmatpush2.msra.mxu0 0.0
        %2284 = vmatprep.mubr.f32.mxu0 0.0
        %2285 = vmatmul.mubr.f32.gmra.mxu0 %v2167
        %v2286 = vpop.f32.mrf.mxu0
        %v2287 = vadd.f32 0.0, %v2286
        %v2288 = vpop.f32.mrf.mxu0
        %2289 = vmatprep.mubr.f32.mxu0 0.0
        %2290 = vmatmul.mubr.f32.gmra.mxu0 %v2170
        %v2291 = vpop.f32.mrf.mxu0
        %v2292 = vadd.f32 0.0, %v2291
        %v2293 = vpop.f32.mrf.mxu0
        %2294 = vmatprep.mubr.f32.mxu0 0.0
        %2295 = vmatmul.mubr.f32.gmra.mxu0 %v2173
        %v2296 = vpop.f32.mrf.mxu0
        %v2297 = vadd.f32 0.0, %v2296
        %v2298 = vpop.f32.mrf.mxu0
        %2299 = vmatprep.mubr.f32.mxu0 0.0
        %2300 = vmatmul.mubr.f32.gmra.mxu0 %v2176
        %v2301 = vpop.f32.mrf.mxu0
        %v2302 = vadd.f32 0.0, %v2301
        %v2303 = vpop.f32.mrf.mxu0
        %2304 = vmatprep.mubr.f32.mxu0 0.0
        %2305 = vmatmul.mubr.f32.gmra.mxu0 %v2179
        %v2306 = vpop.f32.mrf.mxu0
        %v2307 = vadd.f32 0.0, %v2306
        %v2308 = vpop.f32.mrf.mxu0
        %2309 = vmatprep.mubr.f32.mxu0 0.0
        %2310 = vmatmul.mubr.f32.gmra.mxu0 %v2182
        %v2311 = vpop.f32.mrf.mxu0
        %v2312 = vadd.f32 0.0, %v2311
        %v2313 = vpop.f32.mrf.mxu0
        %2314 = vmatprep.mubr.f32.mxu0 0.0
        %2315 = vmatmul.mubr.f32.gmra.mxu0 %v2185
        %v2316 = vpop.f32.mrf.mxu0
        %v2317 = vadd.f32 0.0, %v2316
        %v2318 = vpop.f32.mrf.mxu0
        %2319 = vmatprep.mubr.f32.mxu0 0.0
        %2320 = vmatmul.mubr.f32.gmra.mxu0 %v2188
        %v2321 = vpop.f32.mrf.mxu0
        %v2322 = vadd.f32 0.0, %v2321
        %v2323 = vpop.f32.mrf.mxu0
        %2324 = vmatprep.mubr.f32.mxu0 0.0
        %2325 = vmatmul.mubr.f32.gmra.mxu0 %v2191
        %v2326 = vpop.f32.mrf.mxu0
        %v2327 = vadd.f32 0.0, %v2326
        %v2328 = vpop.f32.mrf.mxu0
        %2329 = vmatprep.mubr.f32.mxu0 0.0
        %2330 = vmatmul.mubr.f32.gmra.mxu0 %v2194
        %v2331 = vpop.f32.mrf.mxu0
        %v2332 = vadd.f32 0.0, %v2331
        %v2333 = vpop.f32.mrf.mxu0
        %2334 = vmatprep.mubr.f32.mxu0 0.0
        %2335 = vmatmul.mubr.f32.gmra.mxu0 %v2197
        %v2336 = vpop.f32.mrf.mxu0
        %v2337 = vadd.f32 0.0, %v2336
        %v2338 = vpop.f32.mrf.mxu0
        %2339 = vmatprep.mubr.f32.mxu0 0.0
        %2340 = vmatmul.mubr.f32.gmra.mxu0 %v2200
        %v2341 = vpop.f32.mrf.mxu0
        %v2342 = vadd.f32 0.0, %v2341
        %v2343 = vpop.f32.mrf.mxu0
        %2344 = vmatprep.mubr.f32.mxu0 0.0
        %2345 = vmatmul.mubr.f32.gmra.mxu0 %v2203
        %v2346 = vpop.f32.mrf.mxu0
        %v2347 = vadd.f32 0.0, %v2346
        %v2348 = vpop.f32.mrf.mxu0
        %2349 = vmatprep.mubr.f32.mxu0 0.0
        %2350 = vmatmul.mubr.f32.gmra.mxu0 %v2206
        %v2351 = vpop.f32.mrf.mxu0
        %v2352 = vadd.f32 0.0, %v2351
        %v2353 = vpop.f32.mrf.mxu0
        %2354 = vmatprep.mubr.f32.mxu0 0.0
        %2355 = vmatmul.mubr.f32.gmra.mxu0 %v2209
        %v2356 = vpop.f32.mrf.mxu0
        %v2357 = vadd.f32 0.0, %v2356
        %v2358 = vpop.f32.mrf.mxu0
        %2359 = vmatprep.mubr.f32.mxu0 0.0
        %2360 = vmatmul.mubr.f32.gmra.mxu0 %v2212
        %v2361 = vpop.f32.mrf.mxu0
        %v2362 = vadd.f32 0.0, %v2361
        %v2363 = vpop.f32.mrf.mxu0
        %2364 = vmatprep.mubr.f32.mxu0 0.0
        %2365 = vmatmul.mubr.f32.gmra.mxu0 %v2215
        %v2366 = vpop.f32.mrf.mxu0
        %v2367 = vadd.f32 0.0, %v2366
        %v2368 = vpop.f32.mrf.mxu0
        %2369 = vmatprep.mubr.f32.mxu0 0.0
        %2370 = vmatmul.mubr.f32.gmra.mxu0 %v2218
        %v2371 = vpop.f32.mrf.mxu0
        %v2372 = vadd.f32 0.0, %v2371
        %v2373 = vpop.f32.mrf.mxu0
        %2374 = vdwg.mxu0
        %v2375 = vld [vmem:[#allocation2] sm:$0xff]
        %v2376 = vld [vmem:[#allocation2 + $0x8] sm:$0xff]
        %v2377 = vld [vmem:[#allocation2 + $0x10] sm:$0xff]
        %v2378 = vld [vmem:[#allocation2 + $0x18] sm:$0xff]
        %v2379 = vld [vmem:[#allocation2 + $0x20] sm:$0xff]
        %v2380 = vld [vmem:[#allocation2 + $0x28] sm:$0xff]
        %v2381 = vld [vmem:[#allocation2 + $0x30] sm:$0xff]
        %v2382 = vld [vmem:[#allocation2 + $0x38] sm:$0xff]
        %v2383 = vld [vmem:[#allocation2 + $0x40] sm:$0xff]
        %v2384 = vld [vmem:[#allocation2 + $0x48] sm:$0xff]
        %v2385 = vld [vmem:[#allocation2 + $0x50] sm:$0xff]
        %v2386 = vld [vmem:[#allocation2 + $0x58] sm:$0xff]
        %v2387 = vld [vmem:[#allocation2 + $0x60] sm:$0xff]
        %v2388 = vld [vmem:[#allocation2 + $0x68] sm:$0xff]
        %v2389 = vld [vmem:[#allocation2 + $0x70] sm:$0xff]
        %v2390 = vld [vmem:[#allocation2 + $0x78] sm:$0xff]
        %v2391 = vld [vmem:[#allocation2 + $0x80] sm:$0xff]
        %v2392 = vld [vmem:[#allocation2 + $0x88] sm:$0xff]
        %v2393 = vadd.f32 %v2375, %v2287
        %v2394 = vadd.f32 %v2376, %v2292
        %v2395 = vadd.f32 %v2377, %v2297
        %v2396 = vadd.f32 %v2378, %v2302
        %v2397 = vadd.f32 %v2379, %v2307
        %v2398 = vadd.f32 %v2380, %v2312
        %v2399 = vadd.f32 %v2381, %v2317
        %v2400 = vadd.f32 %v2382, %v2322
        %v2401 = vadd.f32 %v2383, %v2327
        %v2402 = vadd.f32 %v2384, %v2332
        %v2403 = vadd.f32 %v2385, %v2337
        %v2404 = vadd.f32 %v2386, %v2342
        %v2405 = vadd.f32 %v2387, %v2347
        %v2406 = vadd.f32 %v2388, %v2352
        %v2407 = vadd.f32 %v2389, %v2357
        %v2408 = vadd.f32 %v2390, %v2362
        %v2409 = vadd.f32 %v2391, %v2367
        %v2410 = vadd.f32 %v2392, %v2372
        %2411 = vst.msk [vmem:[#allocation2] sm:$0xff] %vm415, %v2393
        %2412 = vst.msk [vmem:[#allocation2 + $0x8] sm:$0xff] %vm415, %v2394
        %2413 = vst.msk [vmem:[#allocation2 + $0x10] sm:$0xff] %vm415, %v2395
        %2414 = vst.msk [vmem:[#allocation2 + $0x18] sm:$0xff] %vm415, %v2396
        %2415 = vst.msk [vmem:[#allocation2 + $0x20] sm:$0xff] %vm415, %v2397
        %2416 = vst.msk [vmem:[#allocation2 + $0x28] sm:$0xff] %vm415, %v2398
        %2417 = vst.msk [vmem:[#allocation2 + $0x30] sm:$0xff] %vm415, %v2399
        %2418 = vst.msk [vmem:[#allocation2 + $0x38] sm:$0xff] %vm415, %v2400
        %2419 = vst.msk [vmem:[#allocation2 + $0x40] sm:$0xff] %vm415, %v2401
        %2420 = vst.msk [vmem:[#allocation2 + $0x48] sm:$0xff] %vm415, %v2402
        %2421 = vst.msk [vmem:[#allocation2 + $0x50] sm:$0xff] %vm415, %v2403
        %2422 = vst.msk [vmem:[#allocation2 + $0x58] sm:$0xff] %vm415, %v2404
        %2423 = vst.msk [vmem:[#allocation2 + $0x60] sm:$0xff] %vm415, %v2405
        %2424 = vst.msk [vmem:[#allocation2 + $0x68] sm:$0xff] %vm415, %v2406
        %2425 = vst.msk [vmem:[#allocation2 + $0x70] sm:$0xff] %vm415, %v2407
        %2426 = vst.msk [vmem:[#allocation2 + $0x78] sm:$0xff] %vm415, %v2408
        %2427 = vst.msk [vmem:[#allocation2 + $0x80] sm:$0xff] %vm415, %v2409
        %2428 = vst.msk [vmem:[#allocation2 + $0x88] sm:$0xff] %vm415, %v2410
        %s2429 = sadd.s32 %s184, 38
        %s2430 = scalar_lea.vmem %s182, %s2429
        %v2431 = vld [vmem:[%s2430] sm:$0xff]
        %v2432 = vld [vmem:[%s2430 + $0x8] sm:$0xff]
        %v2433 = vld [vmem:[%s2430 + $0x10] sm:$0xff]
        %v2434 = vld [vmem:[%s2430 + $0x18] sm:$0xff]
        %v2435 = vld [vmem:[%s2430 + $0x20] sm:$0xff]
        %v2436 = vld [vmem:[%s2430 + $0x28] sm:$0xff]
        %v2437 = vld [vmem:[%s2430 + $0x30] sm:$0xff]
        %v2438 = vld [vmem:[%s2430 + $0x38] sm:$0xff]
        %v2439 = vld [vmem:[%s2430 + $0x40] sm:$0xff]
        %v2440 = vld [vmem:[%s2430 + $0x48] sm:$0xff]
        %v2441 = vld [vmem:[%s2430 + $0x50] sm:$0xff]
        %v2442 = vld [vmem:[%s2430 + $0x58] sm:$0xff]
        %v2443 = vld [vmem:[%s2430 + $0x60] sm:$0xff]
        %v2444 = vld [vmem:[%s2430 + $0x68] sm:$0xff]
        %v2445 = vld [vmem:[%s2430 + $0x70] sm:$0xff]
        %v2446 = vld [vmem:[%s2430 + $0x78] sm:$0xff]
        %v2447 = vld [vmem:[%s2430 + $0x80] sm:$0xff]
        %v2448 = vld [vmem:[%s2430 + $0x88] sm:$0xff]
        %s2449 = scalar_lea.vmem %s1, 64
        %v2450 = vld [vmem:[%s2449] sm:$0xff]
        %v2452 = vsel %vm205, %v2431, 0
        %v2455 = vsel %vm205, %v2432, 0
        %v2458 = vsel %vm205, %v2433, 0
        %v2461 = vsel %vm205, %v2434, 0
        %v2464 = vsel %vm205, %v2435, 0
        %v2467 = vsel %vm205, %v2436, 0
        %v2470 = vsel %vm205, %v2437, 0
        %v2473 = vsel %vm205, %v2438, 0
        %v2476 = vsel %vm205, %v2439, 0
        %v2479 = vsel %vm205, %v2440, 0
        %v2482 = vsel %vm205, %v2441, 0
        %v2485 = vsel %vm205, %v2442, 0
        %v2488 = vsel %vm205, %v2443, 0
        %v2491 = vsel %vm205, %v2444, 0
        %v2494 = vsel %vm205, %v2445, 0
        %v2497 = vsel %vm205, %v2446, 0
        %v2500 = vsel %vm205, %v2447, 0
        %v2503 = vsel %vm205, %v2448, 0
        %2505 = vmatprep.subr.mxu0 0.0
        %2506 = vmatpush1.msra.mxu0 0.0
        %2507 = vmatprep.subr.mxu0 0.0
        %2508 = vmatpush1.msra.mxu0 0.0
        %2509 = vmatprep.subr.mxu0 0.0
        %2510 = vmatpush1.msra.mxu0 0.0
        %2511 = vmatprep.subr.mxu0 0.0
        %2512 = vmatpush1.msra.mxu0 0.0
        %2513 = vmatprep.subr.mxu0 0.0
        %2514 = vmatpush1.msra.mxu0 0.0
        %2515 = vmatprep.subr.mxu0 0.0
        %2516 = vmatpush1.msra.mxu0 0.0
        %2517 = vmatprep.subr.mxu0 0.0
        %2518 = vmatpush1.msra.mxu0 0.0
        %2519 = vmatprep.subr.mxu0 0.0
        %2520 = vmatpush1.msra.mxu0 0.0
        %2521 = vmatprep.subr.mxu0 0.0
        %2522 = vmatpush1.msra.mxu0 0.0
        %2523 = vmatprep.subr.mxu0 0.0
        %2524 = vmatpush1.msra.mxu0 0.0
        %2525 = vmatprep.subr.mxu0 0.0
        %2526 = vmatpush1.msra.mxu0 0.0
        %2527 = vmatprep.subr.mxu0 0.0
        %2528 = vmatpush1.msra.mxu0 0.0
        %2529 = vmatprep.subr.mxu0 0.0
        %2530 = vmatpush1.msra.mxu0 0.0
        %2531 = vmatprep.subr.mxu0 0.0
        %2532 = vmatpush1.msra.mxu0 0.0
        %2533 = vmatprep.subr.mxu0 0.0
        %2534 = vmatpush1.msra.mxu0 0.0
        %2535 = vmatprep.subr.mxu0 0.0
        %2536 = vmatpush1.msra.mxu0 %v2450
        %2537 = vmatprep.subr.mxu0 0.0
        %2538 = vmatpush2.msra.mxu0 0.0
        %2539 = vmatprep.subr.mxu0 0.0
        %2540 = vmatpush2.msra.mxu0 0.0
        %2541 = vmatprep.subr.mxu0 0.0
        %2542 = vmatpush2.msra.mxu0 0.0
        %2543 = vmatprep.subr.mxu0 0.0
        %2544 = vmatpush2.msra.mxu0 0.0
        %2545 = vmatprep.subr.mxu0 0.0
        %2546 = vmatpush2.msra.mxu0 0.0
        %2547 = vmatprep.subr.mxu0 0.0
        %2548 = vmatpush2.msra.mxu0 0.0
        %2549 = vmatprep.subr.mxu0 0.0
        %2550 = vmatpush2.msra.mxu0 0.0
        %2551 = vmatprep.subr.mxu0 0.0
        %2552 = vmatpush2.msra.mxu0 0.0
        %2553 = vmatprep.subr.mxu0 0.0
        %2554 = vmatpush2.msra.mxu0 0.0
        %2555 = vmatprep.subr.mxu0 0.0
        %2556 = vmatpush2.msra.mxu0 0.0
        %2557 = vmatprep.subr.mxu0 0.0
        %2558 = vmatpush2.msra.mxu0 0.0
        %2559 = vmatprep.subr.mxu0 0.0
        %2560 = vmatpush2.msra.mxu0 0.0
        %2561 = vmatprep.subr.mxu0 0.0
        %2562 = vmatpush2.msra.mxu0 0.0
        %2563 = vmatprep.subr.mxu0 0.0
        %2564 = vmatpush2.msra.mxu0 0.0
        %2565 = vmatprep.subr.mxu0 0.0
        %2566 = vmatpush2.msra.mxu0 0.0
        %2567 = vmatprep.subr.mxu0 0.0
        %2568 = vmatpush2.msra.mxu0 0.0
        %2569 = vmatprep.mubr.f32.mxu0 0.0
        %2570 = vmatmul.mubr.f32.gmra.mxu0 %v2452
        %v2571 = vpop.f32.mrf.mxu0
        %v2572 = vadd.f32 0.0, %v2571
        %v2573 = vpop.f32.mrf.mxu0
        %2574 = vmatprep.mubr.f32.mxu0 0.0
        %2575 = vmatmul.mubr.f32.gmra.mxu0 %v2455
        %v2576 = vpop.f32.mrf.mxu0
        %v2577 = vadd.f32 0.0, %v2576
        %v2578 = vpop.f32.mrf.mxu0
        %2579 = vmatprep.mubr.f32.mxu0 0.0
        %2580 = vmatmul.mubr.f32.gmra.mxu0 %v2458
        %v2581 = vpop.f32.mrf.mxu0
        %v2582 = vadd.f32 0.0, %v2581
        %v2583 = vpop.f32.mrf.mxu0
        %2584 = vmatprep.mubr.f32.mxu0 0.0
        %2585 = vmatmul.mubr.f32.gmra.mxu0 %v2461
        %v2586 = vpop.f32.mrf.mxu0
        %v2587 = vadd.f32 0.0, %v2586
        %v2588 = vpop.f32.mrf.mxu0
        %2589 = vmatprep.mubr.f32.mxu0 0.0
        %2590 = vmatmul.mubr.f32.gmra.mxu0 %v2464
        %v2591 = vpop.f32.mrf.mxu0
        %v2592 = vadd.f32 0.0, %v2591
        %v2593 = vpop.f32.mrf.mxu0
        %2594 = vmatprep.mubr.f32.mxu0 0.0
        %2595 = vmatmul.mubr.f32.gmra.mxu0 %v2467
        %v2596 = vpop.f32.mrf.mxu0
        %v2597 = vadd.f32 0.0, %v2596
        %v2598 = vpop.f32.mrf.mxu0
        %2599 = vmatprep.mubr.f32.mxu0 0.0
        %2600 = vmatmul.mubr.f32.gmra.mxu0 %v2470
        %v2601 = vpop.f32.mrf.mxu0
        %v2602 = vadd.f32 0.0, %v2601
        %v2603 = vpop.f32.mrf.mxu0
        %2604 = vmatprep.mubr.f32.mxu0 0.0
        %2605 = vmatmul.mubr.f32.gmra.mxu0 %v2473
        %v2606 = vpop.f32.mrf.mxu0
        %v2607 = vadd.f32 0.0, %v2606
        %v2608 = vpop.f32.mrf.mxu0
        %2609 = vmatprep.mubr.f32.mxu0 0.0
        %2610 = vmatmul.mubr.f32.gmra.mxu0 %v2476
        %v2611 = vpop.f32.mrf.mxu0
        %v2612 = vadd.f32 0.0, %v2611
        %v2613 = vpop.f32.mrf.mxu0
        %2614 = vmatprep.mubr.f32.mxu0 0.0
        %2615 = vmatmul.mubr.f32.gmra.mxu0 %v2479
        %v2616 = vpop.f32.mrf.mxu0
        %v2617 = vadd.f32 0.0, %v2616
        %v2618 = vpop.f32.mrf.mxu0
        %2619 = vmatprep.mubr.f32.mxu0 0.0
        %2620 = vmatmul.mubr.f32.gmra.mxu0 %v2482
        %v2621 = vpop.f32.mrf.mxu0
        %v2622 = vadd.f32 0.0, %v2621
        %v2623 = vpop.f32.mrf.mxu0
        %2624 = vmatprep.mubr.f32.mxu0 0.0
        %2625 = vmatmul.mubr.f32.gmra.mxu0 %v2485
        %v2626 = vpop.f32.mrf.mxu0
        %v2627 = vadd.f32 0.0, %v2626
        %v2628 = vpop.f32.mrf.mxu0
        %2629 = vmatprep.mubr.f32.mxu0 0.0
        %2630 = vmatmul.mubr.f32.gmra.mxu0 %v2488
        %v2631 = vpop.f32.mrf.mxu0
        %v2632 = vadd.f32 0.0, %v2631
        %v2633 = vpop.f32.mrf.mxu0
        %2634 = vmatprep.mubr.f32.mxu0 0.0
        %2635 = vmatmul.mubr.f32.gmra.mxu0 %v2491
        %v2636 = vpop.f32.mrf.mxu0
        %v2637 = vadd.f32 0.0, %v2636
        %v2638 = vpop.f32.mrf.mxu0
        %2639 = vmatprep.mubr.f32.mxu0 0.0
        %2640 = vmatmul.mubr.f32.gmra.mxu0 %v2494
        %v2641 = vpop.f32.mrf.mxu0
        %v2642 = vadd.f32 0.0, %v2641
        %v2643 = vpop.f32.mrf.mxu0
        %2644 = vmatprep.mubr.f32.mxu0 0.0
        %2645 = vmatmul.mubr.f32.gmra.mxu0 %v2497
        %v2646 = vpop.f32.mrf.mxu0
        %v2647 = vadd.f32 0.0, %v2646
        %v2648 = vpop.f32.mrf.mxu0
        %2649 = vmatprep.mubr.f32.mxu0 0.0
        %2650 = vmatmul.mubr.f32.gmra.mxu0 %v2500
        %v2651 = vpop.f32.mrf.mxu0
        %v2652 = vadd.f32 0.0, %v2651
        %v2653 = vpop.f32.mrf.mxu0
        %2654 = vmatprep.mubr.f32.mxu0 0.0
        %2655 = vmatmul.mubr.f32.gmra.mxu0 %v2503
        %v2656 = vpop.f32.mrf.mxu0
        %v2657 = vadd.f32 0.0, %v2656
        %v2658 = vpop.f32.mrf.mxu0
        %2659 = vdwg.mxu0
        %v2660 = vld [vmem:[#allocation2] sm:$0xff]
        %v2661 = vld [vmem:[#allocation2 + $0x8] sm:$0xff]
        %v2662 = vld [vmem:[#allocation2 + $0x10] sm:$0xff]
        %v2663 = vld [vmem:[#allocation2 + $0x18] sm:$0xff]
        %v2664 = vld [vmem:[#allocation2 + $0x20] sm:$0xff]
        %v2665 = vld [vmem:[#allocation2 + $0x28] sm:$0xff]
        %v2666 = vld [vmem:[#allocation2 + $0x30] sm:$0xff]
        %v2667 = vld [vmem:[#allocation2 + $0x38] sm:$0xff]
        %v2668 = vld [vmem:[#allocation2 + $0x40] sm:$0xff]
        %v2669 = vld [vmem:[#allocation2 + $0x48] sm:$0xff]
        %v2670 = vld [vmem:[#allocation2 + $0x50] sm:$0xff]
        %v2671 = vld [vmem:[#allocation2 + $0x58] sm:$0xff]
        %v2672 = vld [vmem:[#allocation2 + $0x60] sm:$0xff]
        %v2673 = vld [vmem:[#allocation2 + $0x68] sm:$0xff]
        %v2674 = vld [vmem:[#allocation2 + $0x70] sm:$0xff]
        %v2675 = vld [vmem:[#allocation2 + $0x78] sm:$0xff]
        %v2676 = vld [vmem:[#allocation2 + $0x80] sm:$0xff]
        %v2677 = vld [vmem:[#allocation2 + $0x88] sm:$0xff]
        %v2678 = vadd.f32 %v2660, %v2572
        %v2679 = vadd.f32 %v2661, %v2577
        %v2680 = vadd.f32 %v2662, %v2582
        %v2681 = vadd.f32 %v2663, %v2587
        %v2682 = vadd.f32 %v2664, %v2592
        %v2683 = vadd.f32 %v2665, %v2597
        %v2684 = vadd.f32 %v2666, %v2602
        %v2685 = vadd.f32 %v2667, %v2607
        %v2686 = vadd.f32 %v2668, %v2612
        %v2687 = vadd.f32 %v2669, %v2617
        %v2688 = vadd.f32 %v2670, %v2622
        %v2689 = vadd.f32 %v2671, %v2627
        %v2690 = vadd.f32 %v2672, %v2632
        %v2691 = vadd.f32 %v2673, %v2637
        %v2692 = vadd.f32 %v2674, %v2642
        %v2693 = vadd.f32 %v2675, %v2647
        %v2694 = vadd.f32 %v2676, %v2652
        %v2695 = vadd.f32 %v2677, %v2657
        %2696 = vst.msk [vmem:[#allocation2] sm:$0xff] %vm415, %v2678
        %2697 = vst.msk [vmem:[#allocation2 + $0x8] sm:$0xff] %vm415, %v2679
        %2698 = vst.msk [vmem:[#allocation2 + $0x10] sm:$0xff] %vm415, %v2680
        %2699 = vst.msk [vmem:[#allocation2 + $0x18] sm:$0xff] %vm415, %v2681
        %2700 = vst.msk [vmem:[#allocation2 + $0x20] sm:$0xff] %vm415, %v2682
        %2701 = vst.msk [vmem:[#allocation2 + $0x28] sm:$0xff] %vm415, %v2683
        %2702 = vst.msk [vmem:[#allocation2 + $0x30] sm:$0xff] %vm415, %v2684
        %2703 = vst.msk [vmem:[#allocation2 + $0x38] sm:$0xff] %vm415, %v2685
        %2704 = vst.msk [vmem:[#allocation2 + $0x40] sm:$0xff] %vm415, %v2686
        %2705 = vst.msk [vmem:[#allocation2 + $0x48] sm:$0xff] %vm415, %v2687
        %2706 = vst.msk [vmem:[#allocation2 + $0x50] sm:$0xff] %vm415, %v2688
        %2707 = vst.msk [vmem:[#allocation2 + $0x58] sm:$0xff] %vm415, %v2689
        %2708 = vst.msk [vmem:[#allocation2 + $0x60] sm:$0xff] %vm415, %v2690
        %2709 = vst.msk [vmem:[#allocation2 + $0x68] sm:$0xff] %vm415, %v2691
        %2710 = vst.msk [vmem:[#allocation2 + $0x70] sm:$0xff] %vm415, %v2692
        %2711 = vst.msk [vmem:[#allocation2 + $0x78] sm:$0xff] %vm415, %v2693
        %2712 = vst.msk [vmem:[#allocation2 + $0x80] sm:$0xff] %vm415, %v2694
        %2713 = vst.msk [vmem:[#allocation2 + $0x88] sm:$0xff] %vm415, %v2695
        %v2714 = vld [vmem:[%s2] sm:$0x1]
        %v2715 = vld [vmem:[#allocation2] sm:$0xff]
        %v2716 = vld [vmem:[#allocation2 + $0x8] sm:$0xff]
        %v2718 = vlaneseq
        %v2719 = vshrl.u32 %v2718, 7
        %v2720 = vsub.s32 0, %v2719
        %v2721 = vrot.slane %v2714, %v2720
        %v2723 = vadd.f32 %v2715, %v2721
        %v2724 = vadd.f32 %v2716, %v2721
        %v2725 = vmax.f32 %v2723, 0.0
        %v2726 = vmax.f32 %v2724, 0.0
        %2727 = vst.msk [vmem:[%s177] sm:$0xff] %vm415, %v2725
        %2728 = vst.msk [vmem:[%s177 + $0x8] sm:$0xff] %vm415, %v2726
        %v2729 = vld [vmem:[#allocation2 + $0x12] sm:$0xff]
        %v2730 = vld [vmem:[#allocation2 + $0x1a] sm:$0xff]
        %v2731 = vadd.f32 %v2729, %v2721
        %v2732 = vadd.f32 %v2730, %v2721
        %v2733 = vmax.f32 %v2731, 0.0
        %v2734 = vmax.f32 %v2732, 0.0
        %s2735 = scalar_lea.vmem %s177, 16 [#allocation3]
        %2736 = vst.msk [vmem:[%s2735] sm:$0xff] %vm415, %v2733
        %2737 = vst.msk [vmem:[%s2735 + $0x8] sm:$0xff] %vm415, %v2734
        %v2738 = vld [vmem:[#allocation2 + $0x24] sm:$0xff]
        %v2739 = vld [vmem:[#allocation2 + $0x2c] sm:$0xff]
        %v2740 = vadd.f32 %v2738, %v2721
        %v2741 = vadd.f32 %v2739, %v2721
        %v2742 = vmax.f32 %v2740, 0.0
        %v2743 = vmax.f32 %v2741, 0.0
        %s2744 = scalar_lea.vmem %s177, 32 [#allocation3]
        %2745 = vst.msk [vmem:[%s2744] sm:$0xff] %vm415, %v2742
        %2746 = vst.msk [vmem:[%s2744 + $0x8] sm:$0xff] %vm415, %v2743
        %v2747 = vld [vmem:[#allocation2 + $0x36] sm:$0xff]
        %v2748 = vld [vmem:[#allocation2 + $0x3e] sm:$0xff]
        %v2749 = vadd.f32 %v2747, %v2721
        %v2750 = vadd.f32 %v2748, %v2721
        %v2751 = vmax.f32 %v2749, 0.0
        %v2752 = vmax.f32 %v2750, 0.0
        %s2753 = scalar_lea.vmem %s177, 48 [#allocation3]
        %2754 = vst.msk [vmem:[%s2753] sm:$0xff] %vm415, %v2751
        %2755 = vst.msk [vmem:[%s2753 + $0x8] sm:$0xff] %vm415, %v2752
        %v2756 = vld [vmem:[#allocation2 + $0x48] sm:$0xff]
        %v2757 = vld [vmem:[#allocation2 + $0x50] sm:$0xff]
        %v2758 = vadd.f32 %v2756, %v2721
        %v2759 = vadd.f32 %v2757, %v2721
        %v2760 = vmax.f32 %v2758, 0.0
        %v2761 = vmax.f32 %v2759, 0.0
        %s2762 = scalar_lea.vmem %s177, 64 [#allocation3]
        %2763 = vst.msk [vmem:[%s2762] sm:$0xff] %vm415, %v2760
        %2764 = vst.msk [vmem:[%s2762 + $0x8] sm:$0xff] %vm415, %v2761
        %v2765 = vld [vmem:[#allocation2 + $0x5a] sm:$0xff]
        %v2766 = vld [vmem:[#allocation2 + $0x62] sm:$0xff]
        %v2767 = vadd.f32 %v2765, %v2721
        %v2768 = vadd.f32 %v2766, %v2721
        %v2769 = vmax.f32 %v2767, 0.0
        %v2770 = vmax.f32 %v2768, 0.0
        %s2771 = scalar_lea.vmem %s177, 80 [#allocation3]
        %2772 = vst.msk [vmem:[%s2771] sm:$0xff] %vm415, %v2769
        %2773 = vst.msk [vmem:[%s2771 + $0x8] sm:$0xff] %vm415, %v2770
        %v2774 = vld [vmem:[#allocation2 + $0x6c] sm:$0xff]
        %v2775 = vld [vmem:[#allocation2 + $0x74] sm:$0xff]
        %v2776 = vadd.f32 %v2774, %v2721
        %v2777 = vadd.f32 %v2775, %v2721
        %v2778 = vmax.f32 %v2776, 0.0
        %v2779 = vmax.f32 %v2777, 0.0
        %s2780 = scalar_lea.vmem %s177, 96 [#allocation3]
        %2781 = vst.msk [vmem:[%s2780] sm:$0xff] %vm415, %v2778
        %2782 = vst.msk [vmem:[%s2780 + $0x8] sm:$0xff] %vm415, %v2779
        %v2783 = vld [vmem:[#allocation2 + $0x7e] sm:$0xff]
        %v2784 = vld [vmem:[#allocation2 + $0x86] sm:$0xff]
        %v2785 = vadd.f32 %v2783, %v2721
        %v2786 = vadd.f32 %v2784, %v2721
        %v2787 = vmax.f32 %v2785, 0.0
        %v2788 = vmax.f32 %v2786, 0.0
        %s2789 = scalar_lea.vmem %s177, 112 [#allocation3]
        %2790 = vst.msk [vmem:[%s2789] sm:$0xff] %vm415, %v2787
        %2791 = vst.msk [vmem:[%s2789 + $0x8] sm:$0xff] %vm415, %v2788
        %s2792 = sand.u32 %s107, 1
        %s2793 = scalar_lea.sflag [#allocation4], %s2792
        %s2794 = sand.u32 %s107, 1
        %s2795 = smul.addr %s2794, 128
        %s2796 = scalar_lea.vmem [#allocation3], %s2795
        // Predicated region
        $region33: #{tpu_custom_call.1} parent=31 // pred_check
          %p2797 = pneg %p117
        $region34: #{tpu_custom_call.1} parent=31 // pred_check_branch
          %2799 = sbr.rel (%p2797) target = $region36
        $region35: #{tpu_custom_call.1} parent=31 // pred_region
          %s2800 = smul.u32 8, %s22
          %s2802 = ssub.s32 2048, 2048
          %2803 = vsyncadd %s2793, %s2802
          %s2804 = smul.addr %s2800, 2
          %s2805 = smul.addr %s21, 32
          %s2806 = sadd.s32 %s2804, %s2805
          %s2807 = smul.addr %s2806, 128
          %s2808 = scalar_lea.hbm %s3, %s2807
          %s2809 = sshll.u32 %s2796, 4
          %s2810 = int_to_ptr.vmem [resolvable:$true] %s2809
          %2815 = dma.vmem_to_hbm [thread:$0]  %s2810, 2048, %s2808, %s2793, 128, 128, 8
        $region36: #{tpu_custom_call.1} parent=31 // pred_fallthru
          _
      $region32: #{tpu_custom_call.1} parent=5 // pred_fallthru
        _
      %p2816 = scmp.le.s32.totalorder 2, %s12
      // Predicated region
      $region37: #{tpu_custom_call.1} parent=5 // pred_check
        %p2817 = pneg %p2816
      $region38: #{tpu_custom_call.1} parent=5 // pred_check_branch
        %2819 = sbr.rel (%p2817) target = $region40
      $region39: #{tpu_custom_call.1} parent=5 // pred_region
        %s2820 = ssub.s32 %s12, 2
        // Predicated region
        $region41: #{tpu_custom_call.1} parent=39 // pred_check
          %p2821 = pneg %p123
        $region42: #{tpu_custom_call.1} parent=39 // pred_check_branch
          %2823 = sbr.rel (%p2821) target = $region44
        $region43: #{tpu_custom_call.1} parent=39 // pred_region
          %s2824 = sand.u32 %s108, 1
          %s2825 = scalar_lea.sflag [#allocation4], %s2824
          %s2826 = sand.u32 %s108, 1
          %s2827 = smul.addr %s2826, 128
          %s2828 = scalar_lea.vmem [#allocation3], %s2827
          %2829 = dma.done %s2825, 2048
        $region44: #{tpu_custom_call.1} parent=39 // pred_fallthru
          _
      $region40: #{tpu_custom_call.1} parent=5 // pred_fallthru
        _
    $region6: #{tpu_custom_call.1} parent=1 // loop_footer
      %s16 = sadd.s32 1, %s12
    $region7: #{tpu_custom_call.1} parent=1 // loop_footer_branch
      %11 = sbr.rel target = $region3
    $region8: #{tpu_custom_call.1} parent=1 // loop_exit
      _
    %2830 = vsyncpa [#allocation4], 1
    %s2831 = scalar_lea.sflag [#allocation4], 1
    %2832 = vsyncpa %s2831, 1

</llo_original>
